<compile_context>
chip_gen: v7x
topology: tpu7x:2x2x1
jax: 0.10.0
libtpu: 0.0.40
codegen_flags: <defaults>
</compile_context>

<pallas_src>
import jax
import jax.numpy as jnp
from jax import lax
from jax.experimental import pallas as pl
from jax.experimental.pallas import tpu as pltpu

PADDING_VALUE = 0.0


def _cond_supervisor_kernel(h_ref, t_ref,
                            wihr_ref, wihz_ref, wihn_ref,
                            whhr_ref, whhz_ref, whhn_ref,
                            br_ref, bz_ref, bin_ref, bhn_ref,
                            wf_ref, bf_ref, w2_ref, b2_ref,
                            out_ref,
                            gxr_ref, gxz_ref, gxn_ref, obuf_ref):
    S, B, E = h_ref.shape

    lens = t_ref[...]                                   # (B, 1) int32 lengths

    # ---- batched input-gate matmuls, hoisted out of the recurrence ----
    hflat = h_ref[...].reshape(S * B, E)                # (S*B, E)
    gxr_ref[...] = (jnp.dot(hflat, wihr_ref[...],
                            preferred_element_type=jnp.float32)
                    + br_ref[...]).reshape(S, B, E)     # b_ih_r + b_hh_r folded
    gxz_ref[...] = (jnp.dot(hflat, wihz_ref[...],
                            preferred_element_type=jnp.float32)
                    + bz_ref[...]).reshape(S, B, E)     # b_ih_z + b_hh_z folded
    gxn_ref[...] = (jnp.dot(hflat, wihn_ref[...],
                            preferred_element_type=jnp.float32)
                    + bin_ref[...]).reshape(S, B, E)    # b_ih_n only

    whh_r = whhr_ref[...]                               # (E, E) per-gate
    whh_z = whhz_ref[...]
    whh_n = whhn_ref[...]
    bhn = jnp.broadcast_to(bhn_ref[...], (B, E))        # hoisted broadcast

    h0 = jnp.zeros((B, E), jnp.float32)

    # ---- minimal serial recurrence: one per-gate h @ W_hh matmul each ----
    def step(t, h):
        gh_r = jnp.dot(h, whh_r, preferred_element_type=jnp.float32)
        gh_z = jnp.dot(h, whh_z, preferred_element_type=jnp.float32)
        gh_n = jnp.dot(h, whh_n, preferred_element_type=jnp.float32) + bhn
        r = jax.nn.sigmoid(gxr_ref[t] + gh_r)
        z = jax.nn.sigmoid(gxz_ref[t] + gh_z)
        n = jnp.tanh(gxn_ref[t] + r * gh_n)
        h_new = (1.0 - z) * n + z * h

        valid = lens > t                                # (B, 1)
        obuf_ref[t] = jnp.where(valid, h_new, PADDING_VALUE)  # padded output
        return jnp.where(valid, h_new, h)               # freeze hidden state

    lax.fori_loop(0, S, step, h0, unroll=True)

    # ---- batched epilogue: fused sup_linear@layer1, time-mean through W2 ----
    o_flat = obuf_ref[...].reshape(S * B, E)
    x1 = jnp.maximum(
        jnp.dot(o_flat, wf_ref[...], preferred_element_type=jnp.float32)
        + bf_ref[...], 0.0)                             # (S*B, E)
    mean_x1 = jnp.sum(x1.reshape(S, B, E), axis=0) * (1.0 / S)   # (B, E)
    logits = jnp.dot(mean_x1, w2_ref[...],
                     preferred_element_type=jnp.float32) + b2_ref[...]  # (B, C)

    m = jnp.max(logits, axis=-1, keepdims=True)         # softmax(dim=1)
    e = jnp.exp(logits - m)
    inv = pl.reciprocal(jnp.sum(e, axis=-1, keepdims=True), approx=True)
    out_ref[...] = e * inv


def condition_supervisor_forward(H, T, params):
    """H: (B, S, E) float, T: (B,) int lengths. Returns (B, num_class) softmax."""
    B, S, E = H.shape
    C = params["w2"].shape[1]
    Ht = jnp.transpose(H, (1, 0, 2)).astype(jnp.float32)          # (S, B, E)
    T2 = T.astype(jnp.int32).reshape(B, 1)

    # Split GRU weights/biases per gate (PyTorch gate order r, z, n) and fold
    # the r/z biases; fuse sup_linear with layer1 (no nonlinearity between).
    w_ih, w_hh = params["w_ih"], params["w_hh"]                   # (E, 3E)
    b_ih, b_hh = params["b_ih"], params["b_hh"]                   # (1, 3E)
    wih_r, wih_z, wih_n = w_ih[:, 0:E], w_ih[:, E:2 * E], w_ih[:, 2 * E:3 * E]
    whh_r, whh_z, whh_n = w_hh[:, 0:E], w_hh[:, E:2 * E], w_hh[:, 2 * E:3 * E]
    bias_r = b_ih[:, 0:E] + b_hh[:, 0:E]
    bias_z = b_ih[:, E:2 * E] + b_hh[:, E:2 * E]
    bias_in = b_ih[:, 2 * E:3 * E]
    bias_hn = b_hh[:, 2 * E:3 * E]
    wf = params["w_sup"] @ params["w1"]                           # (E, E)
    bf = params["b_sup"] @ params["w1"] + params["b1"]            # (1, E)

    inputs = (Ht, T2,
              wih_r, wih_z, wih_n, whh_r, whh_z, whh_n,
              bias_r, bias_z, bias_in, bias_hn,
              wf, bf, params["w2"], params["b2"])

    vmem = pl.BlockSpec(memory_space=pltpu.MemorySpace.VMEM)
    return pl.pallas_call(
        _cond_supervisor_kernel,
        out_shape=jax.ShapeDtypeStruct((B, C), jnp.float32),
        in_specs=[vmem] * len(inputs),
        out_specs=vmem,
        scratch_shapes=[pltpu.VMEM((S, B, E), jnp.float32)] * 4,
    )(*inputs)


# ---------------- pure-JAX reference (original, unfused formulation) --------

def _reference_forward(H, T, params):
    B, S, E = H.shape
    w_ih, w_hh = params["w_ih"], params["w_hh"]
    b_ih, b_hh = params["b_ih"], params["b_hh"]
    lens = T.astype(jnp.int32).reshape(B, 1)

    h = jnp.zeros((B, E), jnp.float32)
    acc = jnp.zeros((B, params["w2"].shape[1]), jnp.float32)
    for t in range(S):
        x_t = H[:, t, :].astype(jnp.float32)
        gx = x_t @ w_ih + b_ih
        gh = h @ w_hh + b_hh
        r = jax.nn.sigmoid(gx[:, 0:E] + gh[:, 0:E])
        z = jax.nn.sigmoid(gx[:, E:2 * E] + gh[:, E:2 * E])
        n = jnp.tanh(gx[:, 2 * E:3 * E] + r * gh[:, 2 * E:3 * E])
        h_new = (1.0 - z) * n + z * h
        valid = lens > t
        o_t = jnp.where(valid, h_new, PADDING_VALUE)
        h = jnp.where(valid, h_new, h)
        h_hat = o_t @ params["w_sup"] + params["b_sup"]
        x1 = jnp.maximum(h_hat @ params["w1"] + params["b1"], 0.0)
        acc = acc + (x1 @ params["w2"] + params["b2"])
    mean = acc / S
    return jax.nn.softmax(mean, axis=-1)


# ---------------- parameter init (mirrors the torch module's init) ----------

def _xavier_uniform(key, shape):
    fan_in, fan_out = shape      # already (in_features, out_features)
    bound = jnp.sqrt(6.0 / (fan_in + fan_out))
    return jax.random.uniform(key, shape, jnp.float32, -bound, bound)


def init_params(key, hidden_dim, num_class):
    E = hidden_dim
    ks = jax.random.split(key, 6)
    return {
        # GRU (single layer): torch weight_ih_l0 is (3E, E); stored transposed.
        "w_ih": _xavier_uniform(ks[0], (E, 3 * E)),
        "w_hh": _xavier_uniform(ks[1], (E, 3 * E)),
        "b_ih": jnp.ones((1, 3 * E), jnp.float32),    # torch init: fill_(1)
        "b_hh": jnp.zeros((1, 3 * E), jnp.float32),   # torch init: fill_(0)
        # sup_linear (xavier weight, zero bias)
        "w_sup": _xavier_uniform(ks[2], (E, E)),
        "b_sup": jnp.zeros((1, E), jnp.float32),
        # layer1 / layer2
        "w1": _xavier_uniform(ks[3], (E, E)),
        "b1": jax.random.uniform(ks[4], (1, E), jnp.float32, -0.05, 0.05),
        "w2": _xavier_uniform(ks[5], (E, num_class)),
        "b2": jnp.zeros((1, num_class), jnp.float32),
    }


if __name__ == "__main__":
    # args: hidden_dim = hidden_size = 32, num_layers = 2 (-> 1 GRU layer),
    #       max_seq_len = 8, num_class = 4, padding_value = 0.0, add_history = 0
    B, S, E, C = 8, 8, 32, 4

    key = jax.random.PRNGKey(0)
    k_h, k_p = jax.random.split(key)
    H = jax.random.normal(k_h, (B, S, E), jnp.float32)
    T = jnp.array([8, 5, 3, 8, 6, 2, 7, 4], jnp.int32)   # valid lengths <= max_seq_len
    params = init_params(k_p, E, C)

    out = condition_supervisor_forward(H, T, params)
    out = jax.block_until_ready(out)
    assert out.shape == (B, C)

    ref = jax.block_until_ready(_reference_forward(H, T, params))
    # Only differences: fp32 reassociation of the fused/reordered matmuls and
    # the EUP approx reciprocal in the final softmax.
    assert jnp.allclose(out, ref, atol=1e-2, rtol=1e-2)

    print("KERNEL_OK")
</pallas_src>

<mosaic_0001>
module attributes {stable_mosaic.version = 11 : i64} {
  func.func @_cond_supervisor_kernel(%arg0: memref<8x8x32xf32, #tpu.memory_space<vmem>>, %arg1: memref<8x1xi32, #tpu.memory_space<vmem>>, %arg2: memref<32x32xf32, #tpu.memory_space<vmem>>, %arg3: memref<32x32xf32, #tpu.memory_space<vmem>>, %arg4: memref<32x32xf32, #tpu.memory_space<vmem>>, %arg5: memref<32x32xf32, #tpu.memory_space<vmem>>, %arg6: memref<32x32xf32, #tpu.memory_space<vmem>>, %arg7: memref<32x32xf32, #tpu.memory_space<vmem>>, %arg8: memref<1x32xf32, #tpu.memory_space<vmem>>, %arg9: memref<1x32xf32, #tpu.memory_space<vmem>>, %arg10: memref<1x32xf32, #tpu.memory_space<vmem>>, %arg11: memref<1x32xf32, #tpu.memory_space<vmem>>, %arg12: memref<32x32xf32, #tpu.memory_space<vmem>>, %arg13: memref<1x32xf32, #tpu.memory_space<vmem>>, %arg14: memref<32x4xf32, #tpu.memory_space<vmem>>, %arg15: memref<1x4xf32, #tpu.memory_space<vmem>>, %arg16: memref<8x4xf32, #tpu.memory_space<vmem>>, %arg17: memref<8x8x32xf32, #tpu.memory_space<vmem>>, %arg18: memref<8x8x32xf32, #tpu.memory_space<vmem>>, %arg19: memref<8x8x32xf32, #tpu.memory_space<vmem>>, %arg20: memref<8x8x32xf32, #tpu.memory_space<vmem>>) attributes {dimension_semantics = [], scalar_prefetch = 0 : i64, scratch_operands = 4 : i64, tpu.core_type = #tpu.core_type<tc>} {
    %c0 = arith.constant 0 : index
    %c0_0 = arith.constant 0 : index
    %0 = vector.load %arg1[%c0, %c0_0] : memref<8x1xi32, #tpu.memory_space<vmem>>, vector<8x1xi32>
    %c0_1 = arith.constant 0 : index
    %c0_2 = arith.constant 0 : index
    %c0_3 = arith.constant 0 : index
    %1 = vector.load %arg0[%c0_1, %c0_2, %c0_3] : memref<8x8x32xf32, #tpu.memory_space<vmem>>, vector<8x8x32xf32>
    %2 = vector.shape_cast %1 : vector<8x8x32xf32> to vector<64x32xf32>
    %c0_4 = arith.constant 0 : index
    %c0_5 = arith.constant 0 : index
    %3 = vector.load %arg2[%c0_4, %c0_5] : memref<32x32xf32, #tpu.memory_space<vmem>>, vector<32x32xf32>
    %cst = arith.constant dense<0.000000e+00> : vector<64x32xf32>
    %4 = tpu.matmul %2, %3, %cst {dimension_numbers = #tpu.dot_dimension_numbers<[1], [0], [0], [1], [0, 0, 1, 1], [], []>} : vector<64x32xf32>, vector<32x32xf32>, vector<64x32xf32> -> vector<64x32xf32>
    %c0_6 = arith.constant 0 : index
    %c0_7 = arith.constant 0 : index
    %5 = vector.load %arg8[%c0_6, %c0_7] : memref<1x32xf32, #tpu.memory_space<vmem>>, vector<1x32xf32>
    %6 = vector.broadcast %5 : vector<1x32xf32> to vector<64x32xf32>
    %7 = arith.addf %4, %6 : vector<64x32xf32>
    %8 = vector.shape_cast %7 : vector<64x32xf32> to vector<8x8x32xf32>
    %c0_8 = arith.constant 0 : index
    %c0_9 = arith.constant 0 : index
    %c0_10 = arith.constant 0 : index
    %9 = vector.load %arg17[%c0_8, %c0_9, %c0_10] : memref<8x8x32xf32, #tpu.memory_space<vmem>>, vector<8x8x32xf32>
    tpu.vector_store %arg17[%c0_8, %c0_9, %c0_10], %8 {strides = array<i32>} : memref<8x8x32xf32, #tpu.memory_space<vmem>>, vector<8x8x32xf32>,
    %c0_11 = arith.constant 0 : index
    %c0_12 = arith.constant 0 : index
    %10 = vector.load %arg3[%c0_11, %c0_12] : memref<32x32xf32, #tpu.memory_space<vmem>>, vector<32x32xf32>
    %cst_13 = arith.constant dense<0.000000e+00> : vector<64x32xf32>
    %11 = tpu.matmul %2, %10, %cst_13 {dimension_numbers = #tpu.dot_dimension_numbers<[1], [0], [0], [1], [0, 0, 1, 1], [], []>} : vector<64x32xf32>, vector<32x32xf32>, vector<64x32xf32> -> vector<64x32xf32>
    %c0_14 = arith.constant 0 : index
    %c0_15 = arith.constant 0 : index
    %12 = vector.load %arg9[%c0_14, %c0_15] : memref<1x32xf32, #tpu.memory_space<vmem>>, vector<1x32xf32>
    %13 = vector.broadcast %12 : vector<1x32xf32> to vector<64x32xf32>
    %14 = arith.addf %11, %13 : vector<64x32xf32>
    %15 = vector.shape_cast %14 : vector<64x32xf32> to vector<8x8x32xf32>
    %c0_16 = arith.constant 0 : index
    %c0_17 = arith.constant 0 : index
    %c0_18 = arith.constant 0 : index
    %16 = vector.load %arg18[%c0_16, %c0_17, %c0_18] : memref<8x8x32xf32, #tpu.memory_space<vmem>>, vector<8x8x32xf32>
    tpu.vector_store %arg18[%c0_16, %c0_17, %c0_18], %15 {strides = array<i32>} : memref<8x8x32xf32, #tpu.memory_space<vmem>>, vector<8x8x32xf32>,
    %c0_19 = arith.constant 0 : index
    %c0_20 = arith.constant 0 : index
    %17 = vector.load %arg4[%c0_19, %c0_20] : memref<32x32xf32, #tpu.memory_space<vmem>>, vector<32x32xf32>
    %cst_21 = arith.constant dense<0.000000e+00> : vector<64x32xf32>
    %18 = tpu.matmul %2, %17, %cst_21 {dimension_numbers = #tpu.dot_dimension_numbers<[1], [0], [0], [1], [0, 0, 1, 1], [], []>} : vector<64x32xf32>, vector<32x32xf32>, vector<64x32xf32> -> vector<64x32xf32>
    %c0_22 = arith.constant 0 : index
    %c0_23 = arith.constant 0 : index
    %19 = vector.load %arg10[%c0_22, %c0_23] : memref<1x32xf32, #tpu.memory_space<vmem>>, vector<1x32xf32>
    %20 = vector.broadcast %19 : vector<1x32xf32> to vector<64x32xf32>
    %21 = arith.addf %18, %20 : vector<64x32xf32>
    %22 = vector.shape_cast %21 : vector<64x32xf32> to vector<8x8x32xf32>
    %c0_24 = arith.constant 0 : index
    %c0_25 = arith.constant 0 : index
    %c0_26 = arith.constant 0 : index
    %23 = vector.load %arg19[%c0_24, %c0_25, %c0_26] : memref<8x8x32xf32, #tpu.memory_space<vmem>>, vector<8x8x32xf32>
    tpu.vector_store %arg19[%c0_24, %c0_25, %c0_26], %22 {strides = array<i32>} : memref<8x8x32xf32, #tpu.memory_space<vmem>>, vector<8x8x32xf32>,
    %c0_27 = arith.constant 0 : index
    %c0_28 = arith.constant 0 : index
    %24 = vector.load %arg5[%c0_27, %c0_28] : memref<32x32xf32, #tpu.memory_space<vmem>>, vector<32x32xf32>
    %c0_29 = arith.constant 0 : index
    %c0_30 = arith.constant 0 : index
    %25 = vector.load %arg6[%c0_29, %c0_30] : memref<32x32xf32, #tpu.memory_space<vmem>>, vector<32x32xf32>
    %c0_31 = arith.constant 0 : index
    %c0_32 = arith.constant 0 : index
    %26 = vector.load %arg7[%c0_31, %c0_32] : memref<32x32xf32, #tpu.memory_space<vmem>>, vector<32x32xf32>
    %c0_33 = arith.constant 0 : index
    %c0_34 = arith.constant 0 : index
    %27 = vector.load %arg11[%c0_33, %c0_34] : memref<1x32xf32, #tpu.memory_space<vmem>>, vector<1x32xf32>
    %28 = vector.shape_cast %27 : vector<1x32xf32> to vector<1x32xf32>
    %29 = vector.broadcast %28 : vector<1x32xf32> to vector<8x32xf32>
    %cst_35 = arith.constant 0.000000e+00 : f32
    %30 = vector.broadcast %cst_35 : f32 to vector<8x32xf32>
    %c0_i32 = arith.constant 0 : i32
    %cst_36 = arith.constant dense<0.000000e+00> : vector<8x32xf32>
    %31 = tpu.matmul %30, %24, %cst_36 {dimension_numbers = #tpu.dot_dimension_numbers<[1], [0], [0], [1], [0, 0, 1, 1], [], []>} : vector<8x32xf32>, vector<32x32xf32>, vector<8x32xf32> -> vector<8x32xf32>
    %cst_37 = arith.constant dense<0.000000e+00> : vector<8x32xf32>
    %32 = tpu.matmul %30, %25, %cst_37 {dimension_numbers = #tpu.dot_dimension_numbers<[1], [0], [0], [1], [0, 0, 1, 1], [], []>} : vector<8x32xf32>, vector<32x32xf32>, vector<8x32xf32> -> vector<8x32xf32>
    %cst_38 = arith.constant dense<0.000000e+00> : vector<8x32xf32>
    %33 = tpu.matmul %30, %26, %cst_38 {dimension_numbers = #tpu.dot_dimension_numbers<[1], [0], [0], [1], [0, 0, 1, 1], [], []>} : vector<8x32xf32>, vector<32x32xf32>, vector<8x32xf32> -> vector<8x32xf32>
    %34 = arith.addf %33, %29 : vector<8x32xf32>
    %35 = arith.index_cast %c0_i32 : i32 to index
    %c0_39 = arith.constant 0 : index
    %c0_40 = arith.constant 0 : index
    %36 = vector.load %arg17[%35, %c0_39, %c0_40] : memref<8x8x32xf32, #tpu.memory_space<vmem>>, vector<1x8x32xf32>
    %37 = vector.shape_cast %36 : vector<1x8x32xf32> to vector<8x32xf32>
    %38 = arith.addf %37, %31 : vector<8x32xf32>
    %39 = arith.negf %38 : vector<8x32xf32>
    %40 = math.exp %39 : vector<8x32xf32>
    %cst_41 = arith.constant 1.000000e+00 : f32
    %41 = vector.broadcast %cst_41 : f32 to vector<8x32xf32>
    %42 = arith.addf %41, %40 : vector<8x32xf32>
    %43 = arith.divf %41, %42 : vector<8x32xf32>
    %44 = arith.index_cast %c0_i32 : i32 to index
    %c0_42 = arith.constant 0 : index
    %c0_43 = arith.constant 0 : index
    %45 = vector.load %arg18[%44, %c0_42, %c0_43] : memref<8x8x32xf32, #tpu.memory_space<vmem>>, vector<1x8x32xf32>
    %46 = vector.shape_cast %45 : vector<1x8x32xf32> to vector<8x32xf32>
    %47 = arith.addf %46, %32 : vector<8x32xf32>
    %48 = arith.negf %47 : vector<8x32xf32>
    %49 = math.exp %48 : vector<8x32xf32>
    %cst_44 = arith.constant 1.000000e+00 : f32
    %50 = vector.broadcast %cst_44 : f32 to vector<8x32xf32>
    %51 = arith.addf %50, %49 : vector<8x32xf32>
    %52 = arith.divf %50, %51 : vector<8x32xf32>
    %53 = arith.index_cast %c0_i32 : i32 to index
    %c0_45 = arith.constant 0 : index
    %c0_46 = arith.constant 0 : index
    %54 = vector.load %arg19[%53, %c0_45, %c0_46] : memref<8x8x32xf32, #tpu.memory_space<vmem>>, vector<1x8x32xf32>
    %55 = vector.shape_cast %54 : vector<1x8x32xf32> to vector<8x32xf32>
    %56 = arith.mulf %43, %34 : vector<8x32xf32>
    %57 = arith.addf %55, %56 : vector<8x32xf32>
    %58 = math.tanh %57 : vector<8x32xf32>
    %cst_47 = arith.constant 1.000000e+00 : f32
    %59 = vector.broadcast %cst_47 : f32 to vector<8x32xf32>
    %60 = arith.subf %59, %52 : vector<8x32xf32>
    %61 = arith.mulf %60, %58 : vector<8x32xf32>
    %62 = arith.mulf %52, %30 : vector<8x32xf32>
    %63 = arith.addf %61, %62 : vector<8x32xf32>
    %64 = vector.broadcast %c0_i32 : i32 to vector<8x1xi32>
    %65 = arith.cmpi sgt, %0, %64 : vector<8x1xi32>
    %cst_48 = arith.constant 0.000000e+00 : f32
    %66 = vector.shape_cast %65 : vector<8x1xi1> to vector<8x1xi1>
    %67 = vector.broadcast %66 : vector<8x1xi1> to vector<8x32xi1>
    %68 = vector.broadcast %cst_48 : f32 to vector<8x32xf32>
    %69 = arith.select %67, %63, %68 : vector<8x32xi1>, vector<8x32xf32>
    %70 = arith.index_cast %c0_i32 : i32 to index
    %c0_49 = arith.constant 0 : index
    %c0_50 = arith.constant 0 : index
    %71 = vector.load %arg20[%70, %c0_49, %c0_50] : memref<8x8x32xf32, #tpu.memory_space<vmem>>, vector<1x8x32xf32>
    %72 = vector.shape_cast %71 : vector<1x8x32xf32> to vector<8x32xf32>
    %73 = vector.shape_cast %69 : vector<8x32xf32> to vector<1x8x32xf32>
    tpu.vector_store %arg20[%70, %c0_49, %c0_50], %73 {strides = array<i32>} : memref<8x8x32xf32, #tpu.memory_space<vmem>>, vector<1x8x32xf32>,
    %74 = vector.shape_cast %65 : vector<8x1xi1> to vector<8x1xi1>
    %75 = vector.broadcast %74 : vector<8x1xi1> to vector<8x32xi1>
    %76 = arith.select %75, %63, %30 : vector<8x32xi1>, vector<8x32xf32>
    %c1_i32 = arith.constant 1 : i32
    %cst_51 = arith.constant dense<0.000000e+00> : vector<8x32xf32>
    %77 = tpu.matmul %76, %24, %cst_51 {dimension_numbers = #tpu.dot_dimension_numbers<[1], [0], [0], [1], [0, 0, 1, 1], [], []>} : vector<8x32xf32>, vector<32x32xf32>, vector<8x32xf32> -> vector<8x32xf32>
    %cst_52 = arith.constant dense<0.000000e+00> : vector<8x32xf32>
    %78 = tpu.matmul %76, %25, %cst_52 {dimension_numbers = #tpu.dot_dimension_numbers<[1], [0], [0], [1], [0, 0, 1, 1], [], []>} : vector<8x32xf32>, vector<32x32xf32>, vector<8x32xf32> -> vector<8x32xf32>
    %cst_53 = arith.constant dense<0.000000e+00> : vector<8x32xf32>
    %79 = tpu.matmul %76, %26, %cst_53 {dimension_numbers = #tpu.dot_dimension_numbers<[1], [0], [0], [1], [0, 0, 1, 1], [], []>} : vector<8x32xf32>, vector<32x32xf32>, vector<8x32xf32> -> vector<8x32xf32>
    %80 = arith.addf %79, %29 : vector<8x32xf32>
    %81 = arith.index_cast %c1_i32 : i32 to index
    %c0_54 = arith.constant 0 : index
    %c0_55 = arith.constant 0 : index
    %82 = vector.load %arg17[%81, %c0_54, %c0_55] : memref<8x8x32xf32, #tpu.memory_space<vmem>>, vector<1x8x32xf32>
    %83 = vector.shape_cast %82 : vector<1x8x32xf32> to vector<8x32xf32>
    %84 = arith.addf %83, %77 : vector<8x32xf32>
    %85 = arith.negf %84 : vector<8x32xf32>
    %86 = math.exp %85 : vector<8x32xf32>
    %cst_56 = arith.constant 1.000000e+00 : f32
    %87 = vector.broadcast %cst_56 : f32 to vector<8x32xf32>
    %88 = arith.addf %87, %86 : vector<8x32xf32>
    %89 = arith.divf %87, %88 : vector<8x32xf32>
    %90 = arith.index_cast %c1_i32 : i32 to index
    %c0_57 = arith.constant 0 : index
    %c0_58 = arith.constant 0 : index
    %91 = vector.load %arg18[%90, %c0_57, %c0_58] : memref<8x8x32xf32, #tpu.memory_space<vmem>>, vector<1x8x32xf32>
    %92 = vector.shape_cast %91 : vector<1x8x32xf32> to vector<8x32xf32>
    %93 = arith.addf %92, %78 : vector<8x32xf32>
    %94 = arith.negf %93 : vector<8x32xf32>
    %95 = math.exp %94 : vector<8x32xf32>
    %cst_59 = arith.constant 1.000000e+00 : f32
    %96 = vector.broadcast %cst_59 : f32 to vector<8x32xf32>
    %97 = arith.addf %96, %95 : vector<8x32xf32>
    %98 = arith.divf %96, %97 : vector<8x32xf32>
    %99 = arith.index_cast %c1_i32 : i32 to index
    %c0_60 = arith.constant 0 : index
    %c0_61 = arith.constant 0 : index
    %100 = vector.load %arg19[%99, %c0_60, %c0_61] : memref<8x8x32xf32, #tpu.memory_space<vmem>>, vector<1x8x32xf32>
    %101 = vector.shape_cast %100 : vector<1x8x32xf32> to vector<8x32xf32>
    %102 = arith.mulf %89, %80 : vector<8x32xf32>
    %103 = arith.addf %101, %102 : vector<8x32xf32>
    %104 = math.tanh %103 : vector<8x32xf32>
    %cst_62 = arith.constant 1.000000e+00 : f32
    %105 = vector.broadcast %cst_62 : f32 to vector<8x32xf32>
    %106 = arith.subf %105, %98 : vector<8x32xf32>
    %107 = arith.mulf %106, %104 : vector<8x32xf32>
    %108 = arith.mulf %98, %76 : vector<8x32xf32>
    %109 = arith.addf %107, %108 : vector<8x32xf32>
    %110 = vector.broadcast %c1_i32 : i32 to vector<8x1xi32>
    %111 = arith.cmpi sgt, %0, %110 : vector<8x1xi32>
    %cst_63 = arith.constant 0.000000e+00 : f32
    %112 = vector.shape_cast %111 : vector<8x1xi1> to vector<8x1xi1>
    %113 = vector.broadcast %112 : vector<8x1xi1> to vector<8x32xi1>
    %114 = vector.broadcast %cst_63 : f32 to vector<8x32xf32>
    %115 = arith.select %113, %109, %114 : vector<8x32xi1>, vector<8x32xf32>
    %116 = arith.index_cast %c1_i32 : i32 to index
    %c0_64 = arith.constant 0 : index
    %c0_65 = arith.constant 0 : index
    %117 = vector.load %arg20[%116, %c0_64, %c0_65] : memref<8x8x32xf32, #tpu.memory_space<vmem>>, vector<1x8x32xf32>
    %118 = vector.shape_cast %117 : vector<1x8x32xf32> to vector<8x32xf32>
    %119 = vector.shape_cast %115 : vector<8x32xf32> to vector<1x8x32xf32>
    tpu.vector_store %arg20[%116, %c0_64, %c0_65], %119 {strides = array<i32>} : memref<8x8x32xf32, #tpu.memory_space<vmem>>, vector<1x8x32xf32>,
    %120 = vector.shape_cast %111 : vector<8x1xi1> to vector<8x1xi1>
    %121 = vector.broadcast %120 : vector<8x1xi1> to vector<8x32xi1>
    %122 = arith.select %121, %109, %76 : vector<8x32xi1>, vector<8x32xf32>
    %c2_i32 = arith.constant 2 : i32
    %cst_66 = arith.constant dense<0.000000e+00> : vector<8x32xf32>
    %123 = tpu.matmul %122, %24, %cst_66 {dimension_numbers = #tpu.dot_dimension_numbers<[1], [0], [0], [1], [0, 0, 1, 1], [], []>} : vector<8x32xf32>, vector<32x32xf32>, vector<8x32xf32> -> vector<8x32xf32>
    %cst_67 = arith.constant dense<0.000000e+00> : vector<8x32xf32>
    %124 = tpu.matmul %122, %25, %cst_67 {dimension_numbers = #tpu.dot_dimension_numbers<[1], [0], [0], [1], [0, 0, 1, 1], [], []>} : vector<8x32xf32>, vector<32x32xf32>, vector<8x32xf32> -> vector<8x32xf32>
    %cst_68 = arith.constant dense<0.000000e+00> : vector<8x32xf32>
    %125 = tpu.matmul %122, %26, %cst_68 {dimension_numbers = #tpu.dot_dimension_numbers<[1], [0], [0], [1], [0, 0, 1, 1], [], []>} : vector<8x32xf32>, vector<32x32xf32>, vector<8x32xf32> -> vector<8x32xf32>
    %126 = arith.addf %125, %29 : vector<8x32xf32>
    %127 = arith.index_cast %c2_i32 : i32 to index
    %c0_69 = arith.constant 0 : index
    %c0_70 = arith.constant 0 : index
    %128 = vector.load %arg17[%127, %c0_69, %c0_70] : memref<8x8x32xf32, #tpu.memory_space<vmem>>, vector<1x8x32xf32>
    %129 = vector.shape_cast %128 : vector<1x8x32xf32> to vector<8x32xf32>
    %130 = arith.addf %129, %123 : vector<8x32xf32>
    %131 = arith.negf %130 : vector<8x32xf32>
    %132 = math.exp %131 : vector<8x32xf32>
    %cst_71 = arith.constant 1.000000e+00 : f32
    %133 = vector.broadcast %cst_71 : f32 to vector<8x32xf32>
    %134 = arith.addf %133, %132 : vector<8x32xf32>
    %135 = arith.divf %133, %134 : vector<8x32xf32>
    %136 = arith.index_cast %c2_i32 : i32 to index
    %c0_72 = arith.constant 0 : index
    %c0_73 = arith.constant 0 : index
    %137 = vector.load %arg18[%136, %c0_72, %c0_73] : memref<8x8x32xf32, #tpu.memory_space<vmem>>, vector<1x8x32xf32>
    %138 = vector.shape_cast %137 : vector<1x8x32xf32> to vector<8x32xf32>
    %139 = arith.addf %138, %124 : vector<8x32xf32>
    %140 = arith.negf %139 : vector<8x32xf32>
    %141 = math.exp %140 : vector<8x32xf32>
    %cst_74 = arith.constant 1.000000e+00 : f32
    %142 = vector.broadcast %cst_74 : f32 to vector<8x32xf32>
    %143 = arith.addf %142, %141 : vector<8x32xf32>
    %144 = arith.divf %142, %143 : vector<8x32xf32>
    %145 = arith.index_cast %c2_i32 : i32 to index
    %c0_75 = arith.constant 0 : index
    %c0_76 = arith.constant 0 : index
    %146 = vector.load %arg19[%145, %c0_75, %c0_76] : memref<8x8x32xf32, #tpu.memory_space<vmem>>, vector<1x8x32xf32>
    %147 = vector.shape_cast %146 : vector<1x8x32xf32> to vector<8x32xf32>
    %148 = arith.mulf %135, %126 : vector<8x32xf32>
    %149 = arith.addf %147, %148 : vector<8x32xf32>
    %150 = math.tanh %149 : vector<8x32xf32>
    %cst_77 = arith.constant 1.000000e+00 : f32
    %151 = vector.broadcast %cst_77 : f32 to vector<8x32xf32>
    %152 = arith.subf %151, %144 : vector<8x32xf32>
    %153 = arith.mulf %152, %150 : vector<8x32xf32>
    %154 = arith.mulf %144, %122 : vector<8x32xf32>
    %155 = arith.addf %153, %154 : vector<8x32xf32>
    %156 = vector.broadcast %c2_i32 : i32 to vector<8x1xi32>
    %157 = arith.cmpi sgt, %0, %156 : vector<8x1xi32>
    %cst_78 = arith.constant 0.000000e+00 : f32
    %158 = vector.shape_cast %157 : vector<8x1xi1> to vector<8x1xi1>
    %159 = vector.broadcast %158 : vector<8x1xi1> to vector<8x32xi1>
    %160 = vector.broadcast %cst_78 : f32 to vector<8x32xf32>
    %161 = arith.select %159, %155, %160 : vector<8x32xi1>, vector<8x32xf32>
    %162 = arith.index_cast %c2_i32 : i32 to index
    %c0_79 = arith.constant 0 : index
    %c0_80 = arith.constant 0 : index
    %163 = vector.load %arg20[%162, %c0_79, %c0_80] : memref<8x8x32xf32, #tpu.memory_space<vmem>>, vector<1x8x32xf32>
    %164 = vector.shape_cast %163 : vector<1x8x32xf32> to vector<8x32xf32>
    %165 = vector.shape_cast %161 : vector<8x32xf32> to vector<1x8x32xf32>
    tpu.vector_store %arg20[%162, %c0_79, %c0_80], %165 {strides = array<i32>} : memref<8x8x32xf32, #tpu.memory_space<vmem>>, vector<1x8x32xf32>,
    %166 = vector.shape_cast %157 : vector<8x1xi1> to vector<8x1xi1>
    %167 = vector.broadcast %166 : vector<8x1xi1> to vector<8x32xi1>
    %168 = arith.select %167, %155, %122 : vector<8x32xi1>, vector<8x32xf32>
    %c3_i32 = arith.constant 3 : i32
    %cst_81 = arith.constant dense<0.000000e+00> : vector<8x32xf32>
    %169 = tpu.matmul %168, %24, %cst_81 {dimension_numbers = #tpu.dot_dimension_numbers<[1], [0], [0], [1], [0, 0, 1, 1], [], []>} : vector<8x32xf32>, vector<32x32xf32>, vector<8x32xf32> -> vector<8x32xf32>
    %cst_82 = arith.constant dense<0.000000e+00> : vector<8x32xf32>
    %170 = tpu.matmul %168, %25, %cst_82 {dimension_numbers = #tpu.dot_dimension_numbers<[1], [0], [0], [1], [0, 0, 1, 1], [], []>} : vector<8x32xf32>, vector<32x32xf32>, vector<8x32xf32> -> vector<8x32xf32>
    %cst_83 = arith.constant dense<0.000000e+00> : vector<8x32xf32>
    %171 = tpu.matmul %168, %26, %cst_83 {dimension_numbers = #tpu.dot_dimension_numbers<[1], [0], [0], [1], [0, 0, 1, 1], [], []>} : vector<8x32xf32>, vector<32x32xf32>, vector<8x32xf32> -> vector<8x32xf32>
    %172 = arith.addf %171, %29 : vector<8x32xf32>
    %173 = arith.index_cast %c3_i32 : i32 to index
    %c0_84 = arith.constant 0 : index
    %c0_85 = arith.constant 0 : index
    %174 = vector.load %arg17[%173, %c0_84, %c0_85] : memref<8x8x32xf32, #tpu.memory_space<vmem>>, vector<1x8x32xf32>
    %175 = vector.shape_cast %174 : vector<1x8x32xf32> to vector<8x32xf32>
    %176 = arith.addf %175, %169 : vector<8x32xf32>
    %177 = arith.negf %176 : vector<8x32xf32>
    %178 = math.exp %177 : vector<8x32xf32>
    %cst_86 = arith.constant 1.000000e+00 : f32
    %179 = vector.broadcast %cst_86 : f32 to vector<8x32xf32>
    %180 = arith.addf %179, %178 : vector<8x32xf32>
    %181 = arith.divf %179, %180 : vector<8x32xf32>
    %182 = arith.index_cast %c3_i32 : i32 to index
    %c0_87 = arith.constant 0 : index
    %c0_88 = arith.constant 0 : index
    %183 = vector.load %arg18[%182, %c0_87, %c0_88] : memref<8x8x32xf32, #tpu.memory_space<vmem>>, vector<1x8x32xf32>
    %184 = vector.shape_cast %183 : vector<1x8x32xf32> to vector<8x32xf32>
    %185 = arith.addf %184, %170 : vector<8x32xf32>
    %186 = arith.negf %185 : vector<8x32xf32>
    %187 = math.exp %186 : vector<8x32xf32>
    %cst_89 = arith.constant 1.000000e+00 : f32
    %188 = vector.broadcast %cst_89 : f32 to vector<8x32xf32>
    %189 = arith.addf %188, %187 : vector<8x32xf32>
    %190 = arith.divf %188, %189 : vector<8x32xf32>
    %191 = arith.index_cast %c3_i32 : i32 to index
    %c0_90 = arith.constant 0 : index
    %c0_91 = arith.constant 0 : index
    %192 = vector.load %arg19[%191, %c0_90, %c0_91] : memref<8x8x32xf32, #tpu.memory_space<vmem>>, vector<1x8x32xf32>
    %193 = vector.shape_cast %192 : vector<1x8x32xf32> to vector<8x32xf32>
    %194 = arith.mulf %181, %172 : vector<8x32xf32>
    %195 = arith.addf %193, %194 : vector<8x32xf32>
    %196 = math.tanh %195 : vector<8x32xf32>
    %cst_92 = arith.constant 1.000000e+00 : f32
    %197 = vector.broadcast %cst_92 : f32 to vector<8x32xf32>
    %198 = arith.subf %197, %190 : vector<8x32xf32>
    %199 = arith.mulf %198, %196 : vector<8x32xf32>
    %200 = arith.mulf %190, %168 : vector<8x32xf32>
    %201 = arith.addf %199, %200 : vector<8x32xf32>
    %202 = vector.broadcast %c3_i32 : i32 to vector<8x1xi32>
    %203 = arith.cmpi sgt, %0, %202 : vector<8x1xi32>
    %cst_93 = arith.constant 0.000000e+00 : f32
    %204 = vector.shape_cast %203 : vector<8x1xi1> to vector<8x1xi1>
    %205 = vector.broadcast %204 : vector<8x1xi1> to vector<8x32xi1>
    %206 = vector.broadcast %cst_93 : f32 to vector<8x32xf32>
    %207 = arith.select %205, %201, %206 : vector<8x32xi1>, vector<8x32xf32>
    %208 = arith.index_cast %c3_i32 : i32 to index
    %c0_94 = arith.constant 0 : index
    %c0_95 = arith.constant 0 : index
    %209 = vector.load %arg20[%208, %c0_94, %c0_95] : memref<8x8x32xf32, #tpu.memory_space<vmem>>, vector<1x8x32xf32>
    %210 = vector.shape_cast %209 : vector<1x8x32xf32> to vector<8x32xf32>
    %211 = vector.shape_cast %207 : vector<8x32xf32> to vector<1x8x32xf32>
    tpu.vector_store %arg20[%208, %c0_94, %c0_95], %211 {strides = array<i32>} : memref<8x8x32xf32, #tpu.memory_space<vmem>>, vector<1x8x32xf32>,
    %212 = vector.shape_cast %203 : vector<8x1xi1> to vector<8x1xi1>
    %213 = vector.broadcast %212 : vector<8x1xi1> to vector<8x32xi1>
    %214 = arith.select %213, %201, %168 : vector<8x32xi1>, vector<8x32xf32>
    %c4_i32 = arith.constant 4 : i32
    %cst_96 = arith.constant dense<0.000000e+00> : vector<8x32xf32>
    %215 = tpu.matmul %214, %24, %cst_96 {dimension_numbers = #tpu.dot_dimension_numbers<[1], [0], [0], [1], [0, 0, 1, 1], [], []>} : vector<8x32xf32>, vector<32x32xf32>, vector<8x32xf32> -> vector<8x32xf32>
    %cst_97 = arith.constant dense<0.000000e+00> : vector<8x32xf32>
    %216 = tpu.matmul %214, %25, %cst_97 {dimension_numbers = #tpu.dot_dimension_numbers<[1], [0], [0], [1], [0, 0, 1, 1], [], []>} : vector<8x32xf32>, vector<32x32xf32>, vector<8x32xf32> -> vector<8x32xf32>
    %cst_98 = arith.constant dense<0.000000e+00> : vector<8x32xf32>
    %217 = tpu.matmul %214, %26, %cst_98 {dimension_numbers = #tpu.dot_dimension_numbers<[1], [0], [0], [1], [0, 0, 1, 1], [], []>} : vector<8x32xf32>, vector<32x32xf32>, vector<8x32xf32> -> vector<8x32xf32>
    %218 = arith.addf %217, %29 : vector<8x32xf32>
    %219 = arith.index_cast %c4_i32 : i32 to index
    %c0_99 = arith.constant 0 : index
    %c0_100 = arith.constant 0 : index
    %220 = vector.load %arg17[%219, %c0_99, %c0_100] : memref<8x8x32xf32, #tpu.memory_space<vmem>>, vector<1x8x32xf32>
    %221 = vector.shape_cast %220 : vector<1x8x32xf32> to vector<8x32xf32>
    %222 = arith.addf %221, %215 : vector<8x32xf32>
    %223 = arith.negf %222 : vector<8x32xf32>
    %224 = math.exp %223 : vector<8x32xf32>
    %cst_101 = arith.constant 1.000000e+00 : f32
    %225 = vector.broadcast %cst_101 : f32 to vector<8x32xf32>
    %226 = arith.addf %225, %224 : vector<8x32xf32>
    %227 = arith.divf %225, %226 : vector<8x32xf32>
    %228 = arith.index_cast %c4_i32 : i32 to index
    %c0_102 = arith.constant 0 : index
    %c0_103 = arith.constant 0 : index
    %229 = vector.load %arg18[%228, %c0_102, %c0_103] : memref<8x8x32xf32, #tpu.memory_space<vmem>>, vector<1x8x32xf32>
    %230 = vector.shape_cast %229 : vector<1x8x32xf32> to vector<8x32xf32>
    %231 = arith.addf %230, %216 : vector<8x32xf32>
    %232 = arith.negf %231 : vector<8x32xf32>
    %233 = math.exp %232 : vector<8x32xf32>
    %cst_104 = arith.constant 1.000000e+00 : f32
    %234 = vector.broadcast %cst_104 : f32 to vector<8x32xf32>
    %235 = arith.addf %234, %233 : vector<8x32xf32>
    %236 = arith.divf %234, %235 : vector<8x32xf32>
    %237 = arith.index_cast %c4_i32 : i32 to index
    %c0_105 = arith.constant 0 : index
    %c0_106 = arith.constant 0 : index
    %238 = vector.load %arg19[%237, %c0_105, %c0_106] : memref<8x8x32xf32, #tpu.memory_space<vmem>>, vector<1x8x32xf32>
    %239 = vector.shape_cast %238 : vector<1x8x32xf32> to vector<8x32xf32>
    %240 = arith.mulf %227, %218 : vector<8x32xf32>
    %241 = arith.addf %239, %240 : vector<8x32xf32>
    %242 = math.tanh %241 : vector<8x32xf32>
    %cst_107 = arith.constant 1.000000e+00 : f32
    %243 = vector.broadcast %cst_107 : f32 to vector<8x32xf32>
    %244 = arith.subf %243, %236 : vector<8x32xf32>
    %245 = arith.mulf %244, %242 : vector<8x32xf32>
    %246 = arith.mulf %236, %214 : vector<8x32xf32>
    %247 = arith.addf %245, %246 : vector<8x32xf32>
    %248 = vector.broadcast %c4_i32 : i32 to vector<8x1xi32>
    %249 = arith.cmpi sgt, %0, %248 : vector<8x1xi32>
    %cst_108 = arith.constant 0.000000e+00 : f32
    %250 = vector.shape_cast %249 : vector<8x1xi1> to vector<8x1xi1>
    %251 = vector.broadcast %250 : vector<8x1xi1> to vector<8x32xi1>
    %252 = vector.broadcast %cst_108 : f32 to vector<8x32xf32>
    %253 = arith.select %251, %247, %252 : vector<8x32xi1>, vector<8x32xf32>
    %254 = arith.index_cast %c4_i32 : i32 to index
    %c0_109 = arith.constant 0 : index
    %c0_110 = arith.constant 0 : index
    %255 = vector.load %arg20[%254, %c0_109, %c0_110] : memref<8x8x32xf32, #tpu.memory_space<vmem>>, vector<1x8x32xf32>
    %256 = vector.shape_cast %255 : vector<1x8x32xf32> to vector<8x32xf32>
    %257 = vector.shape_cast %253 : vector<8x32xf32> to vector<1x8x32xf32>
    tpu.vector_store %arg20[%254, %c0_109, %c0_110], %257 {strides = array<i32>} : memref<8x8x32xf32, #tpu.memory_space<vmem>>, vector<1x8x32xf32>,
    %258 = vector.shape_cast %249 : vector<8x1xi1> to vector<8x1xi1>
    %259 = vector.broadcast %258 : vector<8x1xi1> to vector<8x32xi1>
    %260 = arith.select %259, %247, %214 : vector<8x32xi1>, vector<8x32xf32>
    %c5_i32 = arith.constant 5 : i32
    %cst_111 = arith.constant dense<0.000000e+00> : vector<8x32xf32>
    %261 = tpu.matmul %260, %24, %cst_111 {dimension_numbers = #tpu.dot_dimension_numbers<[1], [0], [0], [1], [0, 0, 1, 1], [], []>} : vector<8x32xf32>, vector<32x32xf32>, vector<8x32xf32> -> vector<8x32xf32>
    %cst_112 = arith.constant dense<0.000000e+00> : vector<8x32xf32>
    %262 = tpu.matmul %260, %25, %cst_112 {dimension_numbers = #tpu.dot_dimension_numbers<[1], [0], [0], [1], [0, 0, 1, 1], [], []>} : vector<8x32xf32>, vector<32x32xf32>, vector<8x32xf32> -> vector<8x32xf32>
    %cst_113 = arith.constant dense<0.000000e+00> : vector<8x32xf32>
    %263 = tpu.matmul %260, %26, %cst_113 {dimension_numbers = #tpu.dot_dimension_numbers<[1], [0], [0], [1], [0, 0, 1, 1], [], []>} : vector<8x32xf32>, vector<32x32xf32>, vector<8x32xf32> -> vector<8x32xf32>
    %264 = arith.addf %263, %29 : vector<8x32xf32>
    %265 = arith.index_cast %c5_i32 : i32 to index
    %c0_114 = arith.constant 0 : index
    %c0_115 = arith.constant 0 : index
    %266 = vector.load %arg17[%265, %c0_114, %c0_115] : memref<8x8x32xf32, #tpu.memory_space<vmem>>, vector<1x8x32xf32>
    %267 = vector.shape_cast %266 : vector<1x8x32xf32> to vector<8x32xf32>
    %268 = arith.addf %267, %261 : vector<8x32xf32>
    %269 = arith.negf %268 : vector<8x32xf32>
    %270 = math.exp %269 : vector<8x32xf32>
    %cst_116 = arith.constant 1.000000e+00 : f32
    %271 = vector.broadcast %cst_116 : f32 to vector<8x32xf32>
    %272 = arith.addf %271, %270 : vector<8x32xf32>
    %273 = arith.divf %271, %272 : vector<8x32xf32>
    %274 = arith.index_cast %c5_i32 : i32 to index
    %c0_117 = arith.constant 0 : index
    %c0_118 = arith.constant 0 : index
    %275 = vector.load %arg18[%274, %c0_117, %c0_118] : memref<8x8x32xf32, #tpu.memory_space<vmem>>, vector<1x8x32xf32>
    %276 = vector.shape_cast %275 : vector<1x8x32xf32> to vector<8x32xf32>
    %277 = arith.addf %276, %262 : vector<8x32xf32>
    %278 = arith.negf %277 : vector<8x32xf32>
    %279 = math.exp %278 : vector<8x32xf32>
    %cst_119 = arith.constant 1.000000e+00 : f32
    %280 = vector.broadcast %cst_119 : f32 to vector<8x32xf32>
    %281 = arith.addf %280, %279 : vector<8x32xf32>
    %282 = arith.divf %280, %281 : vector<8x32xf32>
    %283 = arith.index_cast %c5_i32 : i32 to index
    %c0_120 = arith.constant 0 : index
    %c0_121 = arith.constant 0 : index
    %284 = vector.load %arg19[%283, %c0_120, %c0_121] : memref<8x8x32xf32, #tpu.memory_space<vmem>>, vector<1x8x32xf32>
    %285 = vector.shape_cast %284 : vector<1x8x32xf32> to vector<8x32xf32>
    %286 = arith.mulf %273, %264 : vector<8x32xf32>
    %287 = arith.addf %285, %286 : vector<8x32xf32>
    %288 = math.tanh %287 : vector<8x32xf32>
    %cst_122 = arith.constant 1.000000e+00 : f32
    %289 = vector.broadcast %cst_122 : f32 to vector<8x32xf32>
    %290 = arith.subf %289, %282 : vector<8x32xf32>
    %291 = arith.mulf %290, %288 : vector<8x32xf32>
    %292 = arith.mulf %282, %260 : vector<8x32xf32>
    %293 = arith.addf %291, %292 : vector<8x32xf32>
    %294 = vector.broadcast %c5_i32 : i32 to vector<8x1xi32>
    %295 = arith.cmpi sgt, %0, %294 : vector<8x1xi32>
    %cst_123 = arith.constant 0.000000e+00 : f32
    %296 = vector.shape_cast %295 : vector<8x1xi1> to vector<8x1xi1>
    %297 = vector.broadcast %296 : vector<8x1xi1> to vector<8x32xi1>
    %298 = vector.broadcast %cst_123 : f32 to vector<8x32xf32>
    %299 = arith.select %297, %293, %298 : vector<8x32xi1>, vector<8x32xf32>
    %300 = arith.index_cast %c5_i32 : i32 to index
    %c0_124 = arith.constant 0 : index
    %c0_125 = arith.constant 0 : index
    %301 = vector.load %arg20[%300, %c0_124, %c0_125] : memref<8x8x32xf32, #tpu.memory_space<vmem>>, vector<1x8x32xf32>
    %302 = vector.shape_cast %301 : vector<1x8x32xf32> to vector<8x32xf32>
    %303 = vector.shape_cast %299 : vector<8x32xf32> to vector<1x8x32xf32>
    tpu.vector_store %arg20[%300, %c0_124, %c0_125], %303 {strides = array<i32>} : memref<8x8x32xf32, #tpu.memory_space<vmem>>, vector<1x8x32xf32>,
    %304 = vector.shape_cast %295 : vector<8x1xi1> to vector<8x1xi1>
    %305 = vector.broadcast %304 : vector<8x1xi1> to vector<8x32xi1>
    %306 = arith.select %305, %293, %260 : vector<8x32xi1>, vector<8x32xf32>
    %c6_i32 = arith.constant 6 : i32
    %cst_126 = arith.constant dense<0.000000e+00> : vector<8x32xf32>
    %307 = tpu.matmul %306, %24, %cst_126 {dimension_numbers = #tpu.dot_dimension_numbers<[1], [0], [0], [1], [0, 0, 1, 1], [], []>} : vector<8x32xf32>, vector<32x32xf32>, vector<8x32xf32> -> vector<8x32xf32>
    %cst_127 = arith.constant dense<0.000000e+00> : vector<8x32xf32>
    %308 = tpu.matmul %306, %25, %cst_127 {dimension_numbers = #tpu.dot_dimension_numbers<[1], [0], [0], [1], [0, 0, 1, 1], [], []>} : vector<8x32xf32>, vector<32x32xf32>, vector<8x32xf32> -> vector<8x32xf32>
    %cst_128 = arith.constant dense<0.000000e+00> : vector<8x32xf32>
    %309 = tpu.matmul %306, %26, %cst_128 {dimension_numbers = #tpu.dot_dimension_numbers<[1], [0], [0], [1], [0, 0, 1, 1], [], []>} : vector<8x32xf32>, vector<32x32xf32>, vector<8x32xf32> -> vector<8x32xf32>
    %310 = arith.addf %309, %29 : vector<8x32xf32>
    %311 = arith.index_cast %c6_i32 : i32 to index
    %c0_129 = arith.constant 0 : index
    %c0_130 = arith.constant 0 : index
    %312 = vector.load %arg17[%311, %c0_129, %c0_130] : memref<8x8x32xf32, #tpu.memory_space<vmem>>, vector<1x8x32xf32>
    %313 = vector.shape_cast %312 : vector<1x8x32xf32> to vector<8x32xf32>
    %314 = arith.addf %313, %307 : vector<8x32xf32>
    %315 = arith.negf %314 : vector<8x32xf32>
    %316 = math.exp %315 : vector<8x32xf32>
    %cst_131 = arith.constant 1.000000e+00 : f32
    %317 = vector.broadcast %cst_131 : f32 to vector<8x32xf32>
    %318 = arith.addf %317, %316 : vector<8x32xf32>
    %319 = arith.divf %317, %318 : vector<8x32xf32>
    %320 = arith.index_cast %c6_i32 : i32 to index
    %c0_132 = arith.constant 0 : index
    %c0_133 = arith.constant 0 : index
    %321 = vector.load %arg18[%320, %c0_132, %c0_133] : memref<8x8x32xf32, #tpu.memory_space<vmem>>, vector<1x8x32xf32>
    %322 = vector.shape_cast %321 : vector<1x8x32xf32> to vector<8x32xf32>
    %323 = arith.addf %322, %308 : vector<8x32xf32>
    %324 = arith.negf %323 : vector<8x32xf32>
    %325 = math.exp %324 : vector<8x32xf32>
    %cst_134 = arith.constant 1.000000e+00 : f32
    %326 = vector.broadcast %cst_134 : f32 to vector<8x32xf32>
    %327 = arith.addf %326, %325 : vector<8x32xf32>
    %328 = arith.divf %326, %327 : vector<8x32xf32>
    %329 = arith.index_cast %c6_i32 : i32 to index
    %c0_135 = arith.constant 0 : index
    %c0_136 = arith.constant 0 : index
    %330 = vector.load %arg19[%329, %c0_135, %c0_136] : memref<8x8x32xf32, #tpu.memory_space<vmem>>, vector<1x8x32xf32>
    %331 = vector.shape_cast %330 : vector<1x8x32xf32> to vector<8x32xf32>
    %332 = arith.mulf %319, %310 : vector<8x32xf32>
    %333 = arith.addf %331, %332 : vector<8x32xf32>
    %334 = math.tanh %333 : vector<8x32xf32>
    %cst_137 = arith.constant 1.000000e+00 : f32
    %335 = vector.broadcast %cst_137 : f32 to vector<8x32xf32>
    %336 = arith.subf %335, %328 : vector<8x32xf32>
    %337 = arith.mulf %336, %334 : vector<8x32xf32>
    %338 = arith.mulf %328, %306 : vector<8x32xf32>
    %339 = arith.addf %337, %338 : vector<8x32xf32>
    %340 = vector.broadcast %c6_i32 : i32 to vector<8x1xi32>
    %341 = arith.cmpi sgt, %0, %340 : vector<8x1xi32>
    %cst_138 = arith.constant 0.000000e+00 : f32
    %342 = vector.shape_cast %341 : vector<8x1xi1> to vector<8x1xi1>
    %343 = vector.broadcast %342 : vector<8x1xi1> to vector<8x32xi1>
    %344 = vector.broadcast %cst_138 : f32 to vector<8x32xf32>
    %345 = arith.select %343, %339, %344 : vector<8x32xi1>, vector<8x32xf32>
    %346 = arith.index_cast %c6_i32 : i32 to index
    %c0_139 = arith.constant 0 : index
    %c0_140 = arith.constant 0 : index
    %347 = vector.load %arg20[%346, %c0_139, %c0_140] : memref<8x8x32xf32, #tpu.memory_space<vmem>>, vector<1x8x32xf32>
    %348 = vector.shape_cast %347 : vector<1x8x32xf32> to vector<8x32xf32>
    %349 = vector.shape_cast %345 : vector<8x32xf32> to vector<1x8x32xf32>
    tpu.vector_store %arg20[%346, %c0_139, %c0_140], %349 {strides = array<i32>} : memref<8x8x32xf32, #tpu.memory_space<vmem>>, vector<1x8x32xf32>,
    %350 = vector.shape_cast %341 : vector<8x1xi1> to vector<8x1xi1>
    %351 = vector.broadcast %350 : vector<8x1xi1> to vector<8x32xi1>
    %352 = arith.select %351, %339, %306 : vector<8x32xi1>, vector<8x32xf32>
    %c7_i32 = arith.constant 7 : i32
    %cst_141 = arith.constant dense<0.000000e+00> : vector<8x32xf32>
    %353 = tpu.matmul %352, %24, %cst_141 {dimension_numbers = #tpu.dot_dimension_numbers<[1], [0], [0], [1], [0, 0, 1, 1], [], []>} : vector<8x32xf32>, vector<32x32xf32>, vector<8x32xf32> -> vector<8x32xf32>
    %cst_142 = arith.constant dense<0.000000e+00> : vector<8x32xf32>
    %354 = tpu.matmul %352, %25, %cst_142 {dimension_numbers = #tpu.dot_dimension_numbers<[1], [0], [0], [1], [0, 0, 1, 1], [], []>} : vector<8x32xf32>, vector<32x32xf32>, vector<8x32xf32> -> vector<8x32xf32>
    %cst_143 = arith.constant dense<0.000000e+00> : vector<8x32xf32>
    %355 = tpu.matmul %352, %26, %cst_143 {dimension_numbers = #tpu.dot_dimension_numbers<[1], [0], [0], [1], [0, 0, 1, 1], [], []>} : vector<8x32xf32>, vector<32x32xf32>, vector<8x32xf32> -> vector<8x32xf32>
    %356 = arith.addf %355, %29 : vector<8x32xf32>
    %357 = arith.index_cast %c7_i32 : i32 to index
    %c0_144 = arith.constant 0 : index
    %c0_145 = arith.constant 0 : index
    %358 = vector.load %arg17[%357, %c0_144, %c0_145] : memref<8x8x32xf32, #tpu.memory_space<vmem>>, vector<1x8x32xf32>
    %359 = vector.shape_cast %358 : vector<1x8x32xf32> to vector<8x32xf32>
    %360 = arith.addf %359, %353 : vector<8x32xf32>
    %361 = arith.negf %360 : vector<8x32xf32>
    %362 = math.exp %361 : vector<8x32xf32>
    %cst_146 = arith.constant 1.000000e+00 : f32
    %363 = vector.broadcast %cst_146 : f32 to vector<8x32xf32>
    %364 = arith.addf %363, %362 : vector<8x32xf32>
    %365 = arith.divf %363, %364 : vector<8x32xf32>
    %366 = arith.index_cast %c7_i32 : i32 to index
    %c0_147 = arith.constant 0 : index
    %c0_148 = arith.constant 0 : index
    %367 = vector.load %arg18[%366, %c0_147, %c0_148] : memref<8x8x32xf32, #tpu.memory_space<vmem>>, vector<1x8x32xf32>
    %368 = vector.shape_cast %367 : vector<1x8x32xf32> to vector<8x32xf32>
    %369 = arith.addf %368, %354 : vector<8x32xf32>
    %370 = arith.negf %369 : vector<8x32xf32>
    %371 = math.exp %370 : vector<8x32xf32>
    %cst_149 = arith.constant 1.000000e+00 : f32
    %372 = vector.broadcast %cst_149 : f32 to vector<8x32xf32>
    %373 = arith.addf %372, %371 : vector<8x32xf32>
    %374 = arith.divf %372, %373 : vector<8x32xf32>
    %375 = arith.index_cast %c7_i32 : i32 to index
    %c0_150 = arith.constant 0 : index
    %c0_151 = arith.constant 0 : index
    %376 = vector.load %arg19[%375, %c0_150, %c0_151] : memref<8x8x32xf32, #tpu.memory_space<vmem>>, vector<1x8x32xf32>
    %377 = vector.shape_cast %376 : vector<1x8x32xf32> to vector<8x32xf32>
    %378 = arith.mulf %365, %356 : vector<8x32xf32>
    %379 = arith.addf %377, %378 : vector<8x32xf32>
    %380 = math.tanh %379 : vector<8x32xf32>
    %cst_152 = arith.constant 1.000000e+00 : f32
    %381 = vector.broadcast %cst_152 : f32 to vector<8x32xf32>
    %382 = arith.subf %381, %374 : vector<8x32xf32>
    %383 = arith.mulf %382, %380 : vector<8x32xf32>
    %384 = arith.mulf %374, %352 : vector<8x32xf32>
    %385 = arith.addf %383, %384 : vector<8x32xf32>
    %386 = vector.broadcast %c7_i32 : i32 to vector<8x1xi32>
    %387 = arith.cmpi sgt, %0, %386 : vector<8x1xi32>
    %cst_153 = arith.constant 0.000000e+00 : f32
    %388 = vector.shape_cast %387 : vector<8x1xi1> to vector<8x1xi1>
    %389 = vector.broadcast %388 : vector<8x1xi1> to vector<8x32xi1>
    %390 = vector.broadcast %cst_153 : f32 to vector<8x32xf32>
    %391 = arith.select %389, %385, %390 : vector<8x32xi1>, vector<8x32xf32>
    %392 = arith.index_cast %c7_i32 : i32 to index
    %c0_154 = arith.constant 0 : index
    %c0_155 = arith.constant 0 : index
    %393 = vector.load %arg20[%392, %c0_154, %c0_155] : memref<8x8x32xf32, #tpu.memory_space<vmem>>, vector<1x8x32xf32>
    %394 = vector.shape_cast %393 : vector<1x8x32xf32> to vector<8x32xf32>
    %395 = vector.shape_cast %391 : vector<8x32xf32> to vector<1x8x32xf32>
    tpu.vector_store %arg20[%392, %c0_154, %c0_155], %395 {strides = array<i32>} : memref<8x8x32xf32, #tpu.memory_space<vmem>>, vector<1x8x32xf32>,
    %396 = vector.shape_cast %387 : vector<8x1xi1> to vector<8x1xi1>
    %397 = vector.broadcast %396 : vector<8x1xi1> to vector<8x32xi1>
    %398 = arith.select %397, %385, %352 : vector<8x32xi1>, vector<8x32xf32>
    %c8_i32 = arith.constant 8 : i32
    %c0_156 = arith.constant 0 : index
    %c0_157 = arith.constant 0 : index
    %c0_158 = arith.constant 0 : index
    %399 = vector.load %arg20[%c0_156, %c0_157, %c0_158] : memref<8x8x32xf32, #tpu.memory_space<vmem>>, vector<8x8x32xf32>
    %400 = vector.shape_cast %399 : vector<8x8x32xf32> to vector<64x32xf32>
    %c0_159 = arith.constant 0 : index
    %c0_160 = arith.constant 0 : index
    %401 = vector.load %arg12[%c0_159, %c0_160] : memref<32x32xf32, #tpu.memory_space<vmem>>, vector<32x32xf32>
    %cst_161 = arith.constant dense<0.000000e+00> : vector<64x32xf32>
    %402 = tpu.matmul %400, %401, %cst_161 {dimension_numbers = #tpu.dot_dimension_numbers<[1], [0], [0], [1], [0, 0, 1, 1], [], []>} : vector<64x32xf32>, vector<32x32xf32>, vector<64x32xf32> -> vector<64x32xf32>
    %c0_162 = arith.constant 0 : index
    %c0_163 = arith.constant 0 : index
    %403 = vector.load %arg13[%c0_162, %c0_163] : memref<1x32xf32, #tpu.memory_space<vmem>>, vector<1x32xf32>
    %404 = vector.broadcast %403 : vector<1x32xf32> to vector<64x32xf32>
    %405 = arith.addf %402, %404 : vector<64x32xf32>
    %cst_164 = arith.constant 0.000000e+00 : f32
    %406 = vector.broadcast %cst_164 : f32 to vector<64x32xf32>
    %407 = arith.maximumf %405, %406 : vector<64x32xf32>
    %408 = vector.shape_cast %407 : vector<64x32xf32> to vector<8x8x32xf32>
    %cst_165 = arith.constant dense<0.000000e+00> : vector<8x32xf32>
    %409 = vector.multi_reduction <add>, %408, %cst_165 [0] : vector<8x8x32xf32> to vector<8x32xf32>
    %cst_166 = arith.constant 1.250000e-01 : f32
    %410 = vector.broadcast %cst_166 : f32 to vector<8x32xf32>
    %411 = arith.mulf %409, %410 : vector<8x32xf32>
    %c0_167 = arith.constant 0 : index
    %c0_168 = arith.constant 0 : index
    %412 = vector.load %arg14[%c0_167, %c0_168] : memref<32x4xf32, #tpu.memory_space<vmem>>, vector<32x4xf32>
    %cst_169 = arith.constant dense<0.000000e+00> : vector<8x4xf32>
    %413 = tpu.matmul %411, %412, %cst_169 {dimension_numbers = #tpu.dot_dimension_numbers<[1], [0], [0], [1], [0, 0, 1, 1], [], []>} : vector<8x32xf32>, vector<32x4xf32>, vector<8x4xf32> -> vector<8x4xf32>
    %c0_170 = arith.constant 0 : index
    %c0_171 = arith.constant 0 : index
    %414 = vector.load %arg15[%c0_170, %c0_171] : memref<1x4xf32, #tpu.memory_space<vmem>>, vector<1x4xf32>
    %415 = vector.broadcast %414 : vector<1x4xf32> to vector<8x4xf32>
    %416 = arith.addf %413, %415 : vector<8x4xf32>
    %cst_172 = arith.constant dense<0xFF800000> : vector<8xf32>
    %417 = vector.multi_reduction <maximumf>, %416, %cst_172 [1] : vector<8x4xf32> to vector<8xf32>
    %418 = vector.shape_cast %417 : vector<8xf32> to vector<8x1xf32>
    %419 = vector.broadcast %418 : vector<8x1xf32> to vector<8x4xf32>
    %420 = arith.subf %416, %419 : vector<8x4xf32>
    %421 = math.exp %420 : vector<8x4xf32>
    %cst_173 = arith.constant dense<0.000000e+00> : vector<8xf32>
    %422 = vector.multi_reduction <add>, %421, %cst_173 [1] : vector<8x4xf32> to vector<8xf32>
    %423 = vector.shape_cast %422 : vector<8xf32> to vector<8x1xf32>
    %424 = tpu.reciprocal %423 {approx = true} : vector<8x1xf32> -> vector<8x1xf32>
    %425 = vector.broadcast %424 : vector<8x1xf32> to vector<8x4xf32>
    %426 = arith.mulf %421, %425 : vector<8x4xf32>
    %c0_174 = arith.constant 0 : index
    %c0_175 = arith.constant 0 : index
    %427 = vector.load %arg16[%c0_174, %c0_175] : memref<8x4xf32, #tpu.memory_space<vmem>>, vector<8x4xf32>
    tpu.vector_store %arg16[%c0_174, %c0_175], %426 {strides = array<i32>} : memref<8x4xf32, #tpu.memory_space<vmem>>, vector<8x4xf32>,
    return
  }
}

</mosaic_0001>

<llo_original>
// kernel: tpu_custom_call.1
$region0: #{tpu_custom_call.1}
  #allocation0 [shape = 'u32[]', space=smem, size = 0x4, offset = 0x4, fixed_abs, tag = 'smem constant byte address 0x4 - core index']
  #allocation1 [shape = 'u32[144,128]{1,0:T(1,128)}', space=vmem, size = 0x12000, scoped, tag = 'internal scratch']
  #allocation2 [shape = 'f32[8,8,32]{2,1,0:T(8,128)}', space=vmem, size = 0x8000, scoped, tag = 'scratch operand']
  #allocation3 [shape = 'f32[8,8,32]{2,1,0:T(8,128)}', space=vmem, size = 0x8000, scoped, tag = 'scratch operand']
  #allocation4 [shape = 'f32[8,8,32]{2,1,0:T(8,128)}', space=vmem, size = 0x8000, scoped, tag = 'scratch operand']
  #allocation5 [shape = 'f32[8,8,32]{2,1,0:T(8,128)}', space=vmem, size = 0x8000, scoped, tag = 'scratch operand']
  %s0 = inlined_call_operand.hbm [shape: f32[8,8,32], index: 0, kind: input, shape index: {}]
  %s1 = inlined_call_operand.vmem [shape: s32[8,1], index: 1, kind: input, shape index: {}]
  %s2 = inlined_call_operand.vmem [shape: f32[32,32], index: 2, kind: input, shape index: {}]
  %s3 = inlined_call_operand.hbm [shape: f32[32,32], index: 3, kind: input, shape index: {}]
  %s4 = inlined_call_operand.hbm [shape: f32[32,32], index: 4, kind: input, shape index: {}]
  %s5 = inlined_call_operand.hbm [shape: f32[32,32], index: 5, kind: input, shape index: {}]
  %s6 = inlined_call_operand.vmem [shape: f32[32,32], index: 6, kind: input, shape index: {}]
  %s7 = inlined_call_operand.hbm [shape: f32[32,32], index: 7, kind: input, shape index: {}]
  %s8 = inlined_call_operand.vmem [shape: f32[1,32], index: 8, kind: input, shape index: {}]
  %s9 = inlined_call_operand.vmem [shape: f32[1,32], index: 9, kind: input, shape index: {}]
  %s10 = inlined_call_operand.vmem [shape: f32[1,32], index: 10, kind: input, shape index: {}]
  %s11 = inlined_call_operand.vmem [shape: f32[1,32], index: 11, kind: input, shape index: {}]
  %s12 = inlined_call_operand.hbm [shape: f32[32,32], index: 12, kind: input, shape index: {}]
  %s13 = inlined_call_operand.vmem [shape: f32[1,32], index: 13, kind: input, shape index: {}]
  %s14 = inlined_call_operand.vmem [shape: f32[32,4], index: 14, kind: input, shape index: {}]
  %s15 = inlined_call_operand.vmem [shape: f32[1,4], index: 15, kind: input, shape index: {}]
  %s16 = inlined_call_operand.vmem [shape: f32[8,4], index: 16, kind: output, shape index: {}]
  %s17 = sld [smem:[#allocation0]]
  $region98: #{tpu_custom_call.1} parent=0
    _
  %s19 = ssub.s32 1, %s17
  %s20 = scalar_select 0, %s19, %s17
  $region1: #{tpu_custom_call.1} parent=0
    #allocation6 [shape = 'u8[32768]{0}', space=vmem, size = 0x8000, scoped, tag = 'input window, operand 0, single buffered']
    #allocation7 [shape = 's32[1]{0}', space=sflag, size = 0x4, scoped, tag = 'scoped memory for tpu_custom_call.1']
    #allocation8 [shape = 'u8[16384]{0}', space=vmem, size = 0x4000, scoped, tag = 'input window, operand 3, single buffered']
    #allocation9 [shape = 's32[1]{0}', space=sflag, size = 0x4, scoped, tag = 'scoped memory for tpu_custom_call.1']
    #allocation10 [shape = 'u8[16384]{0}', space=vmem, size = 0x4000, scoped, tag = 'input window, operand 4, single buffered']
    #allocation11 [shape = 'u8[16384]{0}', space=vmem, size = 0x4000, scoped, tag = 'input window, operand 5, single buffered']
    #allocation12 [shape = 's32[1]{0}', space=sflag, size = 0x4, scoped, tag = 'scoped memory for tpu_custom_call.1']
    #allocation13 [shape = 'u8[16384]{0}', space=vmem, size = 0x4000, scoped, tag = 'input window, operand 7, single buffered']
    #allocation14 [shape = 'u8[16384]{0}', space=vmem, size = 0x4000, scoped, tag = 'input window, operand 12, single buffered']
    #allocation15 [shape = 's32[1]{0}', space=sflag, size = 0x4, scoped, tag = 'scoped memory for tpu_custom_call.1']
    %21 = vsyncpa [#allocation7], 0
    %22 = vsyncpa [#allocation9], 0
    %23 = vsyncpa [#allocation12], 0
    %24 = vsyncpa [#allocation15], 0
    // Predicated region
    $region2: #{tpu_custom_call.1} parent=1 // pred_check
      _
    $region3: #{tpu_custom_call.1} parent=1 // pred_check_branch
      %26 = sbr.rel (0) target = $region5
    $region4: #{tpu_custom_call.1} parent=1 // pred_region
      %s28 = ssub.s32 1024, 1024
      %29 = vsyncadd [#allocation7], %s28
      %s30 = sshll.u32 [#allocation6], 4
      %s31 = int_to_ptr.vmem [resolvable:$true] %s30
      %36 = dma.hbm_to_vmem [thread:$0]  %s0, 1024, %s31, [#allocation7], 128, 128, 8
    $region5: #{tpu_custom_call.1} parent=1 // pred_fallthru
      _
    // Predicated region
    $region6: #{tpu_custom_call.1} parent=1 // pred_check
      _
    $region7: #{tpu_custom_call.1} parent=1 // pred_check_branch
      %38 = sbr.rel (0) target = $region9
    $region8: #{tpu_custom_call.1} parent=1 // pred_region
      _
    $region9: #{tpu_custom_call.1} parent=1 // pred_fallthru
      _
    // Predicated region
    $region10: #{tpu_custom_call.1} parent=1 // pred_check
      _
    $region11: #{tpu_custom_call.1} parent=1 // pred_check_branch
      %40 = sbr.rel (0) target = $region13
    $region12: #{tpu_custom_call.1} parent=1 // pred_region
      _
    $region13: #{tpu_custom_call.1} parent=1 // pred_fallthru
      _
    // Predicated region
    $region14: #{tpu_custom_call.1} parent=1 // pred_check
      _
    $region15: #{tpu_custom_call.1} parent=1 // pred_check_branch
      %42 = sbr.rel (0) target = $region17
    $region16: #{tpu_custom_call.1} parent=1 // pred_region
      %s44 = ssub.s32 512, 512
      %45 = vsyncadd [#allocation9], %s44
      %s46 = sshll.u32 [#allocation8], 4
      %s47 = int_to_ptr.vmem [resolvable:$true] %s46
      %52 = dma.hbm_to_vmem [thread:$0]  %s3, 512, %s47, [#allocation9], 128, 128, 8
    $region17: #{tpu_custom_call.1} parent=1 // pred_fallthru
      _
    // Predicated region
    $region18: #{tpu_custom_call.1} parent=1 // pred_check
      _
    $region19: #{tpu_custom_call.1} parent=1 // pred_check_branch
      %54 = sbr.rel (0) target = $region21
    $region20: #{tpu_custom_call.1} parent=1 // pred_region
      %s56 = ssub.s32 512, 512
      %57 = vsyncadd [#allocation9], %s56
      %s58 = sshll.u32 [#allocation10], 4
      %s59 = int_to_ptr.vmem [resolvable:$true] %s58
      %64 = dma.hbm_to_vmem [thread:$0]  %s4, 512, %s59, [#allocation9], 128, 128, 8
    $region21: #{tpu_custom_call.1} parent=1 // pred_fallthru
      _
    // Predicated region
    $region22: #{tpu_custom_call.1} parent=1 // pred_check
      _
    $region23: #{tpu_custom_call.1} parent=1 // pred_check_branch
      %66 = sbr.rel (0) target = $region25
    $region24: #{tpu_custom_call.1} parent=1 // pred_region
      %s68 = ssub.s32 512, 512
      %69 = vsyncadd [#allocation12], %s68
      %s70 = sshll.u32 [#allocation11], 4
      %s71 = int_to_ptr.vmem [resolvable:$true] %s70
      %76 = dma.hbm_to_vmem [thread:$0]  %s5, 512, %s71, [#allocation12], 128, 128, 8
    $region25: #{tpu_custom_call.1} parent=1 // pred_fallthru
      _
    // Predicated region
    $region26: #{tpu_custom_call.1} parent=1 // pred_check
      _
    $region27: #{tpu_custom_call.1} parent=1 // pred_check_branch
      %78 = sbr.rel (0) target = $region29
    $region28: #{tpu_custom_call.1} parent=1 // pred_region
      _
    $region29: #{tpu_custom_call.1} parent=1 // pred_fallthru
      _
    // Predicated region
    $region30: #{tpu_custom_call.1} parent=1 // pred_check
      _
    $region31: #{tpu_custom_call.1} parent=1 // pred_check_branch
      %80 = sbr.rel (0) target = $region33
    $region32: #{tpu_custom_call.1} parent=1 // pred_region
      %s82 = ssub.s32 512, 512
      %83 = vsyncadd [#allocation12], %s82
      %s84 = sshll.u32 [#allocation13], 4
      %s85 = int_to_ptr.vmem [resolvable:$true] %s84
      %90 = dma.hbm_to_vmem [thread:$0]  %s7, 512, %s85, [#allocation12], 128, 128, 8
    $region33: #{tpu_custom_call.1} parent=1 // pred_fallthru
      _
    // Predicated region
    $region34: #{tpu_custom_call.1} parent=1 // pred_check
      _
    $region35: #{tpu_custom_call.1} parent=1 // pred_check_branch
      %92 = sbr.rel (0) target = $region37
    $region36: #{tpu_custom_call.1} parent=1 // pred_region
      _
    $region37: #{tpu_custom_call.1} parent=1 // pred_fallthru
      _
    // Predicated region
    $region38: #{tpu_custom_call.1} parent=1 // pred_check
      _
    $region39: #{tpu_custom_call.1} parent=1 // pred_check_branch
      %94 = sbr.rel (0) target = $region41
    $region40: #{tpu_custom_call.1} parent=1 // pred_region
      _
    $region41: #{tpu_custom_call.1} parent=1 // pred_fallthru
      _
    // Predicated region
    $region42: #{tpu_custom_call.1} parent=1 // pred_check
      _
    $region43: #{tpu_custom_call.1} parent=1 // pred_check_branch
      %96 = sbr.rel (0) target = $region45
    $region44: #{tpu_custom_call.1} parent=1 // pred_region
      _
    $region45: #{tpu_custom_call.1} parent=1 // pred_fallthru
      _
    // Predicated region
    $region46: #{tpu_custom_call.1} parent=1 // pred_check
      _
    $region47: #{tpu_custom_call.1} parent=1 // pred_check_branch
      %98 = sbr.rel (0) target = $region49
    $region48: #{tpu_custom_call.1} parent=1 // pred_region
      _
    $region49: #{tpu_custom_call.1} parent=1 // pred_fallthru
      _
    // Predicated region
    $region50: #{tpu_custom_call.1} parent=1 // pred_check
      _
    $region51: #{tpu_custom_call.1} parent=1 // pred_check_branch
      %100 = sbr.rel (0) target = $region53
    $region52: #{tpu_custom_call.1} parent=1 // pred_region
      %s102 = ssub.s32 512, 512
      %103 = vsyncadd [#allocation15], %s102
      %s104 = sshll.u32 [#allocation14], 4
      %s105 = int_to_ptr.vmem [resolvable:$true] %s104
      %110 = dma.hbm_to_vmem [thread:$0]  %s12, 512, %s105, [#allocation15], 128, 128, 8
    $region53: #{tpu_custom_call.1} parent=1 // pred_fallthru
      _
    // Predicated region
    $region54: #{tpu_custom_call.1} parent=1 // pred_check
      _
    $region55: #{tpu_custom_call.1} parent=1 // pred_check_branch
      %112 = sbr.rel (0) target = $region57
    $region56: #{tpu_custom_call.1} parent=1 // pred_region
      _
    $region57: #{tpu_custom_call.1} parent=1 // pred_fallthru
      _
    // Predicated region
    $region58: #{tpu_custom_call.1} parent=1 // pred_check
      _
    $region59: #{tpu_custom_call.1} parent=1 // pred_check_branch
      %114 = sbr.rel (0) target = $region61
    $region60: #{tpu_custom_call.1} parent=1 // pred_region
      _
    $region61: #{tpu_custom_call.1} parent=1 // pred_fallthru
      _
    // Predicated region
    $region62: #{tpu_custom_call.1} parent=1 // pred_check
      _
    $region63: #{tpu_custom_call.1} parent=1 // pred_check_branch
      %116 = sbr.rel (0) target = $region65
    $region64: #{tpu_custom_call.1} parent=1 // pred_region
      _
    $region65: #{tpu_custom_call.1} parent=1 // pred_fallthru
      _
    // Predicated region
    $region66: #{tpu_custom_call.1} parent=1 // pred_check
      _
    $region67: #{tpu_custom_call.1} parent=1 // pred_check_branch
      %118 = sbr.rel (0) target = $region69
    $region68: #{tpu_custom_call.1} parent=1 // pred_region
      %119 = dma.done [#allocation7], 1024
    $region69: #{tpu_custom_call.1} parent=1 // pred_fallthru
      _
    // Predicated region
    $region70: #{tpu_custom_call.1} parent=1 // pred_check
      _
    $region71: #{tpu_custom_call.1} parent=1 // pred_check_branch
      %121 = sbr.rel (0) target = $region73
    $region72: #{tpu_custom_call.1} parent=1 // pred_region
      %122 = dma.done [#allocation9], 512
    $region73: #{tpu_custom_call.1} parent=1 // pred_fallthru
      _
    // Predicated region
    $region74: #{tpu_custom_call.1} parent=1 // pred_check
      _
    $region75: #{tpu_custom_call.1} parent=1 // pred_check_branch
      %124 = sbr.rel (0) target = $region77
    $region76: #{tpu_custom_call.1} parent=1 // pred_region
      %125 = dma.done [#allocation9], 512
    $region77: #{tpu_custom_call.1} parent=1 // pred_fallthru
      _
    // Predicated region
    $region78: #{tpu_custom_call.1} parent=1 // pred_check
      _
    $region79: #{tpu_custom_call.1} parent=1 // pred_check_branch
      %127 = sbr.rel (0) target = $region81
    $region80: #{tpu_custom_call.1} parent=1 // pred_region
      %128 = dma.done [#allocation12], 512
    $region81: #{tpu_custom_call.1} parent=1 // pred_fallthru
      _
    // Predicated region
    $region82: #{tpu_custom_call.1} parent=1 // pred_check
      _
    $region83: #{tpu_custom_call.1} parent=1 // pred_check_branch
      %130 = sbr.rel (0) target = $region85
    $region84: #{tpu_custom_call.1} parent=1 // pred_region
      %131 = dma.done [#allocation12], 512
    $region85: #{tpu_custom_call.1} parent=1 // pred_fallthru
      _
    // Predicated region
    $region86: #{tpu_custom_call.1} parent=1 // pred_check
      _
    $region87: #{tpu_custom_call.1} parent=1 // pred_check_branch
      %133 = sbr.rel (0) target = $region89
    $region88: #{tpu_custom_call.1} parent=1 // pred_region
      %134 = dma.done [#allocation15], 512
    $region89: #{tpu_custom_call.1} parent=1 // pred_fallthru
      _
    %v135 = vld [vmem:[%s1] sm:$0xff]
    %v136 = vld [vmem:[#allocation6] sm:$0xff]
    %v137 = vld [vmem:[#allocation6 + $0x8] sm:$0xff]
    %v138 = vld [vmem:[#allocation6 + $0x10] sm:$0xff]
    %v139 = vld [vmem:[#allocation6 + $0x18] sm:$0xff]
    %v140 = vld [vmem:[#allocation6 + $0x20] sm:$0xff]
    %v141 = vld [vmem:[#allocation6 + $0x28] sm:$0xff]
    %v142 = vld [vmem:[#allocation6 + $0x30] sm:$0xff]
    %v143 = vld [vmem:[#allocation6 + $0x38] sm:$0xff]
    %v144 = vld [vmem:[%s2] sm:$0xff]
    %v145 = vld [vmem:[%s2 + $0x8] sm:$0xff]
    %v146 = vld [vmem:[%s2 + $0x10] sm:$0xff]
    %v147 = vld [vmem:[%s2 + $0x18] sm:$0xff]
    %v148 = vld [vmem:[%s8] sm:$0x1]
    %v150 = vlaneseq
    %v151 = vshrl.u32 %v150, 7
    %v152 = vsub.s32 0, %v151
    %v153 = vrot.slane %v148, %v152
    %vm155 = vcmask 261120
    %v157 = vsel %vm155, %v136, 0
    %v160 = vsel %vm155, %v137, 0
    %v163 = vsel %vm155, %v138, 0
    %v166 = vsel %vm155, %v139, 0
    %v169 = vsel %vm155, %v140, 0
    %v172 = vsel %vm155, %v141, 0
    %v175 = vsel %vm155, %v142, 0
    %v178 = vsel %vm155, %v143, 0
    %180 = vmatprep.subr.mxu0 0.0
    %181 = vmatpush1.msra.mxu0 %v144
    %182 = vmatprep.subr.mxu0 0.0
    %183 = vmatpush1.msra.mxu0 %v145
    %184 = vmatprep.subr.mxu0 0.0
    %185 = vmatpush1.msra.mxu0 %v146
    %186 = vmatprep.subr.mxu0 0.0
    %187 = vmatpush1.msra.mxu0 %v147
    %188 = vmatprep.subr.mxu0 0.0
    %189 = vmatpush1.msra.mxu0 0.0
    %190 = vmatprep.subr.mxu0 0.0
    %191 = vmatpush1.msra.mxu0 0.0
    %192 = vmatprep.subr.mxu0 0.0
    %193 = vmatpush1.msra.mxu0 0.0
    %194 = vmatprep.subr.mxu0 0.0
    %195 = vmatpush1.msra.mxu0 0.0
    %196 = vmatprep.subr.mxu0 0.0
    %197 = vmatpush1.msra.mxu0 0.0
    %198 = vmatprep.subr.mxu0 0.0
    %199 = vmatpush1.msra.mxu0 0.0
    %200 = vmatprep.subr.mxu0 0.0
    %201 = vmatpush1.msra.mxu0 0.0
    %202 = vmatprep.subr.mxu0 0.0
    %203 = vmatpush1.msra.mxu0 0.0
    %204 = vmatprep.subr.mxu0 0.0
    %205 = vmatpush1.msra.mxu0 0.0
    %206 = vmatprep.subr.mxu0 0.0
    %207 = vmatpush1.msra.mxu0 0.0
    %208 = vmatprep.subr.mxu0 0.0
    %209 = vmatpush1.msra.mxu0 0.0
    %210 = vmatprep.subr.mxu0 0.0
    %211 = vmatpush1.msra.mxu0 0.0
    %212 = vmatprep.subr.mxu0 0.0
    %213 = vmatpush1.msra.mxu0 0.0
    %214 = vmatprep.subr.mxu0 0.0
    %215 = vmatpush1.msra.mxu0 0.0
    %216 = vmatprep.subr.mxu0 0.0
    %217 = vmatpush1.msra.mxu0 0.0
    %218 = vmatprep.subr.mxu0 0.0
    %219 = vmatpush1.msra.mxu0 0.0
    %220 = vmatprep.subr.mxu0 0.0
    %221 = vmatpush1.msra.mxu0 0.0
    %222 = vmatprep.subr.mxu0 0.0
    %223 = vmatpush1.msra.mxu0 0.0
    %224 = vmatprep.subr.mxu0 0.0
    %225 = vmatpush1.msra.mxu0 0.0
    %226 = vmatprep.subr.mxu0 0.0
    %227 = vmatpush1.msra.mxu0 0.0
    %228 = vmatprep.subr.mxu0 0.0
    %229 = vmatpush1.msra.mxu0 0.0
    %230 = vmatprep.subr.mxu0 0.0
    %231 = vmatpush1.msra.mxu0 0.0
    %232 = vmatprep.subr.mxu0 0.0
    %233 = vmatpush1.msra.mxu0 0.0
    %234 = vmatprep.subr.mxu0 0.0
    %235 = vmatpush1.msra.mxu0 0.0
    %236 = vmatprep.subr.mxu0 0.0
    %237 = vmatpush1.msra.mxu0 0.0
    %238 = vmatprep.subr.mxu0 0.0
    %239 = vmatpush1.msra.mxu0 0.0
    %240 = vmatprep.subr.mxu0 0.0
    %241 = vmatpush1.msra.mxu0 0.0
    %242 = vmatprep.subr.mxu0 0.0
    %243 = vmatpush1.msra.mxu0 0.0
    %244 = vmatprep.mubr.f32.mxu0 0.0
    %245 = vmatmul.mubr.f32.gmra.mrb[0].mxu0 %v157
    %v246 = vpop.f32.mrb[0].mxu0
    %v247 = vadd.f32 %v153, %v246
    %v248 = vpop.f32.mrb[0].mxu0
    %249 = vmatprep.mubr.f32.mxu0 0.0
    %250 = vmatmul.mubr.f32.gmra.mrb[0].mxu0 %v160
    %v251 = vpop.f32.mrb[0].mxu0
    %v252 = vadd.f32 %v153, %v251
    %v253 = vpop.f32.mrb[0].mxu0
    %254 = vmatprep.mubr.f32.mxu0 0.0
    %255 = vmatmul.mubr.f32.gmra.mrb[0].mxu0 %v163
    %v256 = vpop.f32.mrb[0].mxu0
    %v257 = vadd.f32 %v153, %v256
    %v258 = vpop.f32.mrb[0].mxu0
    %259 = vmatprep.mubr.f32.mxu0 0.0
    %260 = vmatmul.mubr.f32.gmra.mrb[0].mxu0 %v166
    %v261 = vpop.f32.mrb[0].mxu0
    %v262 = vadd.f32 %v153, %v261
    %v263 = vpop.f32.mrb[0].mxu0
    %264 = vmatprep.mubr.f32.mxu0 0.0
    %265 = vmatmul.mubr.f32.gmra.mrb[0].mxu0 %v169
    %v266 = vpop.f32.mrb[0].mxu0
    %v267 = vadd.f32 %v153, %v266
    %v268 = vpop.f32.mrb[0].mxu0
    %269 = vmatprep.mubr.f32.mxu0 0.0
    %270 = vmatmul.mubr.f32.gmra.mrb[0].mxu0 %v172
    %v271 = vpop.f32.mrb[0].mxu0
    %v272 = vadd.f32 %v153, %v271
    %v273 = vpop.f32.mrb[0].mxu0
    %274 = vmatprep.mubr.f32.mxu0 0.0
    %275 = vmatmul.mubr.f32.gmra.mrb[0].mxu0 %v175
    %v276 = vpop.f32.mrb[0].mxu0
    %v277 = vadd.f32 %v153, %v276
    %v278 = vpop.f32.mrb[0].mxu0
    %279 = vmatprep.mubr.f32.mxu0 0.0
    %280 = vmatmul.mubr.f32.gmra.mrb[0].mxu0 %v178
    %v281 = vpop.f32.mrb[0].mxu0
    %v282 = vadd.f32 %v153, %v281
    %v283 = vpop.f32.mrb[0].mxu0
    %284 = vdwg.mxu0
    %285 = vst.msk [vmem:[#allocation2] sm:$0xff] %vm155, %v247
    %286 = vst.msk [vmem:[#allocation2 + $0x8] sm:$0xff] %vm155, %v252
    %287 = vst.msk [vmem:[#allocation2 + $0x10] sm:$0xff] %vm155, %v257
    %288 = vst.msk [vmem:[#allocation2 + $0x18] sm:$0xff] %vm155, %v262
    %289 = vst.msk [vmem:[#allocation2 + $0x20] sm:$0xff] %vm155, %v267
    %290 = vst.msk [vmem:[#allocation2 + $0x28] sm:$0xff] %vm155, %v272
    %291 = vst.msk [vmem:[#allocation2 + $0x30] sm:$0xff] %vm155, %v277
    %292 = vst.msk [vmem:[#allocation2 + $0x38] sm:$0xff] %vm155, %v282
    %v293 = vld [vmem:[#allocation8] sm:$0xff]
    %v294 = vld [vmem:[#allocation8 + $0x8] sm:$0xff]
    %v295 = vld [vmem:[#allocation8 + $0x10] sm:$0xff]
    %v296 = vld [vmem:[#allocation8 + $0x18] sm:$0xff]
    %v297 = vld [vmem:[%s9] sm:$0x1]
    %v299 = vlaneseq
    %v300 = vshrl.u32 %v299, 7
    %v301 = vsub.s32 0, %v300
    %v302 = vrot.slane %v297, %v301
    %304 = vmatprep.subr.mxu0 0.0
    %305 = vmatpush1.msra.mxu0 %v293
    %306 = vmatprep.subr.mxu0 0.0
    %307 = vmatpush1.msra.mxu0 %v294
    %308 = vmatprep.subr.mxu0 0.0
    %309 = vmatpush1.msra.mxu0 %v295
    %310 = vmatprep.subr.mxu0 0.0
    %311 = vmatpush1.msra.mxu0 %v296
    %312 = vmatprep.subr.mxu0 0.0
    %313 = vmatpush1.msra.mxu0 0.0
    %314 = vmatprep.subr.mxu0 0.0
    %315 = vmatpush1.msra.mxu0 0.0
    %316 = vmatprep.subr.mxu0 0.0
    %317 = vmatpush1.msra.mxu0 0.0
    %318 = vmatprep.subr.mxu0 0.0
    %319 = vmatpush1.msra.mxu0 0.0
    %320 = vmatprep.subr.mxu0 0.0
    %321 = vmatpush1.msra.mxu0 0.0
    %322 = vmatprep.subr.mxu0 0.0
    %323 = vmatpush1.msra.mxu0 0.0
    %324 = vmatprep.subr.mxu0 0.0
    %325 = vmatpush1.msra.mxu0 0.0
    %326 = vmatprep.subr.mxu0 0.0
    %327 = vmatpush1.msra.mxu0 0.0
    %328 = vmatprep.subr.mxu0 0.0
    %329 = vmatpush1.msra.mxu0 0.0
    %330 = vmatprep.subr.mxu0 0.0
    %331 = vmatpush1.msra.mxu0 0.0
    %332 = vmatprep.subr.mxu0 0.0
    %333 = vmatpush1.msra.mxu0 0.0
    %334 = vmatprep.subr.mxu0 0.0
    %335 = vmatpush1.msra.mxu0 0.0
    %336 = vmatprep.subr.mxu0 0.0
    %337 = vmatpush1.msra.mxu0 0.0
    %338 = vmatprep.subr.mxu0 0.0
    %339 = vmatpush1.msra.mxu0 0.0
    %340 = vmatprep.subr.mxu0 0.0
    %341 = vmatpush1.msra.mxu0 0.0
    %342 = vmatprep.subr.mxu0 0.0
    %343 = vmatpush1.msra.mxu0 0.0
    %344 = vmatprep.subr.mxu0 0.0
    %345 = vmatpush1.msra.mxu0 0.0
    %346 = vmatprep.subr.mxu0 0.0
    %347 = vmatpush1.msra.mxu0 0.0
    %348 = vmatprep.subr.mxu0 0.0
    %349 = vmatpush1.msra.mxu0 0.0
    %350 = vmatprep.subr.mxu0 0.0
    %351 = vmatpush1.msra.mxu0 0.0
    %352 = vmatprep.subr.mxu0 0.0
    %353 = vmatpush1.msra.mxu0 0.0
    %354 = vmatprep.subr.mxu0 0.0
    %355 = vmatpush1.msra.mxu0 0.0
    %356 = vmatprep.subr.mxu0 0.0
    %357 = vmatpush1.msra.mxu0 0.0
    %358 = vmatprep.subr.mxu0 0.0
    %359 = vmatpush1.msra.mxu0 0.0
    %360 = vmatprep.subr.mxu0 0.0
    %361 = vmatpush1.msra.mxu0 0.0
    %362 = vmatprep.subr.mxu0 0.0
    %363 = vmatpush1.msra.mxu0 0.0
    %364 = vmatprep.subr.mxu0 0.0
    %365 = vmatpush1.msra.mxu0 0.0
    %366 = vmatprep.subr.mxu0 0.0
    %367 = vmatpush1.msra.mxu0 0.0
    %368 = vmatprep.mubr.f32.mxu0 0.0
    %369 = vmatmul.mubr.f32.gmra.mrb[0].mxu0 %v157
    %v370 = vpop.f32.mrb[0].mxu0
    %v371 = vadd.f32 %v302, %v370
    %v372 = vpop.f32.mrb[0].mxu0
    %373 = vmatprep.mubr.f32.mxu0 0.0
    %374 = vmatmul.mubr.f32.gmra.mrb[0].mxu0 %v160
    %v375 = vpop.f32.mrb[0].mxu0
    %v376 = vadd.f32 %v302, %v375
    %v377 = vpop.f32.mrb[0].mxu0
    %378 = vmatprep.mubr.f32.mxu0 0.0
    %379 = vmatmul.mubr.f32.gmra.mrb[0].mxu0 %v163
    %v380 = vpop.f32.mrb[0].mxu0
    %v381 = vadd.f32 %v302, %v380
    %v382 = vpop.f32.mrb[0].mxu0
    %383 = vmatprep.mubr.f32.mxu0 0.0
    %384 = vmatmul.mubr.f32.gmra.mrb[0].mxu0 %v166
    %v385 = vpop.f32.mrb[0].mxu0
    %v386 = vadd.f32 %v302, %v385
    %v387 = vpop.f32.mrb[0].mxu0
    %388 = vmatprep.mubr.f32.mxu0 0.0
    %389 = vmatmul.mubr.f32.gmra.mrb[0].mxu0 %v169
    %v390 = vpop.f32.mrb[0].mxu0
    %v391 = vadd.f32 %v302, %v390
    %v392 = vpop.f32.mrb[0].mxu0
    %393 = vmatprep.mubr.f32.mxu0 0.0
    %394 = vmatmul.mubr.f32.gmra.mrb[0].mxu0 %v172
    %v395 = vpop.f32.mrb[0].mxu0
    %v396 = vadd.f32 %v302, %v395
    %v397 = vpop.f32.mrb[0].mxu0
    %398 = vmatprep.mubr.f32.mxu0 0.0
    %399 = vmatmul.mubr.f32.gmra.mrb[0].mxu0 %v175
    %v400 = vpop.f32.mrb[0].mxu0
    %v401 = vadd.f32 %v302, %v400
    %v402 = vpop.f32.mrb[0].mxu0
    %403 = vmatprep.mubr.f32.mxu0 0.0
    %404 = vmatmul.mubr.f32.gmra.mrb[0].mxu0 %v178
    %v405 = vpop.f32.mrb[0].mxu0
    %v406 = vadd.f32 %v302, %v405
    %v407 = vpop.f32.mrb[0].mxu0
    %408 = vdwg.mxu0
    %409 = vst.msk [vmem:[#allocation3] sm:$0xff] %vm155, %v371
    %410 = vst.msk [vmem:[#allocation3 + $0x8] sm:$0xff] %vm155, %v376
    %411 = vst.msk [vmem:[#allocation3 + $0x10] sm:$0xff] %vm155, %v381
    %412 = vst.msk [vmem:[#allocation3 + $0x18] sm:$0xff] %vm155, %v386
    %413 = vst.msk [vmem:[#allocation3 + $0x20] sm:$0xff] %vm155, %v391
    %414 = vst.msk [vmem:[#allocation3 + $0x28] sm:$0xff] %vm155, %v396
    %415 = vst.msk [vmem:[#allocation3 + $0x30] sm:$0xff] %vm155, %v401
    %416 = vst.msk [vmem:[#allocation3 + $0x38] sm:$0xff] %vm155, %v406
    %v417 = vld [vmem:[#allocation10] sm:$0xff]
    %v418 = vld [vmem:[#allocation10 + $0x8] sm:$0xff]
    %v419 = vld [vmem:[#allocation10 + $0x10] sm:$0xff]
    %v420 = vld [vmem:[#allocation10 + $0x18] sm:$0xff]
    %v421 = vld [vmem:[%s10] sm:$0x1]
    %v423 = vlaneseq
    %v424 = vshrl.u32 %v423, 7
    %v425 = vsub.s32 0, %v424
    %v426 = vrot.slane %v421, %v425
    %428 = vmatprep.subr.mxu0 0.0
    %429 = vmatpush1.msra.mxu0 %v417
    %430 = vmatprep.subr.mxu0 0.0
    %431 = vmatpush1.msra.mxu0 %v418
    %432 = vmatprep.subr.mxu0 0.0
    %433 = vmatpush1.msra.mxu0 %v419
    %434 = vmatprep.subr.mxu0 0.0
    %435 = vmatpush1.msra.mxu0 %v420
    %436 = vmatprep.subr.mxu0 0.0
    %437 = vmatpush1.msra.mxu0 0.0
    %438 = vmatprep.subr.mxu0 0.0
    %439 = vmatpush1.msra.mxu0 0.0
    %440 = vmatprep.subr.mxu0 0.0
    %441 = vmatpush1.msra.mxu0 0.0
    %442 = vmatprep.subr.mxu0 0.0
    %443 = vmatpush1.msra.mxu0 0.0
    %444 = vmatprep.subr.mxu0 0.0
    %445 = vmatpush1.msra.mxu0 0.0
    %446 = vmatprep.subr.mxu0 0.0
    %447 = vmatpush1.msra.mxu0 0.0
    %448 = vmatprep.subr.mxu0 0.0
    %449 = vmatpush1.msra.mxu0 0.0
    %450 = vmatprep.subr.mxu0 0.0
    %451 = vmatpush1.msra.mxu0 0.0
    %452 = vmatprep.subr.mxu0 0.0
    %453 = vmatpush1.msra.mxu0 0.0
    %454 = vmatprep.subr.mxu0 0.0
    %455 = vmatpush1.msra.mxu0 0.0
    %456 = vmatprep.subr.mxu0 0.0
    %457 = vmatpush1.msra.mxu0 0.0
    %458 = vmatprep.subr.mxu0 0.0
    %459 = vmatpush1.msra.mxu0 0.0
    %460 = vmatprep.subr.mxu0 0.0
    %461 = vmatpush1.msra.mxu0 0.0
    %462 = vmatprep.subr.mxu0 0.0
    %463 = vmatpush1.msra.mxu0 0.0
    %464 = vmatprep.subr.mxu0 0.0
    %465 = vmatpush1.msra.mxu0 0.0
    %466 = vmatprep.subr.mxu0 0.0
    %467 = vmatpush1.msra.mxu0 0.0
    %468 = vmatprep.subr.mxu0 0.0
    %469 = vmatpush1.msra.mxu0 0.0
    %470 = vmatprep.subr.mxu0 0.0
    %471 = vmatpush1.msra.mxu0 0.0
    %472 = vmatprep.subr.mxu0 0.0
    %473 = vmatpush1.msra.mxu0 0.0
    %474 = vmatprep.subr.mxu0 0.0
    %475 = vmatpush1.msra.mxu0 0.0
    %476 = vmatprep.subr.mxu0 0.0
    %477 = vmatpush1.msra.mxu0 0.0
    %478 = vmatprep.subr.mxu0 0.0
    %479 = vmatpush1.msra.mxu0 0.0
    %480 = vmatprep.subr.mxu0 0.0
    %481 = vmatpush1.msra.mxu0 0.0
    %482 = vmatprep.subr.mxu0 0.0
    %483 = vmatpush1.msra.mxu0 0.0
    %484 = vmatprep.subr.mxu0 0.0
    %485 = vmatpush1.msra.mxu0 0.0
    %486 = vmatprep.subr.mxu0 0.0
    %487 = vmatpush1.msra.mxu0 0.0
    %488 = vmatprep.subr.mxu0 0.0
    %489 = vmatpush1.msra.mxu0 0.0
    %490 = vmatprep.subr.mxu0 0.0
    %491 = vmatpush1.msra.mxu0 0.0
    %492 = vmatprep.mubr.f32.mxu0 0.0
    %493 = vmatmul.mubr.f32.gmra.mrb[0].mxu0 %v157
    %v494 = vpop.f32.mrb[0].mxu0
    %v495 = vadd.f32 %v426, %v494
    %v496 = vpop.f32.mrb[0].mxu0
    %497 = vmatprep.mubr.f32.mxu0 0.0
    %498 = vmatmul.mubr.f32.gmra.mrb[0].mxu0 %v160
    %v499 = vpop.f32.mrb[0].mxu0
    %v500 = vadd.f32 %v426, %v499
    %v501 = vpop.f32.mrb[0].mxu0
    %502 = vmatprep.mubr.f32.mxu0 0.0
    %503 = vmatmul.mubr.f32.gmra.mrb[0].mxu0 %v163
    %v504 = vpop.f32.mrb[0].mxu0
    %v505 = vadd.f32 %v426, %v504
    %v506 = vpop.f32.mrb[0].mxu0
    %507 = vmatprep.mubr.f32.mxu0 0.0
    %508 = vmatmul.mubr.f32.gmra.mrb[0].mxu0 %v166
    %v509 = vpop.f32.mrb[0].mxu0
    %v510 = vadd.f32 %v426, %v509
    %v511 = vpop.f32.mrb[0].mxu0
    %512 = vmatprep.mubr.f32.mxu0 0.0
    %513 = vmatmul.mubr.f32.gmra.mrb[0].mxu0 %v169
    %v514 = vpop.f32.mrb[0].mxu0
    %v515 = vadd.f32 %v426, %v514
    %v516 = vpop.f32.mrb[0].mxu0
    %517 = vmatprep.mubr.f32.mxu0 0.0
    %518 = vmatmul.mubr.f32.gmra.mrb[0].mxu0 %v172
    %v519 = vpop.f32.mrb[0].mxu0
    %v520 = vadd.f32 %v426, %v519
    %v521 = vpop.f32.mrb[0].mxu0
    %522 = vmatprep.mubr.f32.mxu0 0.0
    %523 = vmatmul.mubr.f32.gmra.mrb[0].mxu0 %v175
    %v524 = vpop.f32.mrb[0].mxu0
    %v525 = vadd.f32 %v426, %v524
    %v526 = vpop.f32.mrb[0].mxu0
    %527 = vmatprep.mubr.f32.mxu0 0.0
    %528 = vmatmul.mubr.f32.gmra.mrb[0].mxu0 %v178
    %v529 = vpop.f32.mrb[0].mxu0
    %v530 = vadd.f32 %v426, %v529
    %v531 = vpop.f32.mrb[0].mxu0
    %532 = vdwg.mxu0
    %533 = vst.msk [vmem:[#allocation4] sm:$0xff] %vm155, %v495
    %534 = vst.msk [vmem:[#allocation4 + $0x8] sm:$0xff] %vm155, %v500
    %535 = vst.msk [vmem:[#allocation4 + $0x10] sm:$0xff] %vm155, %v505
    %536 = vst.msk [vmem:[#allocation4 + $0x18] sm:$0xff] %vm155, %v510
    %537 = vst.msk [vmem:[#allocation4 + $0x20] sm:$0xff] %vm155, %v515
    %538 = vst.msk [vmem:[#allocation4 + $0x28] sm:$0xff] %vm155, %v520
    %539 = vst.msk [vmem:[#allocation4 + $0x30] sm:$0xff] %vm155, %v525
    %540 = vst.msk [vmem:[#allocation4 + $0x38] sm:$0xff] %vm155, %v530
    %v541 = vld [vmem:[#allocation11] sm:$0xff]
    %v542 = vld [vmem:[#allocation11 + $0x8] sm:$0xff]
    %v543 = vld [vmem:[#allocation11 + $0x10] sm:$0xff]
    %v544 = vld [vmem:[#allocation11 + $0x18] sm:$0xff]
    %v545 = vld [vmem:[%s6] sm:$0xff]
    %v546 = vld [vmem:[%s6 + $0x8] sm:$0xff]
    %v547 = vld [vmem:[%s6 + $0x10] sm:$0xff]
    %v548 = vld [vmem:[%s6 + $0x18] sm:$0xff]
    %v549 = vld [vmem:[#allocation13] sm:$0xff]
    %v550 = vld [vmem:[#allocation13 + $0x8] sm:$0xff]
    %v551 = vld [vmem:[#allocation13 + $0x10] sm:$0xff]
    %v552 = vld [vmem:[#allocation13 + $0x18] sm:$0xff]
    %v553 = vld [vmem:[%s11] sm:$0x1]
    %v555 = vlaneseq
    %v556 = vshrl.u32 %v555, 7
    %v557 = vsub.s32 0, %v556
    %v558 = vrot.slane %v553, %v557
    %v561 = vsel %vm155, 0.0, 0
    %563 = vmatprep.subr.mxu0 0.0
    %564 = vmatpush1.msra.mxu0 %v541
    %565 = vmatprep.subr.mxu0 0.0
    %566 = vmatpush1.msra.mxu0 %v542
    %567 = vmatprep.subr.mxu0 0.0
    %568 = vmatpush1.msra.mxu0 %v543
    %569 = vmatprep.subr.mxu0 0.0
    %570 = vmatpush1.msra.mxu0 %v544
    %571 = vmatprep.subr.mxu0 0.0
    %572 = vmatpush1.msra.mxu0 0.0
    %573 = vmatprep.subr.mxu0 0.0
    %574 = vmatpush1.msra.mxu0 0.0
    %575 = vmatprep.subr.mxu0 0.0
    %576 = vmatpush1.msra.mxu0 0.0
    %577 = vmatprep.subr.mxu0 0.0
    %578 = vmatpush1.msra.mxu0 0.0
    %579 = vmatprep.subr.mxu0 0.0
    %580 = vmatpush1.msra.mxu0 0.0
    %581 = vmatprep.subr.mxu0 0.0
    %582 = vmatpush1.msra.mxu0 0.0
    %583 = vmatprep.subr.mxu0 0.0
    %584 = vmatpush1.msra.mxu0 0.0
    %585 = vmatprep.subr.mxu0 0.0
    %586 = vmatpush1.msra.mxu0 0.0
    %587 = vmatprep.subr.mxu0 0.0
    %588 = vmatpush1.msra.mxu0 0.0
    %589 = vmatprep.subr.mxu0 0.0
    %590 = vmatpush1.msra.mxu0 0.0
    %591 = vmatprep.subr.mxu0 0.0
    %592 = vmatpush1.msra.mxu0 0.0
    %593 = vmatprep.subr.mxu0 0.0
    %594 = vmatpush1.msra.mxu0 0.0
    %595 = vmatprep.subr.mxu0 0.0
    %596 = vmatpush1.msra.mxu0 0.0
    %597 = vmatprep.subr.mxu0 0.0
    %598 = vmatpush1.msra.mxu0 0.0
    %599 = vmatprep.subr.mxu0 0.0
    %600 = vmatpush1.msra.mxu0 0.0
    %601 = vmatprep.subr.mxu0 0.0
    %602 = vmatpush1.msra.mxu0 0.0
    %603 = vmatprep.subr.mxu0 0.0
    %604 = vmatpush1.msra.mxu0 0.0
    %605 = vmatprep.subr.mxu0 0.0
    %606 = vmatpush1.msra.mxu0 0.0
    %607 = vmatprep.subr.mxu0 0.0
    %608 = vmatpush1.msra.mxu0 0.0
    %609 = vmatprep.subr.mxu0 0.0
    %610 = vmatpush1.msra.mxu0 0.0
    %611 = vmatprep.subr.mxu0 0.0
    %612 = vmatpush1.msra.mxu0 0.0
    %613 = vmatprep.subr.mxu0 0.0
    %614 = vmatpush1.msra.mxu0 0.0
    %615 = vmatprep.subr.mxu0 0.0
    %616 = vmatpush1.msra.mxu0 0.0
    %617 = vmatprep.subr.mxu0 0.0
    %618 = vmatpush1.msra.mxu0 0.0
    %619 = vmatprep.subr.mxu0 0.0
    %620 = vmatpush1.msra.mxu0 0.0
    %621 = vmatprep.subr.mxu0 0.0
    %622 = vmatpush1.msra.mxu0 0.0
    %623 = vmatprep.subr.mxu0 0.0
    %624 = vmatpush1.msra.mxu0 0.0
    %625 = vmatprep.subr.mxu0 0.0
    %626 = vmatpush1.msra.mxu0 0.0
    %627 = vmatprep.mubr.f32.mxu0 0.0
    %628 = vmatmul.mubr.f32.gmra.mrb[0].mxu0 %v561
    %v629 = vpop.f32.mrb[0].mxu0
    %v630 = vadd.f32 0.0, %v629
    %v631 = vpop.f32.mrb[0].mxu0
    %632 = vdwg.mxu0
    %633 = vmatprep.subr.mxu0 0.0
    %634 = vmatpush1.msra.mxu0 %v545
    %635 = vmatprep.subr.mxu0 0.0
    %636 = vmatpush1.msra.mxu0 %v546
    %637 = vmatprep.subr.mxu0 0.0
    %638 = vmatpush1.msra.mxu0 %v547
    %639 = vmatprep.subr.mxu0 0.0
    %640 = vmatpush1.msra.mxu0 %v548
    %641 = vmatprep.subr.mxu0 0.0
    %642 = vmatpush1.msra.mxu0 0.0
    %643 = vmatprep.subr.mxu0 0.0
    %644 = vmatpush1.msra.mxu0 0.0
    %645 = vmatprep.subr.mxu0 0.0
    %646 = vmatpush1.msra.mxu0 0.0
    %647 = vmatprep.subr.mxu0 0.0
    %648 = vmatpush1.msra.mxu0 0.0
    %649 = vmatprep.subr.mxu0 0.0
    %650 = vmatpush1.msra.mxu0 0.0
    %651 = vmatprep.subr.mxu0 0.0
    %652 = vmatpush1.msra.mxu0 0.0
    %653 = vmatprep.subr.mxu0 0.0
    %654 = vmatpush1.msra.mxu0 0.0
    %655 = vmatprep.subr.mxu0 0.0
    %656 = vmatpush1.msra.mxu0 0.0
    %657 = vmatprep.subr.mxu0 0.0
    %658 = vmatpush1.msra.mxu0 0.0
    %659 = vmatprep.subr.mxu0 0.0
    %660 = vmatpush1.msra.mxu0 0.0
    %661 = vmatprep.subr.mxu0 0.0
    %662 = vmatpush1.msra.mxu0 0.0
    %663 = vmatprep.subr.mxu0 0.0
    %664 = vmatpush1.msra.mxu0 0.0
    %665 = vmatprep.subr.mxu0 0.0
    %666 = vmatpush1.msra.mxu0 0.0
    %667 = vmatprep.subr.mxu0 0.0
    %668 = vmatpush1.msra.mxu0 0.0
    %669 = vmatprep.subr.mxu0 0.0
    %670 = vmatpush1.msra.mxu0 0.0
    %671 = vmatprep.subr.mxu0 0.0
    %672 = vmatpush1.msra.mxu0 0.0
    %673 = vmatprep.subr.mxu0 0.0
    %674 = vmatpush1.msra.mxu0 0.0
    %675 = vmatprep.subr.mxu0 0.0
    %676 = vmatpush1.msra.mxu0 0.0
    %677 = vmatprep.subr.mxu0 0.0
    %678 = vmatpush1.msra.mxu0 0.0
    %679 = vmatprep.subr.mxu0 0.0
    %680 = vmatpush1.msra.mxu0 0.0
    %681 = vmatprep.subr.mxu0 0.0
    %682 = vmatpush1.msra.mxu0 0.0
    %683 = vmatprep.subr.mxu0 0.0
    %684 = vmatpush1.msra.mxu0 0.0
    %685 = vmatprep.subr.mxu0 0.0
    %686 = vmatpush1.msra.mxu0 0.0
    %687 = vmatprep.subr.mxu0 0.0
    %688 = vmatpush1.msra.mxu0 0.0
    %689 = vmatprep.subr.mxu0 0.0
    %690 = vmatpush1.msra.mxu0 0.0
    %691 = vmatprep.subr.mxu0 0.0
    %692 = vmatpush1.msra.mxu0 0.0
    %693 = vmatprep.subr.mxu0 0.0
    %694 = vmatpush1.msra.mxu0 0.0
    %695 = vmatprep.subr.mxu0 0.0
    %696 = vmatpush1.msra.mxu0 0.0
    %697 = vmatprep.mubr.f32.mxu0 0.0
    %698 = vmatmul.mubr.f32.gmra.mrb[0].mxu0 %v561
    %v699 = vpop.f32.mrb[0].mxu0
    %v700 = vadd.f32 0.0, %v699
    %v701 = vpop.f32.mrb[0].mxu0
    %702 = vdwg.mxu0
    %703 = vmatprep.subr.mxu0 0.0
    %704 = vmatpush1.msra.mxu0 %v549
    %705 = vmatprep.subr.mxu0 0.0
    %706 = vmatpush1.msra.mxu0 %v550
    %707 = vmatprep.subr.mxu0 0.0
    %708 = vmatpush1.msra.mxu0 %v551
    %709 = vmatprep.subr.mxu0 0.0
    %710 = vmatpush1.msra.mxu0 %v552
    %711 = vmatprep.subr.mxu0 0.0
    %712 = vmatpush1.msra.mxu0 0.0
    %713 = vmatprep.subr.mxu0 0.0
    %714 = vmatpush1.msra.mxu0 0.0
    %715 = vmatprep.subr.mxu0 0.0
    %716 = vmatpush1.msra.mxu0 0.0
    %717 = vmatprep.subr.mxu0 0.0
    %718 = vmatpush1.msra.mxu0 0.0
    %719 = vmatprep.subr.mxu0 0.0
    %720 = vmatpush1.msra.mxu0 0.0
    %721 = vmatprep.subr.mxu0 0.0
    %722 = vmatpush1.msra.mxu0 0.0
    %723 = vmatprep.subr.mxu0 0.0
    %724 = vmatpush1.msra.mxu0 0.0
    %725 = vmatprep.subr.mxu0 0.0
    %726 = vmatpush1.msra.mxu0 0.0
    %727 = vmatprep.subr.mxu0 0.0
    %728 = vmatpush1.msra.mxu0 0.0
    %729 = vmatprep.subr.mxu0 0.0
    %730 = vmatpush1.msra.mxu0 0.0
    %731 = vmatprep.subr.mxu0 0.0
    %732 = vmatpush1.msra.mxu0 0.0
    %733 = vmatprep.subr.mxu0 0.0
    %734 = vmatpush1.msra.mxu0 0.0
    %735 = vmatprep.subr.mxu0 0.0
    %736 = vmatpush1.msra.mxu0 0.0
    %737 = vmatprep.subr.mxu0 0.0
    %738 = vmatpush1.msra.mxu0 0.0
    %739 = vmatprep.subr.mxu0 0.0
    %740 = vmatpush1.msra.mxu0 0.0
    %741 = vmatprep.subr.mxu0 0.0
    %742 = vmatpush1.msra.mxu0 0.0
    %743 = vmatprep.subr.mxu0 0.0
    %744 = vmatpush1.msra.mxu0 0.0
    %745 = vmatprep.subr.mxu0 0.0
    %746 = vmatpush1.msra.mxu0 0.0
    %747 = vmatprep.subr.mxu0 0.0
    %748 = vmatpush1.msra.mxu0 0.0
    %749 = vmatprep.subr.mxu0 0.0
    %750 = vmatpush1.msra.mxu0 0.0
    %751 = vmatprep.subr.mxu0 0.0
    %752 = vmatpush1.msra.mxu0 0.0
    %753 = vmatprep.subr.mxu0 0.0
    %754 = vmatpush1.msra.mxu0 0.0
    %755 = vmatprep.subr.mxu0 0.0
    %756 = vmatpush1.msra.mxu0 0.0
    %757 = vmatprep.subr.mxu0 0.0
    %758 = vmatpush1.msra.mxu0 0.0
    %759 = vmatprep.subr.mxu0 0.0
    %760 = vmatpush1.msra.mxu0 0.0
    %761 = vmatprep.subr.mxu0 0.0
    %762 = vmatpush1.msra.mxu0 0.0
    %763 = vmatprep.subr.mxu0 0.0
    %764 = vmatpush1.msra.mxu0 0.0
    %765 = vmatprep.subr.mxu0 0.0
    %766 = vmatpush1.msra.mxu0 0.0
    %767 = vmatprep.mubr.f32.mxu0 0.0
    %768 = vmatmul.mubr.f32.gmra.mrb[0].mxu0 %v561
    %v769 = vpop.f32.mrb[0].mxu0
    %v770 = vadd.f32 %v558, %v769
    %v771 = vpop.f32.mrb[0].mxu0
    %772 = vdwg.mxu0
    %v773 = vld [vmem:[#allocation2] sm:$0xff]
    %v774 = vadd.f32 %v773, %v630
    %v775 = vxor.u32 %v774, 2147483648
    %v776 = vmul.f32 %v775, 1.442695
    %v777 = vpow.pop %v776
    %v778 = vadd.f32 %v777, 1.0
    %v779 = vrcp.pop %v778
    %v780 = vmul.f32 1.0, %v779
    %v781 = vld [vmem:[#allocation3] sm:$0xff]
    %v782 = vadd.f32 %v781, %v700
    %v783 = vxor.u32 %v782, 2147483648
    %v784 = vmul.f32 %v783, 1.442695
    %v785 = vpow.pop %v784
    %v786 = vadd.f32 %v785, 1.0
    %v787 = vrcp.pop %v786
    %v788 = vmul.f32 1.0, %v787
    %v789 = vld [vmem:[#allocation4] sm:$0xff]
    %v790 = vmul.f32 %v780, %v770
    %v791 = vadd.f32 %v789, %v790
    %v792 = vtanh.pop %v791
    %v793 = vsub.f32 1.0, %v788
    %v794 = vmul.f32 %v793, %v792
    %v795 = vmul.f32 %v788, 0.0
    %v796 = vadd.f32 %v794, %v795
    %vm797 = vcmp.gt.s32.totalorder %v135, 0
    %v798 = vsel %vm797, 1, 0
    %799 = vset.pattern.permute.xlu0 0
    %800 = vperm.xlu0 %799, %v798
    %v801 = vpop.permute.xlu0 %800
    %vm802 = vcmp.eq.s32.totalorder %v801, 1
    %v803 = vsel %vm802, %v796, 0.0
    %804 = vst.msk [vmem:[#allocation5] sm:$0xff] %vm155, %v803
    %v806 = vsel %vm155, %v803, 0
    %808 = vmatprep.subr.mxu0 0.0
    %809 = vmatpush1.msra.mxu0 %v541
    %810 = vmatprep.subr.mxu0 0.0
    %811 = vmatpush1.msra.mxu0 %v542
    %812 = vmatprep.subr.mxu0 0.0
    %813 = vmatpush1.msra.mxu0 %v543
    %814 = vmatprep.subr.mxu0 0.0
    %815 = vmatpush1.msra.mxu0 %v544
    %816 = vmatprep.subr.mxu0 0.0
    %817 = vmatpush1.msra.mxu0 0.0
    %818 = vmatprep.subr.mxu0 0.0
    %819 = vmatpush1.msra.mxu0 0.0
    %820 = vmatprep.subr.mxu0 0.0
    %821 = vmatpush1.msra.mxu0 0.0
    %822 = vmatprep.subr.mxu0 0.0
    %823 = vmatpush1.msra.mxu0 0.0
    %824 = vmatprep.subr.mxu0 0.0
    %825 = vmatpush1.msra.mxu0 0.0
    %826 = vmatprep.subr.mxu0 0.0
    %827 = vmatpush1.msra.mxu0 0.0
    %828 = vmatprep.subr.mxu0 0.0
    %829 = vmatpush1.msra.mxu0 0.0
    %830 = vmatprep.subr.mxu0 0.0
    %831 = vmatpush1.msra.mxu0 0.0
    %832 = vmatprep.subr.mxu0 0.0
    %833 = vmatpush1.msra.mxu0 0.0
    %834 = vmatprep.subr.mxu0 0.0
    %835 = vmatpush1.msra.mxu0 0.0
    %836 = vmatprep.subr.mxu0 0.0
    %837 = vmatpush1.msra.mxu0 0.0
    %838 = vmatprep.subr.mxu0 0.0
    %839 = vmatpush1.msra.mxu0 0.0
    %840 = vmatprep.subr.mxu0 0.0
    %841 = vmatpush1.msra.mxu0 0.0
    %842 = vmatprep.subr.mxu0 0.0
    %843 = vmatpush1.msra.mxu0 0.0
    %844 = vmatprep.subr.mxu0 0.0
    %845 = vmatpush1.msra.mxu0 0.0
    %846 = vmatprep.subr.mxu0 0.0
    %847 = vmatpush1.msra.mxu0 0.0
    %848 = vmatprep.subr.mxu0 0.0
    %849 = vmatpush1.msra.mxu0 0.0
    %850 = vmatprep.subr.mxu0 0.0
    %851 = vmatpush1.msra.mxu0 0.0
    %852 = vmatprep.subr.mxu0 0.0
    %853 = vmatpush1.msra.mxu0 0.0
    %854 = vmatprep.subr.mxu0 0.0
    %855 = vmatpush1.msra.mxu0 0.0
    %856 = vmatprep.subr.mxu0 0.0
    %857 = vmatpush1.msra.mxu0 0.0
    %858 = vmatprep.subr.mxu0 0.0
    %859 = vmatpush1.msra.mxu0 0.0
    %860 = vmatprep.subr.mxu0 0.0
    %861 = vmatpush1.msra.mxu0 0.0
    %862 = vmatprep.subr.mxu0 0.0
    %863 = vmatpush1.msra.mxu0 0.0
    %864 = vmatprep.subr.mxu0 0.0
    %865 = vmatpush1.msra.mxu0 0.0
    %866 = vmatprep.subr.mxu0 0.0
    %867 = vmatpush1.msra.mxu0 0.0
    %868 = vmatprep.subr.mxu0 0.0
    %869 = vmatpush1.msra.mxu0 0.0
    %870 = vmatprep.subr.mxu0 0.0
    %871 = vmatpush1.msra.mxu0 0.0
    %872 = vmatprep.mubr.f32.mxu0 0.0
    %873 = vmatmul.mubr.f32.gmra.mrb[0].mxu0 %v806
    %v874 = vpop.f32.mrb[0].mxu0
    %v875 = vadd.f32 0.0, %v874
    %v876 = vpop.f32.mrb[0].mxu0
    %877 = vdwg.mxu0
    %878 = vmatprep.subr.mxu0 0.0
    %879 = vmatpush1.msra.mxu0 %v545
    %880 = vmatprep.subr.mxu0 0.0
    %881 = vmatpush1.msra.mxu0 %v546
    %882 = vmatprep.subr.mxu0 0.0
    %883 = vmatpush1.msra.mxu0 %v547
    %884 = vmatprep.subr.mxu0 0.0
    %885 = vmatpush1.msra.mxu0 %v548
    %886 = vmatprep.subr.mxu0 0.0
    %887 = vmatpush1.msra.mxu0 0.0
    %888 = vmatprep.subr.mxu0 0.0
    %889 = vmatpush1.msra.mxu0 0.0
    %890 = vmatprep.subr.mxu0 0.0
    %891 = vmatpush1.msra.mxu0 0.0
    %892 = vmatprep.subr.mxu0 0.0
    %893 = vmatpush1.msra.mxu0 0.0
    %894 = vmatprep.subr.mxu0 0.0
    %895 = vmatpush1.msra.mxu0 0.0
    %896 = vmatprep.subr.mxu0 0.0
    %897 = vmatpush1.msra.mxu0 0.0
    %898 = vmatprep.subr.mxu0 0.0
    %899 = vmatpush1.msra.mxu0 0.0
    %900 = vmatprep.subr.mxu0 0.0
    %901 = vmatpush1.msra.mxu0 0.0
    %902 = vmatprep.subr.mxu0 0.0
    %903 = vmatpush1.msra.mxu0 0.0
    %904 = vmatprep.subr.mxu0 0.0
    %905 = vmatpush1.msra.mxu0 0.0
    %906 = vmatprep.subr.mxu0 0.0
    %907 = vmatpush1.msra.mxu0 0.0
    %908 = vmatprep.subr.mxu0 0.0
    %909 = vmatpush1.msra.mxu0 0.0
    %910 = vmatprep.subr.mxu0 0.0
    %911 = vmatpush1.msra.mxu0 0.0
    %912 = vmatprep.subr.mxu0 0.0
    %913 = vmatpush1.msra.mxu0 0.0
    %914 = vmatprep.subr.mxu0 0.0
    %915 = vmatpush1.msra.mxu0 0.0
    %916 = vmatprep.subr.mxu0 0.0
    %917 = vmatpush1.msra.mxu0 0.0
    %918 = vmatprep.subr.mxu0 0.0
    %919 = vmatpush1.msra.mxu0 0.0
    %920 = vmatprep.subr.mxu0 0.0
    %921 = vmatpush1.msra.mxu0 0.0
    %922 = vmatprep.subr.mxu0 0.0
    %923 = vmatpush1.msra.mxu0 0.0
    %924 = vmatprep.subr.mxu0 0.0
    %925 = vmatpush1.msra.mxu0 0.0
    %926 = vmatprep.subr.mxu0 0.0
    %927 = vmatpush1.msra.mxu0 0.0
    %928 = vmatprep.subr.mxu0 0.0
    %929 = vmatpush1.msra.mxu0 0.0
    %930 = vmatprep.subr.mxu0 0.0
    %931 = vmatpush1.msra.mxu0 0.0
    %932 = vmatprep.subr.mxu0 0.0
    %933 = vmatpush1.msra.mxu0 0.0
    %934 = vmatprep.subr.mxu0 0.0
    %935 = vmatpush1.msra.mxu0 0.0
    %936 = vmatprep.subr.mxu0 0.0
    %937 = vmatpush1.msra.mxu0 0.0
    %938 = vmatprep.subr.mxu0 0.0
    %939 = vmatpush1.msra.mxu0 0.0
    %940 = vmatprep.subr.mxu0 0.0
    %941 = vmatpush1.msra.mxu0 0.0
    %942 = vmatprep.mubr.f32.mxu0 0.0
    %943 = vmatmul.mubr.f32.gmra.mrb[0].mxu0 %v806
    %v944 = vpop.f32.mrb[0].mxu0
    %v945 = vadd.f32 0.0, %v944
    %v946 = vpop.f32.mrb[0].mxu0
    %947 = vdwg.mxu0
    %948 = vmatprep.subr.mxu0 0.0
    %949 = vmatpush1.msra.mxu0 %v549
    %950 = vmatprep.subr.mxu0 0.0
    %951 = vmatpush1.msra.mxu0 %v550
    %952 = vmatprep.subr.mxu0 0.0
    %953 = vmatpush1.msra.mxu0 %v551
    %954 = vmatprep.subr.mxu0 0.0
    %955 = vmatpush1.msra.mxu0 %v552
    %956 = vmatprep.subr.mxu0 0.0
    %957 = vmatpush1.msra.mxu0 0.0
    %958 = vmatprep.subr.mxu0 0.0
    %959 = vmatpush1.msra.mxu0 0.0
    %960 = vmatprep.subr.mxu0 0.0
    %961 = vmatpush1.msra.mxu0 0.0
    %962 = vmatprep.subr.mxu0 0.0
    %963 = vmatpush1.msra.mxu0 0.0
    %964 = vmatprep.subr.mxu0 0.0
    %965 = vmatpush1.msra.mxu0 0.0
    %966 = vmatprep.subr.mxu0 0.0
    %967 = vmatpush1.msra.mxu0 0.0
    %968 = vmatprep.subr.mxu0 0.0
    %969 = vmatpush1.msra.mxu0 0.0
    %970 = vmatprep.subr.mxu0 0.0
    %971 = vmatpush1.msra.mxu0 0.0
    %972 = vmatprep.subr.mxu0 0.0
    %973 = vmatpush1.msra.mxu0 0.0
    %974 = vmatprep.subr.mxu0 0.0
    %975 = vmatpush1.msra.mxu0 0.0
    %976 = vmatprep.subr.mxu0 0.0
    %977 = vmatpush1.msra.mxu0 0.0
    %978 = vmatprep.subr.mxu0 0.0
    %979 = vmatpush1.msra.mxu0 0.0
    %980 = vmatprep.subr.mxu0 0.0
    %981 = vmatpush1.msra.mxu0 0.0
    %982 = vmatprep.subr.mxu0 0.0
    %983 = vmatpush1.msra.mxu0 0.0
    %984 = vmatprep.subr.mxu0 0.0
    %985 = vmatpush1.msra.mxu0 0.0
    %986 = vmatprep.subr.mxu0 0.0
    %987 = vmatpush1.msra.mxu0 0.0
    %988 = vmatprep.subr.mxu0 0.0
    %989 = vmatpush1.msra.mxu0 0.0
    %990 = vmatprep.subr.mxu0 0.0
    %991 = vmatpush1.msra.mxu0 0.0
    %992 = vmatprep.subr.mxu0 0.0
    %993 = vmatpush1.msra.mxu0 0.0
    %994 = vmatprep.subr.mxu0 0.0
    %995 = vmatpush1.msra.mxu0 0.0
    %996 = vmatprep.subr.mxu0 0.0
    %997 = vmatpush1.msra.mxu0 0.0
    %998 = vmatprep.subr.mxu0 0.0
    %999 = vmatpush1.msra.mxu0 0.0
    %1000 = vmatprep.subr.mxu0 0.0
    %1001 = vmatpush1.msra.mxu0 0.0
    %1002 = vmatprep.subr.mxu0 0.0
    %1003 = vmatpush1.msra.mxu0 0.0
    %1004 = vmatprep.subr.mxu0 0.0
    %1005 = vmatpush1.msra.mxu0 0.0
    %1006 = vmatprep.subr.mxu0 0.0
    %1007 = vmatpush1.msra.mxu0 0.0
    %1008 = vmatprep.subr.mxu0 0.0
    %1009 = vmatpush1.msra.mxu0 0.0
    %1010 = vmatprep.subr.mxu0 0.0
    %1011 = vmatpush1.msra.mxu0 0.0
    %1012 = vmatprep.mubr.f32.mxu0 0.0
    %1013 = vmatmul.mubr.f32.gmra.mrb[0].mxu0 %v806
    %v1014 = vpop.f32.mrb[0].mxu0
    %v1015 = vadd.f32 %v558, %v1014
    %v1016 = vpop.f32.mrb[0].mxu0
    %1017 = vdwg.mxu0
    %s1018 = scalar_lea.vmem [#allocation2], 8
    %v1019 = vld [vmem:[%s1018] sm:$0xff]
    %v1020 = vadd.f32 %v1019, %v875
    %v1021 = vxor.u32 %v1020, 2147483648
    %v1022 = vmul.f32 %v1021, 1.442695
    %v1023 = vpow.pop %v1022
    %v1024 = vadd.f32 %v1023, 1.0
    %v1025 = vrcp.pop %v1024
    %v1026 = vmul.f32 1.0, %v1025
    %s1027 = scalar_lea.vmem [#allocation3], 8
    %v1028 = vld [vmem:[%s1027] sm:$0xff]
    %v1029 = vadd.f32 %v1028, %v945
    %v1030 = vxor.u32 %v1029, 2147483648
    %v1031 = vmul.f32 %v1030, 1.442695
    %v1032 = vpow.pop %v1031
    %v1033 = vadd.f32 %v1032, 1.0
    %v1034 = vrcp.pop %v1033
    %v1035 = vmul.f32 1.0, %v1034
    %s1036 = scalar_lea.vmem [#allocation4], 8
    %v1037 = vld [vmem:[%s1036] sm:$0xff]
    %v1038 = vmul.f32 %v1026, %v1015
    %v1039 = vadd.f32 %v1037, %v1038
    %v1040 = vtanh.pop %v1039
    %v1041 = vsub.f32 1.0, %v1035
    %v1042 = vmul.f32 %v1041, %v1040
    %v1043 = vmul.f32 %v1035, %v803
    %v1044 = vadd.f32 %v1042, %v1043
    %vm1045 = vcmp.gt.s32.totalorder %v135, 1
    %v1046 = vsel %vm1045, 1, 0
    %1047 = vset.pattern.permute.xlu0 0
    %1048 = vperm.xlu0 %1047, %v1046
    %v1049 = vpop.permute.xlu0 %1048
    %vm1050 = vcmp.eq.s32.totalorder %v1049, 1
    %v1051 = vsel %vm1050, %v1044, 0.0
    %s1052 = scalar_lea.vmem [#allocation5], 8
    %1053 = vst.msk [vmem:[%s1052] sm:$0xff] %vm155, %v1051
    %v1054 = vsel %vm1050, %v1044, %v803
    %v1056 = vsel %vm155, %v1054, 0
    %1058 = vmatprep.subr.mxu0 0.0
    %1059 = vmatpush1.msra.mxu0 %v541
    %1060 = vmatprep.subr.mxu0 0.0
    %1061 = vmatpush1.msra.mxu0 %v542
    %1062 = vmatprep.subr.mxu0 0.0
    %1063 = vmatpush1.msra.mxu0 %v543
    %1064 = vmatprep.subr.mxu0 0.0
    %1065 = vmatpush1.msra.mxu0 %v544
    %1066 = vmatprep.subr.mxu0 0.0
    %1067 = vmatpush1.msra.mxu0 0.0
    %1068 = vmatprep.subr.mxu0 0.0
    %1069 = vmatpush1.msra.mxu0 0.0
    %1070 = vmatprep.subr.mxu0 0.0
    %1071 = vmatpush1.msra.mxu0 0.0
    %1072 = vmatprep.subr.mxu0 0.0
    %1073 = vmatpush1.msra.mxu0 0.0
    %1074 = vmatprep.subr.mxu0 0.0
    %1075 = vmatpush1.msra.mxu0 0.0
    %1076 = vmatprep.subr.mxu0 0.0
    %1077 = vmatpush1.msra.mxu0 0.0
    %1078 = vmatprep.subr.mxu0 0.0
    %1079 = vmatpush1.msra.mxu0 0.0
    %1080 = vmatprep.subr.mxu0 0.0
    %1081 = vmatpush1.msra.mxu0 0.0
    %1082 = vmatprep.subr.mxu0 0.0
    %1083 = vmatpush1.msra.mxu0 0.0
    %1084 = vmatprep.subr.mxu0 0.0
    %1085 = vmatpush1.msra.mxu0 0.0
    %1086 = vmatprep.subr.mxu0 0.0
    %1087 = vmatpush1.msra.mxu0 0.0
    %1088 = vmatprep.subr.mxu0 0.0
    %1089 = vmatpush1.msra.mxu0 0.0
    %1090 = vmatprep.subr.mxu0 0.0
    %1091 = vmatpush1.msra.mxu0 0.0
    %1092 = vmatprep.subr.mxu0 0.0
    %1093 = vmatpush1.msra.mxu0 0.0
    %1094 = vmatprep.subr.mxu0 0.0
    %1095 = vmatpush1.msra.mxu0 0.0
    %1096 = vmatprep.subr.mxu0 0.0
    %1097 = vmatpush1.msra.mxu0 0.0
    %1098 = vmatprep.subr.mxu0 0.0
    %1099 = vmatpush1.msra.mxu0 0.0
    %1100 = vmatprep.subr.mxu0 0.0
    %1101 = vmatpush1.msra.mxu0 0.0
    %1102 = vmatprep.subr.mxu0 0.0
    %1103 = vmatpush1.msra.mxu0 0.0
    %1104 = vmatprep.subr.mxu0 0.0
    %1105 = vmatpush1.msra.mxu0 0.0
    %1106 = vmatprep.subr.mxu0 0.0
    %1107 = vmatpush1.msra.mxu0 0.0
    %1108 = vmatprep.subr.mxu0 0.0
    %1109 = vmatpush1.msra.mxu0 0.0
    %1110 = vmatprep.subr.mxu0 0.0
    %1111 = vmatpush1.msra.mxu0 0.0
    %1112 = vmatprep.subr.mxu0 0.0
    %1113 = vmatpush1.msra.mxu0 0.0
    %1114 = vmatprep.subr.mxu0 0.0
    %1115 = vmatpush1.msra.mxu0 0.0
    %1116 = vmatprep.subr.mxu0 0.0
    %1117 = vmatpush1.msra.mxu0 0.0
    %1118 = vmatprep.subr.mxu0 0.0
    %1119 = vmatpush1.msra.mxu0 0.0
    %1120 = vmatprep.subr.mxu0 0.0
    %1121 = vmatpush1.msra.mxu0 0.0
    %1122 = vmatprep.mubr.f32.mxu0 0.0
    %1123 = vmatmul.mubr.f32.gmra.mrb[0].mxu0 %v1056
    %v1124 = vpop.f32.mrb[0].mxu0
    %v1125 = vadd.f32 0.0, %v1124
    %v1126 = vpop.f32.mrb[0].mxu0
    %1127 = vdwg.mxu0
    %1128 = vmatprep.subr.mxu0 0.0
    %1129 = vmatpush1.msra.mxu0 %v545
    %1130 = vmatprep.subr.mxu0 0.0
    %1131 = vmatpush1.msra.mxu0 %v546
    %1132 = vmatprep.subr.mxu0 0.0
    %1133 = vmatpush1.msra.mxu0 %v547
    %1134 = vmatprep.subr.mxu0 0.0
    %1135 = vmatpush1.msra.mxu0 %v548
    %1136 = vmatprep.subr.mxu0 0.0
    %1137 = vmatpush1.msra.mxu0 0.0
    %1138 = vmatprep.subr.mxu0 0.0
    %1139 = vmatpush1.msra.mxu0 0.0
    %1140 = vmatprep.subr.mxu0 0.0
    %1141 = vmatpush1.msra.mxu0 0.0
    %1142 = vmatprep.subr.mxu0 0.0
    %1143 = vmatpush1.msra.mxu0 0.0
    %1144 = vmatprep.subr.mxu0 0.0
    %1145 = vmatpush1.msra.mxu0 0.0
    %1146 = vmatprep.subr.mxu0 0.0
    %1147 = vmatpush1.msra.mxu0 0.0
    %1148 = vmatprep.subr.mxu0 0.0
    %1149 = vmatpush1.msra.mxu0 0.0
    %1150 = vmatprep.subr.mxu0 0.0
    %1151 = vmatpush1.msra.mxu0 0.0
    %1152 = vmatprep.subr.mxu0 0.0
    %1153 = vmatpush1.msra.mxu0 0.0
    %1154 = vmatprep.subr.mxu0 0.0
    %1155 = vmatpush1.msra.mxu0 0.0
    %1156 = vmatprep.subr.mxu0 0.0
    %1157 = vmatpush1.msra.mxu0 0.0
    %1158 = vmatprep.subr.mxu0 0.0
    %1159 = vmatpush1.msra.mxu0 0.0
    %1160 = vmatprep.subr.mxu0 0.0
    %1161 = vmatpush1.msra.mxu0 0.0
    %1162 = vmatprep.subr.mxu0 0.0
    %1163 = vmatpush1.msra.mxu0 0.0
    %1164 = vmatprep.subr.mxu0 0.0
    %1165 = vmatpush1.msra.mxu0 0.0
    %1166 = vmatprep.subr.mxu0 0.0
    %1167 = vmatpush1.msra.mxu0 0.0
    %1168 = vmatprep.subr.mxu0 0.0
    %1169 = vmatpush1.msra.mxu0 0.0
    %1170 = vmatprep.subr.mxu0 0.0
    %1171 = vmatpush1.msra.mxu0 0.0
    %1172 = vmatprep.subr.mxu0 0.0
    %1173 = vmatpush1.msra.mxu0 0.0
    %1174 = vmatprep.subr.mxu0 0.0
    %1175 = vmatpush1.msra.mxu0 0.0
    %1176 = vmatprep.subr.mxu0 0.0
    %1177 = vmatpush1.msra.mxu0 0.0
    %1178 = vmatprep.subr.mxu0 0.0
    %1179 = vmatpush1.msra.mxu0 0.0
    %1180 = vmatprep.subr.mxu0 0.0
    %1181 = vmatpush1.msra.mxu0 0.0
    %1182 = vmatprep.subr.mxu0 0.0
    %1183 = vmatpush1.msra.mxu0 0.0
    %1184 = vmatprep.subr.mxu0 0.0
    %1185 = vmatpush1.msra.mxu0 0.0
    %1186 = vmatprep.subr.mxu0 0.0
    %1187 = vmatpush1.msra.mxu0 0.0
    %1188 = vmatprep.subr.mxu0 0.0
    %1189 = vmatpush1.msra.mxu0 0.0
    %1190 = vmatprep.subr.mxu0 0.0
    %1191 = vmatpush1.msra.mxu0 0.0
    %1192 = vmatprep.mubr.f32.mxu0 0.0
    %1193 = vmatmul.mubr.f32.gmra.mrb[0].mxu0 %v1056
    %v1194 = vpop.f32.mrb[0].mxu0
    %v1195 = vadd.f32 0.0, %v1194
    %v1196 = vpop.f32.mrb[0].mxu0
    %1197 = vdwg.mxu0
    %1198 = vmatprep.subr.mxu0 0.0
    %1199 = vmatpush1.msra.mxu0 %v549
    %1200 = vmatprep.subr.mxu0 0.0
    %1201 = vmatpush1.msra.mxu0 %v550
    %1202 = vmatprep.subr.mxu0 0.0
    %1203 = vmatpush1.msra.mxu0 %v551
    %1204 = vmatprep.subr.mxu0 0.0
    %1205 = vmatpush1.msra.mxu0 %v552
    %1206 = vmatprep.subr.mxu0 0.0
    %1207 = vmatpush1.msra.mxu0 0.0
    %1208 = vmatprep.subr.mxu0 0.0
    %1209 = vmatpush1.msra.mxu0 0.0
    %1210 = vmatprep.subr.mxu0 0.0
    %1211 = vmatpush1.msra.mxu0 0.0
    %1212 = vmatprep.subr.mxu0 0.0
    %1213 = vmatpush1.msra.mxu0 0.0
    %1214 = vmatprep.subr.mxu0 0.0
    %1215 = vmatpush1.msra.mxu0 0.0
    %1216 = vmatprep.subr.mxu0 0.0
    %1217 = vmatpush1.msra.mxu0 0.0
    %1218 = vmatprep.subr.mxu0 0.0
    %1219 = vmatpush1.msra.mxu0 0.0
    %1220 = vmatprep.subr.mxu0 0.0
    %1221 = vmatpush1.msra.mxu0 0.0
    %1222 = vmatprep.subr.mxu0 0.0
    %1223 = vmatpush1.msra.mxu0 0.0
    %1224 = vmatprep.subr.mxu0 0.0
    %1225 = vmatpush1.msra.mxu0 0.0
    %1226 = vmatprep.subr.mxu0 0.0
    %1227 = vmatpush1.msra.mxu0 0.0
    %1228 = vmatprep.subr.mxu0 0.0
    %1229 = vmatpush1.msra.mxu0 0.0
    %1230 = vmatprep.subr.mxu0 0.0
    %1231 = vmatpush1.msra.mxu0 0.0
    %1232 = vmatprep.subr.mxu0 0.0
    %1233 = vmatpush1.msra.mxu0 0.0
    %1234 = vmatprep.subr.mxu0 0.0
    %1235 = vmatpush1.msra.mxu0 0.0
    %1236 = vmatprep.subr.mxu0 0.0
    %1237 = vmatpush1.msra.mxu0 0.0
    %1238 = vmatprep.subr.mxu0 0.0
    %1239 = vmatpush1.msra.mxu0 0.0
    %1240 = vmatprep.subr.mxu0 0.0
    %1241 = vmatpush1.msra.mxu0 0.0
    %1242 = vmatprep.subr.mxu0 0.0
    %1243 = vmatpush1.msra.mxu0 0.0
    %1244 = vmatprep.subr.mxu0 0.0
    %1245 = vmatpush1.msra.mxu0 0.0
    %1246 = vmatprep.subr.mxu0 0.0
    %1247 = vmatpush1.msra.mxu0 0.0
    %1248 = vmatprep.subr.mxu0 0.0
    %1249 = vmatpush1.msra.mxu0 0.0
    %1250 = vmatprep.subr.mxu0 0.0
    %1251 = vmatpush1.msra.mxu0 0.0
    %1252 = vmatprep.subr.mxu0 0.0
    %1253 = vmatpush1.msra.mxu0 0.0
    %1254 = vmatprep.subr.mxu0 0.0
    %1255 = vmatpush1.msra.mxu0 0.0
    %1256 = vmatprep.subr.mxu0 0.0
    %1257 = vmatpush1.msra.mxu0 0.0
    %1258 = vmatprep.subr.mxu0 0.0
    %1259 = vmatpush1.msra.mxu0 0.0
    %1260 = vmatprep.subr.mxu0 0.0
    %1261 = vmatpush1.msra.mxu0 0.0
    %1262 = vmatprep.mubr.f32.mxu0 0.0
    %1263 = vmatmul.mubr.f32.gmra.mrb[0].mxu0 %v1056
    %v1264 = vpop.f32.mrb[0].mxu0
    %v1265 = vadd.f32 %v558, %v1264
    %v1266 = vpop.f32.mrb[0].mxu0
    %1267 = vdwg.mxu0
    %s1268 = scalar_lea.vmem [#allocation2], 16
    %v1269 = vld [vmem:[%s1268] sm:$0xff]
    %v1270 = vadd.f32 %v1269, %v1125
    %v1271 = vxor.u32 %v1270, 2147483648
    %v1272 = vmul.f32 %v1271, 1.442695
    %v1273 = vpow.pop %v1272
    %v1274 = vadd.f32 %v1273, 1.0
    %v1275 = vrcp.pop %v1274
    %v1276 = vmul.f32 1.0, %v1275
    %s1277 = scalar_lea.vmem [#allocation3], 16
    %v1278 = vld [vmem:[%s1277] sm:$0xff]
    %v1279 = vadd.f32 %v1278, %v1195
    %v1280 = vxor.u32 %v1279, 2147483648
    %v1281 = vmul.f32 %v1280, 1.442695
    %v1282 = vpow.pop %v1281
    %v1283 = vadd.f32 %v1282, 1.0
    %v1284 = vrcp.pop %v1283
    %v1285 = vmul.f32 1.0, %v1284
    %s1286 = scalar_lea.vmem [#allocation4], 16
    %v1287 = vld [vmem:[%s1286] sm:$0xff]
    %v1288 = vmul.f32 %v1276, %v1265
    %v1289 = vadd.f32 %v1287, %v1288
    %v1290 = vtanh.pop %v1289
    %v1291 = vsub.f32 1.0, %v1285
    %v1292 = vmul.f32 %v1291, %v1290
    %v1293 = vmul.f32 %v1285, %v1054
    %v1294 = vadd.f32 %v1292, %v1293
    %vm1295 = vcmp.gt.s32.totalorder %v135, 2
    %v1296 = vsel %vm1295, 1, 0
    %1297 = vset.pattern.permute.xlu0 0
    %1298 = vperm.xlu0 %1297, %v1296
    %v1299 = vpop.permute.xlu0 %1298
    %vm1300 = vcmp.eq.s32.totalorder %v1299, 1
    %v1301 = vsel %vm1300, %v1294, 0.0
    %s1302 = scalar_lea.vmem [#allocation5], 16
    %1303 = vst.msk [vmem:[%s1302] sm:$0xff] %vm155, %v1301
    %v1304 = vsel %vm1300, %v1294, %v1054
    %v1306 = vsel %vm155, %v1304, 0
    %1308 = vmatprep.subr.mxu0 0.0
    %1309 = vmatpush1.msra.mxu0 %v541
    %1310 = vmatprep.subr.mxu0 0.0
    %1311 = vmatpush1.msra.mxu0 %v542
    %1312 = vmatprep.subr.mxu0 0.0
    %1313 = vmatpush1.msra.mxu0 %v543
    %1314 = vmatprep.subr.mxu0 0.0
    %1315 = vmatpush1.msra.mxu0 %v544
    %1316 = vmatprep.subr.mxu0 0.0
    %1317 = vmatpush1.msra.mxu0 0.0
    %1318 = vmatprep.subr.mxu0 0.0
    %1319 = vmatpush1.msra.mxu0 0.0
    %1320 = vmatprep.subr.mxu0 0.0
    %1321 = vmatpush1.msra.mxu0 0.0
    %1322 = vmatprep.subr.mxu0 0.0
    %1323 = vmatpush1.msra.mxu0 0.0
    %1324 = vmatprep.subr.mxu0 0.0
    %1325 = vmatpush1.msra.mxu0 0.0
    %1326 = vmatprep.subr.mxu0 0.0
    %1327 = vmatpush1.msra.mxu0 0.0
    %1328 = vmatprep.subr.mxu0 0.0
    %1329 = vmatpush1.msra.mxu0 0.0
    %1330 = vmatprep.subr.mxu0 0.0
    %1331 = vmatpush1.msra.mxu0 0.0
    %1332 = vmatprep.subr.mxu0 0.0
    %1333 = vmatpush1.msra.mxu0 0.0
    %1334 = vmatprep.subr.mxu0 0.0
    %1335 = vmatpush1.msra.mxu0 0.0
    %1336 = vmatprep.subr.mxu0 0.0
    %1337 = vmatpush1.msra.mxu0 0.0
    %1338 = vmatprep.subr.mxu0 0.0
    %1339 = vmatpush1.msra.mxu0 0.0
    %1340 = vmatprep.subr.mxu0 0.0
    %1341 = vmatpush1.msra.mxu0 0.0
    %1342 = vmatprep.subr.mxu0 0.0
    %1343 = vmatpush1.msra.mxu0 0.0
    %1344 = vmatprep.subr.mxu0 0.0
    %1345 = vmatpush1.msra.mxu0 0.0
    %1346 = vmatprep.subr.mxu0 0.0
    %1347 = vmatpush1.msra.mxu0 0.0
    %1348 = vmatprep.subr.mxu0 0.0
    %1349 = vmatpush1.msra.mxu0 0.0
    %1350 = vmatprep.subr.mxu0 0.0
    %1351 = vmatpush1.msra.mxu0 0.0
    %1352 = vmatprep.subr.mxu0 0.0
    %1353 = vmatpush1.msra.mxu0 0.0
    %1354 = vmatprep.subr.mxu0 0.0
    %1355 = vmatpush1.msra.mxu0 0.0
    %1356 = vmatprep.subr.mxu0 0.0
    %1357 = vmatpush1.msra.mxu0 0.0
    %1358 = vmatprep.subr.mxu0 0.0
    %1359 = vmatpush1.msra.mxu0 0.0
    %1360 = vmatprep.subr.mxu0 0.0
    %1361 = vmatpush1.msra.mxu0 0.0
    %1362 = vmatprep.subr.mxu0 0.0
    %1363 = vmatpush1.msra.mxu0 0.0
    %1364 = vmatprep.subr.mxu0 0.0
    %1365 = vmatpush1.msra.mxu0 0.0
    %1366 = vmatprep.subr.mxu0 0.0
    %1367 = vmatpush1.msra.mxu0 0.0
    %1368 = vmatprep.subr.mxu0 0.0
    %1369 = vmatpush1.msra.mxu0 0.0
    %1370 = vmatprep.subr.mxu0 0.0
    %1371 = vmatpush1.msra.mxu0 0.0
    %1372 = vmatprep.mubr.f32.mxu0 0.0
    %1373 = vmatmul.mubr.f32.gmra.mrb[0].mxu0 %v1306
    %v1374 = vpop.f32.mrb[0].mxu0
    %v1375 = vadd.f32 0.0, %v1374
    %v1376 = vpop.f32.mrb[0].mxu0
    %1377 = vdwg.mxu0
    %1378 = vmatprep.subr.mxu0 0.0
    %1379 = vmatpush1.msra.mxu0 %v545
    %1380 = vmatprep.subr.mxu0 0.0
    %1381 = vmatpush1.msra.mxu0 %v546
    %1382 = vmatprep.subr.mxu0 0.0
    %1383 = vmatpush1.msra.mxu0 %v547
    %1384 = vmatprep.subr.mxu0 0.0
    %1385 = vmatpush1.msra.mxu0 %v548
    %1386 = vmatprep.subr.mxu0 0.0
    %1387 = vmatpush1.msra.mxu0 0.0
    %1388 = vmatprep.subr.mxu0 0.0
    %1389 = vmatpush1.msra.mxu0 0.0
    %1390 = vmatprep.subr.mxu0 0.0
    %1391 = vmatpush1.msra.mxu0 0.0
    %1392 = vmatprep.subr.mxu0 0.0
    %1393 = vmatpush1.msra.mxu0 0.0
    %1394 = vmatprep.subr.mxu0 0.0
    %1395 = vmatpush1.msra.mxu0 0.0
    %1396 = vmatprep.subr.mxu0 0.0
    %1397 = vmatpush1.msra.mxu0 0.0
    %1398 = vmatprep.subr.mxu0 0.0
    %1399 = vmatpush1.msra.mxu0 0.0
    %1400 = vmatprep.subr.mxu0 0.0
    %1401 = vmatpush1.msra.mxu0 0.0
    %1402 = vmatprep.subr.mxu0 0.0
    %1403 = vmatpush1.msra.mxu0 0.0
    %1404 = vmatprep.subr.mxu0 0.0
    %1405 = vmatpush1.msra.mxu0 0.0
    %1406 = vmatprep.subr.mxu0 0.0
    %1407 = vmatpush1.msra.mxu0 0.0
    %1408 = vmatprep.subr.mxu0 0.0
    %1409 = vmatpush1.msra.mxu0 0.0
    %1410 = vmatprep.subr.mxu0 0.0
    %1411 = vmatpush1.msra.mxu0 0.0
    %1412 = vmatprep.subr.mxu0 0.0
    %1413 = vmatpush1.msra.mxu0 0.0
    %1414 = vmatprep.subr.mxu0 0.0
    %1415 = vmatpush1.msra.mxu0 0.0
    %1416 = vmatprep.subr.mxu0 0.0
    %1417 = vmatpush1.msra.mxu0 0.0
    %1418 = vmatprep.subr.mxu0 0.0
    %1419 = vmatpush1.msra.mxu0 0.0
    %1420 = vmatprep.subr.mxu0 0.0
    %1421 = vmatpush1.msra.mxu0 0.0
    %1422 = vmatprep.subr.mxu0 0.0
    %1423 = vmatpush1.msra.mxu0 0.0
    %1424 = vmatprep.subr.mxu0 0.0
    %1425 = vmatpush1.msra.mxu0 0.0
    %1426 = vmatprep.subr.mxu0 0.0
    %1427 = vmatpush1.msra.mxu0 0.0
    %1428 = vmatprep.subr.mxu0 0.0
    %1429 = vmatpush1.msra.mxu0 0.0
    %1430 = vmatprep.subr.mxu0 0.0
    %1431 = vmatpush1.msra.mxu0 0.0
    %1432 = vmatprep.subr.mxu0 0.0
    %1433 = vmatpush1.msra.mxu0 0.0
    %1434 = vmatprep.subr.mxu0 0.0
    %1435 = vmatpush1.msra.mxu0 0.0
    %1436 = vmatprep.subr.mxu0 0.0
    %1437 = vmatpush1.msra.mxu0 0.0
    %1438 = vmatprep.subr.mxu0 0.0
    %1439 = vmatpush1.msra.mxu0 0.0
    %1440 = vmatprep.subr.mxu0 0.0
    %1441 = vmatpush1.msra.mxu0 0.0
    %1442 = vmatprep.mubr.f32.mxu0 0.0
    %1443 = vmatmul.mubr.f32.gmra.mrb[0].mxu0 %v1306
    %v1444 = vpop.f32.mrb[0].mxu0
    %v1445 = vadd.f32 0.0, %v1444
    %v1446 = vpop.f32.mrb[0].mxu0
    %1447 = vdwg.mxu0
    %1448 = vmatprep.subr.mxu0 0.0
    %1449 = vmatpush1.msra.mxu0 %v549
    %1450 = vmatprep.subr.mxu0 0.0
    %1451 = vmatpush1.msra.mxu0 %v550
    %1452 = vmatprep.subr.mxu0 0.0
    %1453 = vmatpush1.msra.mxu0 %v551
    %1454 = vmatprep.subr.mxu0 0.0
    %1455 = vmatpush1.msra.mxu0 %v552
    %1456 = vmatprep.subr.mxu0 0.0
    %1457 = vmatpush1.msra.mxu0 0.0
    %1458 = vmatprep.subr.mxu0 0.0
    %1459 = vmatpush1.msra.mxu0 0.0
    %1460 = vmatprep.subr.mxu0 0.0
    %1461 = vmatpush1.msra.mxu0 0.0
    %1462 = vmatprep.subr.mxu0 0.0
    %1463 = vmatpush1.msra.mxu0 0.0
    %1464 = vmatprep.subr.mxu0 0.0
    %1465 = vmatpush1.msra.mxu0 0.0
    %1466 = vmatprep.subr.mxu0 0.0
    %1467 = vmatpush1.msra.mxu0 0.0
    %1468 = vmatprep.subr.mxu0 0.0
    %1469 = vmatpush1.msra.mxu0 0.0
    %1470 = vmatprep.subr.mxu0 0.0
    %1471 = vmatpush1.msra.mxu0 0.0
    %1472 = vmatprep.subr.mxu0 0.0
    %1473 = vmatpush1.msra.mxu0 0.0
    %1474 = vmatprep.subr.mxu0 0.0
    %1475 = vmatpush1.msra.mxu0 0.0
    %1476 = vmatprep.subr.mxu0 0.0
    %1477 = vmatpush1.msra.mxu0 0.0
    %1478 = vmatprep.subr.mxu0 0.0
    %1479 = vmatpush1.msra.mxu0 0.0
    %1480 = vmatprep.subr.mxu0 0.0
    %1481 = vmatpush1.msra.mxu0 0.0
    %1482 = vmatprep.subr.mxu0 0.0
    %1483 = vmatpush1.msra.mxu0 0.0
    %1484 = vmatprep.subr.mxu0 0.0
    %1485 = vmatpush1.msra.mxu0 0.0
    %1486 = vmatprep.subr.mxu0 0.0
    %1487 = vmatpush1.msra.mxu0 0.0
    %1488 = vmatprep.subr.mxu0 0.0
    %1489 = vmatpush1.msra.mxu0 0.0
    %1490 = vmatprep.subr.mxu0 0.0
    %1491 = vmatpush1.msra.mxu0 0.0
    %1492 = vmatprep.subr.mxu0 0.0
    %1493 = vmatpush1.msra.mxu0 0.0
    %1494 = vmatprep.subr.mxu0 0.0
    %1495 = vmatpush1.msra.mxu0 0.0
    %1496 = vmatprep.subr.mxu0 0.0
    %1497 = vmatpush1.msra.mxu0 0.0
    %1498 = vmatprep.subr.mxu0 0.0
    %1499 = vmatpush1.msra.mxu0 0.0
    %1500 = vmatprep.subr.mxu0 0.0
    %1501 = vmatpush1.msra.mxu0 0.0
    %1502 = vmatprep.subr.mxu0 0.0
    %1503 = vmatpush1.msra.mxu0 0.0
    %1504 = vmatprep.subr.mxu0 0.0
    %1505 = vmatpush1.msra.mxu0 0.0
    %1506 = vmatprep.subr.mxu0 0.0
    %1507 = vmatpush1.msra.mxu0 0.0
    %1508 = vmatprep.subr.mxu0 0.0
    %1509 = vmatpush1.msra.mxu0 0.0
    %1510 = vmatprep.subr.mxu0 0.0
    %1511 = vmatpush1.msra.mxu0 0.0
    %1512 = vmatprep.mubr.f32.mxu0 0.0
    %1513 = vmatmul.mubr.f32.gmra.mrb[0].mxu0 %v1306
    %v1514 = vpop.f32.mrb[0].mxu0
    %v1515 = vadd.f32 %v558, %v1514
    %v1516 = vpop.f32.mrb[0].mxu0
    %1517 = vdwg.mxu0
    %s1518 = scalar_lea.vmem [#allocation2], 24
    %v1519 = vld [vmem:[%s1518] sm:$0xff]
    %v1520 = vadd.f32 %v1519, %v1375
    %v1521 = vxor.u32 %v1520, 2147483648
    %v1522 = vmul.f32 %v1521, 1.442695
    %v1523 = vpow.pop %v1522
    %v1524 = vadd.f32 %v1523, 1.0
    %v1525 = vrcp.pop %v1524
    %v1526 = vmul.f32 1.0, %v1525
    %s1527 = scalar_lea.vmem [#allocation3], 24
    %v1528 = vld [vmem:[%s1527] sm:$0xff]
    %v1529 = vadd.f32 %v1528, %v1445
    %v1530 = vxor.u32 %v1529, 2147483648
    %v1531 = vmul.f32 %v1530, 1.442695
    %v1532 = vpow.pop %v1531
    %v1533 = vadd.f32 %v1532, 1.0
    %v1534 = vrcp.pop %v1533
    %v1535 = vmul.f32 1.0, %v1534
    %s1536 = scalar_lea.vmem [#allocation4], 24
    %v1537 = vld [vmem:[%s1536] sm:$0xff]
    %v1538 = vmul.f32 %v1526, %v1515
    %v1539 = vadd.f32 %v1537, %v1538
    %v1540 = vtanh.pop %v1539
    %v1541 = vsub.f32 1.0, %v1535
    %v1542 = vmul.f32 %v1541, %v1540
    %v1543 = vmul.f32 %v1535, %v1304
    %v1544 = vadd.f32 %v1542, %v1543
    %vm1545 = vcmp.gt.s32.totalorder %v135, 3
    %v1546 = vsel %vm1545, 1, 0
    %1547 = vset.pattern.permute.xlu0 0
    %1548 = vperm.xlu0 %1547, %v1546
    %v1549 = vpop.permute.xlu0 %1548
    %vm1550 = vcmp.eq.s32.totalorder %v1549, 1
    %v1551 = vsel %vm1550, %v1544, 0.0
    %s1552 = scalar_lea.vmem [#allocation5], 24
    %1553 = vst.msk [vmem:[%s1552] sm:$0xff] %vm155, %v1551
    %v1554 = vsel %vm1550, %v1544, %v1304
    %v1556 = vsel %vm155, %v1554, 0
    %1558 = vmatprep.subr.mxu0 0.0
    %1559 = vmatpush1.msra.mxu0 %v541
    %1560 = vmatprep.subr.mxu0 0.0
    %1561 = vmatpush1.msra.mxu0 %v542
    %1562 = vmatprep.subr.mxu0 0.0
    %1563 = vmatpush1.msra.mxu0 %v543
    %1564 = vmatprep.subr.mxu0 0.0
    %1565 = vmatpush1.msra.mxu0 %v544
    %1566 = vmatprep.subr.mxu0 0.0
    %1567 = vmatpush1.msra.mxu0 0.0
    %1568 = vmatprep.subr.mxu0 0.0
    %1569 = vmatpush1.msra.mxu0 0.0
    %1570 = vmatprep.subr.mxu0 0.0
    %1571 = vmatpush1.msra.mxu0 0.0
    %1572 = vmatprep.subr.mxu0 0.0
    %1573 = vmatpush1.msra.mxu0 0.0
    %1574 = vmatprep.subr.mxu0 0.0
    %1575 = vmatpush1.msra.mxu0 0.0
    %1576 = vmatprep.subr.mxu0 0.0
    %1577 = vmatpush1.msra.mxu0 0.0
    %1578 = vmatprep.subr.mxu0 0.0
    %1579 = vmatpush1.msra.mxu0 0.0
    %1580 = vmatprep.subr.mxu0 0.0
    %1581 = vmatpush1.msra.mxu0 0.0
    %1582 = vmatprep.subr.mxu0 0.0
    %1583 = vmatpush1.msra.mxu0 0.0
    %1584 = vmatprep.subr.mxu0 0.0
    %1585 = vmatpush1.msra.mxu0 0.0
    %1586 = vmatprep.subr.mxu0 0.0
    %1587 = vmatpush1.msra.mxu0 0.0
    %1588 = vmatprep.subr.mxu0 0.0
    %1589 = vmatpush1.msra.mxu0 0.0
    %1590 = vmatprep.subr.mxu0 0.0
    %1591 = vmatpush1.msra.mxu0 0.0
    %1592 = vmatprep.subr.mxu0 0.0
    %1593 = vmatpush1.msra.mxu0 0.0
    %1594 = vmatprep.subr.mxu0 0.0
    %1595 = vmatpush1.msra.mxu0 0.0
    %1596 = vmatprep.subr.mxu0 0.0
    %1597 = vmatpush1.msra.mxu0 0.0
    %1598 = vmatprep.subr.mxu0 0.0
    %1599 = vmatpush1.msra.mxu0 0.0
    %1600 = vmatprep.subr.mxu0 0.0
    %1601 = vmatpush1.msra.mxu0 0.0
    %1602 = vmatprep.subr.mxu0 0.0
    %1603 = vmatpush1.msra.mxu0 0.0
    %1604 = vmatprep.subr.mxu0 0.0
    %1605 = vmatpush1.msra.mxu0 0.0
    %1606 = vmatprep.subr.mxu0 0.0
    %1607 = vmatpush1.msra.mxu0 0.0
    %1608 = vmatprep.subr.mxu0 0.0
    %1609 = vmatpush1.msra.mxu0 0.0
    %1610 = vmatprep.subr.mxu0 0.0
    %1611 = vmatpush1.msra.mxu0 0.0
    %1612 = vmatprep.subr.mxu0 0.0
    %1613 = vmatpush1.msra.mxu0 0.0
    %1614 = vmatprep.subr.mxu0 0.0
    %1615 = vmatpush1.msra.mxu0 0.0
    %1616 = vmatprep.subr.mxu0 0.0
    %1617 = vmatpush1.msra.mxu0 0.0
    %1618 = vmatprep.subr.mxu0 0.0
    %1619 = vmatpush1.msra.mxu0 0.0
    %1620 = vmatprep.subr.mxu0 0.0
    %1621 = vmatpush1.msra.mxu0 0.0
    %1622 = vmatprep.mubr.f32.mxu0 0.0
    %1623 = vmatmul.mubr.f32.gmra.mrb[0].mxu0 %v1556
    %v1624 = vpop.f32.mrb[0].mxu0
    %v1625 = vadd.f32 0.0, %v1624
    %v1626 = vpop.f32.mrb[0].mxu0
    %1627 = vdwg.mxu0
    %1628 = vmatprep.subr.mxu0 0.0
    %1629 = vmatpush1.msra.mxu0 %v545
    %1630 = vmatprep.subr.mxu0 0.0
    %1631 = vmatpush1.msra.mxu0 %v546
    %1632 = vmatprep.subr.mxu0 0.0
    %1633 = vmatpush1.msra.mxu0 %v547
    %1634 = vmatprep.subr.mxu0 0.0
    %1635 = vmatpush1.msra.mxu0 %v548
    %1636 = vmatprep.subr.mxu0 0.0
    %1637 = vmatpush1.msra.mxu0 0.0
    %1638 = vmatprep.subr.mxu0 0.0
    %1639 = vmatpush1.msra.mxu0 0.0
    %1640 = vmatprep.subr.mxu0 0.0
    %1641 = vmatpush1.msra.mxu0 0.0
    %1642 = vmatprep.subr.mxu0 0.0
    %1643 = vmatpush1.msra.mxu0 0.0
    %1644 = vmatprep.subr.mxu0 0.0
    %1645 = vmatpush1.msra.mxu0 0.0
    %1646 = vmatprep.subr.mxu0 0.0
    %1647 = vmatpush1.msra.mxu0 0.0
    %1648 = vmatprep.subr.mxu0 0.0
    %1649 = vmatpush1.msra.mxu0 0.0
    %1650 = vmatprep.subr.mxu0 0.0
    %1651 = vmatpush1.msra.mxu0 0.0
    %1652 = vmatprep.subr.mxu0 0.0
    %1653 = vmatpush1.msra.mxu0 0.0
    %1654 = vmatprep.subr.mxu0 0.0
    %1655 = vmatpush1.msra.mxu0 0.0
    %1656 = vmatprep.subr.mxu0 0.0
    %1657 = vmatpush1.msra.mxu0 0.0
    %1658 = vmatprep.subr.mxu0 0.0
    %1659 = vmatpush1.msra.mxu0 0.0
    %1660 = vmatprep.subr.mxu0 0.0
    %1661 = vmatpush1.msra.mxu0 0.0
    %1662 = vmatprep.subr.mxu0 0.0
    %1663 = vmatpush1.msra.mxu0 0.0
    %1664 = vmatprep.subr.mxu0 0.0
    %1665 = vmatpush1.msra.mxu0 0.0
    %1666 = vmatprep.subr.mxu0 0.0
    %1667 = vmatpush1.msra.mxu0 0.0
    %1668 = vmatprep.subr.mxu0 0.0
    %1669 = vmatpush1.msra.mxu0 0.0
    %1670 = vmatprep.subr.mxu0 0.0
    %1671 = vmatpush1.msra.mxu0 0.0
    %1672 = vmatprep.subr.mxu0 0.0
    %1673 = vmatpush1.msra.mxu0 0.0
    %1674 = vmatprep.subr.mxu0 0.0
    %1675 = vmatpush1.msra.mxu0 0.0
    %1676 = vmatprep.subr.mxu0 0.0
    %1677 = vmatpush1.msra.mxu0 0.0
    %1678 = vmatprep.subr.mxu0 0.0
    %1679 = vmatpush1.msra.mxu0 0.0
    %1680 = vmatprep.subr.mxu0 0.0
    %1681 = vmatpush1.msra.mxu0 0.0
    %1682 = vmatprep.subr.mxu0 0.0
    %1683 = vmatpush1.msra.mxu0 0.0
    %1684 = vmatprep.subr.mxu0 0.0
    %1685 = vmatpush1.msra.mxu0 0.0
    %1686 = vmatprep.subr.mxu0 0.0
    %1687 = vmatpush1.msra.mxu0 0.0
    %1688 = vmatprep.subr.mxu0 0.0
    %1689 = vmatpush1.msra.mxu0 0.0
    %1690 = vmatprep.subr.mxu0 0.0
    %1691 = vmatpush1.msra.mxu0 0.0
    %1692 = vmatprep.mubr.f32.mxu0 0.0
    %1693 = vmatmul.mubr.f32.gmra.mrb[0].mxu0 %v1556
    %v1694 = vpop.f32.mrb[0].mxu0
    %v1695 = vadd.f32 0.0, %v1694
    %v1696 = vpop.f32.mrb[0].mxu0
    %1697 = vdwg.mxu0
    %1698 = vmatprep.subr.mxu0 0.0
    %1699 = vmatpush1.msra.mxu0 %v549
    %1700 = vmatprep.subr.mxu0 0.0
    %1701 = vmatpush1.msra.mxu0 %v550
    %1702 = vmatprep.subr.mxu0 0.0
    %1703 = vmatpush1.msra.mxu0 %v551
    %1704 = vmatprep.subr.mxu0 0.0
    %1705 = vmatpush1.msra.mxu0 %v552
    %1706 = vmatprep.subr.mxu0 0.0
    %1707 = vmatpush1.msra.mxu0 0.0
    %1708 = vmatprep.subr.mxu0 0.0
    %1709 = vmatpush1.msra.mxu0 0.0
    %1710 = vmatprep.subr.mxu0 0.0
    %1711 = vmatpush1.msra.mxu0 0.0
    %1712 = vmatprep.subr.mxu0 0.0
    %1713 = vmatpush1.msra.mxu0 0.0
    %1714 = vmatprep.subr.mxu0 0.0
    %1715 = vmatpush1.msra.mxu0 0.0
    %1716 = vmatprep.subr.mxu0 0.0
    %1717 = vmatpush1.msra.mxu0 0.0
    %1718 = vmatprep.subr.mxu0 0.0
    %1719 = vmatpush1.msra.mxu0 0.0
    %1720 = vmatprep.subr.mxu0 0.0
    %1721 = vmatpush1.msra.mxu0 0.0
    %1722 = vmatprep.subr.mxu0 0.0
    %1723 = vmatpush1.msra.mxu0 0.0
    %1724 = vmatprep.subr.mxu0 0.0
    %1725 = vmatpush1.msra.mxu0 0.0
    %1726 = vmatprep.subr.mxu0 0.0
    %1727 = vmatpush1.msra.mxu0 0.0
    %1728 = vmatprep.subr.mxu0 0.0
    %1729 = vmatpush1.msra.mxu0 0.0
    %1730 = vmatprep.subr.mxu0 0.0
    %1731 = vmatpush1.msra.mxu0 0.0
    %1732 = vmatprep.subr.mxu0 0.0
    %1733 = vmatpush1.msra.mxu0 0.0
    %1734 = vmatprep.subr.mxu0 0.0
    %1735 = vmatpush1.msra.mxu0 0.0
    %1736 = vmatprep.subr.mxu0 0.0
    %1737 = vmatpush1.msra.mxu0 0.0
    %1738 = vmatprep.subr.mxu0 0.0
    %1739 = vmatpush1.msra.mxu0 0.0
    %1740 = vmatprep.subr.mxu0 0.0
    %1741 = vmatpush1.msra.mxu0 0.0
    %1742 = vmatprep.subr.mxu0 0.0
    %1743 = vmatpush1.msra.mxu0 0.0
    %1744 = vmatprep.subr.mxu0 0.0
    %1745 = vmatpush1.msra.mxu0 0.0
    %1746 = vmatprep.subr.mxu0 0.0
    %1747 = vmatpush1.msra.mxu0 0.0
    %1748 = vmatprep.subr.mxu0 0.0
    %1749 = vmatpush1.msra.mxu0 0.0
    %1750 = vmatprep.subr.mxu0 0.0
    %1751 = vmatpush1.msra.mxu0 0.0
    %1752 = vmatprep.subr.mxu0 0.0
    %1753 = vmatpush1.msra.mxu0 0.0
    %1754 = vmatprep.subr.mxu0 0.0
    %1755 = vmatpush1.msra.mxu0 0.0
    %1756 = vmatprep.subr.mxu0 0.0
    %1757 = vmatpush1.msra.mxu0 0.0
    %1758 = vmatprep.subr.mxu0 0.0
    %1759 = vmatpush1.msra.mxu0 0.0
    %1760 = vmatprep.subr.mxu0 0.0
    %1761 = vmatpush1.msra.mxu0 0.0
    %1762 = vmatprep.mubr.f32.mxu0 0.0
    %1763 = vmatmul.mubr.f32.gmra.mrb[0].mxu0 %v1556
    %v1764 = vpop.f32.mrb[0].mxu0
    %v1765 = vadd.f32 %v558, %v1764
    %v1766 = vpop.f32.mrb[0].mxu0
    %1767 = vdwg.mxu0
    %s1768 = scalar_lea.vmem [#allocation2], 32
    %v1769 = vld [vmem:[%s1768] sm:$0xff]
    %v1770 = vadd.f32 %v1769, %v1625
    %v1771 = vxor.u32 %v1770, 2147483648
    %v1772 = vmul.f32 %v1771, 1.442695
    %v1773 = vpow.pop %v1772
    %v1774 = vadd.f32 %v1773, 1.0
    %v1775 = vrcp.pop %v1774
    %v1776 = vmul.f32 1.0, %v1775
    %s1777 = scalar_lea.vmem [#allocation3], 32
    %v1778 = vld [vmem:[%s1777] sm:$0xff]
    %v1779 = vadd.f32 %v1778, %v1695
    %v1780 = vxor.u32 %v1779, 2147483648
    %v1781 = vmul.f32 %v1780, 1.442695
    %v1782 = vpow.pop %v1781
    %v1783 = vadd.f32 %v1782, 1.0
    %v1784 = vrcp.pop %v1783
    %v1785 = vmul.f32 1.0, %v1784
    %s1786 = scalar_lea.vmem [#allocation4], 32
    %v1787 = vld [vmem:[%s1786] sm:$0xff]
    %v1788 = vmul.f32 %v1776, %v1765
    %v1789 = vadd.f32 %v1787, %v1788
    %v1790 = vtanh.pop %v1789
    %v1791 = vsub.f32 1.0, %v1785
    %v1792 = vmul.f32 %v1791, %v1790
    %v1793 = vmul.f32 %v1785, %v1554
    %v1794 = vadd.f32 %v1792, %v1793
    %vm1795 = vcmp.gt.s32.totalorder %v135, 4
    %v1796 = vsel %vm1795, 1, 0
    %1797 = vset.pattern.permute.xlu0 0
    %1798 = vperm.xlu0 %1797, %v1796
    %v1799 = vpop.permute.xlu0 %1798
    %vm1800 = vcmp.eq.s32.totalorder %v1799, 1
    %v1801 = vsel %vm1800, %v1794, 0.0
    %s1802 = scalar_lea.vmem [#allocation5], 32
    %1803 = vst.msk [vmem:[%s1802] sm:$0xff] %vm155, %v1801
    %v1804 = vsel %vm1800, %v1794, %v1554
    %v1806 = vsel %vm155, %v1804, 0
    %1808 = vmatprep.subr.mxu0 0.0
    %1809 = vmatpush1.msra.mxu0 %v541
    %1810 = vmatprep.subr.mxu0 0.0
    %1811 = vmatpush1.msra.mxu0 %v542
    %1812 = vmatprep.subr.mxu0 0.0
    %1813 = vmatpush1.msra.mxu0 %v543
    %1814 = vmatprep.subr.mxu0 0.0
    %1815 = vmatpush1.msra.mxu0 %v544
    %1816 = vmatprep.subr.mxu0 0.0
    %1817 = vmatpush1.msra.mxu0 0.0
    %1818 = vmatprep.subr.mxu0 0.0
    %1819 = vmatpush1.msra.mxu0 0.0
    %1820 = vmatprep.subr.mxu0 0.0
    %1821 = vmatpush1.msra.mxu0 0.0
    %1822 = vmatprep.subr.mxu0 0.0
    %1823 = vmatpush1.msra.mxu0 0.0
    %1824 = vmatprep.subr.mxu0 0.0
    %1825 = vmatpush1.msra.mxu0 0.0
    %1826 = vmatprep.subr.mxu0 0.0
    %1827 = vmatpush1.msra.mxu0 0.0
    %1828 = vmatprep.subr.mxu0 0.0
    %1829 = vmatpush1.msra.mxu0 0.0
    %1830 = vmatprep.subr.mxu0 0.0
    %1831 = vmatpush1.msra.mxu0 0.0
    %1832 = vmatprep.subr.mxu0 0.0
    %1833 = vmatpush1.msra.mxu0 0.0
    %1834 = vmatprep.subr.mxu0 0.0
    %1835 = vmatpush1.msra.mxu0 0.0
    %1836 = vmatprep.subr.mxu0 0.0
    %1837 = vmatpush1.msra.mxu0 0.0
    %1838 = vmatprep.subr.mxu0 0.0
    %1839 = vmatpush1.msra.mxu0 0.0
    %1840 = vmatprep.subr.mxu0 0.0
    %1841 = vmatpush1.msra.mxu0 0.0
    %1842 = vmatprep.subr.mxu0 0.0
    %1843 = vmatpush1.msra.mxu0 0.0
    %1844 = vmatprep.subr.mxu0 0.0
    %1845 = vmatpush1.msra.mxu0 0.0
    %1846 = vmatprep.subr.mxu0 0.0
    %1847 = vmatpush1.msra.mxu0 0.0
    %1848 = vmatprep.subr.mxu0 0.0
    %1849 = vmatpush1.msra.mxu0 0.0
    %1850 = vmatprep.subr.mxu0 0.0
    %1851 = vmatpush1.msra.mxu0 0.0
    %1852 = vmatprep.subr.mxu0 0.0
    %1853 = vmatpush1.msra.mxu0 0.0
    %1854 = vmatprep.subr.mxu0 0.0
    %1855 = vmatpush1.msra.mxu0 0.0
    %1856 = vmatprep.subr.mxu0 0.0
    %1857 = vmatpush1.msra.mxu0 0.0
    %1858 = vmatprep.subr.mxu0 0.0
    %1859 = vmatpush1.msra.mxu0 0.0
    %1860 = vmatprep.subr.mxu0 0.0
    %1861 = vmatpush1.msra.mxu0 0.0
    %1862 = vmatprep.subr.mxu0 0.0
    %1863 = vmatpush1.msra.mxu0 0.0
    %1864 = vmatprep.subr.mxu0 0.0
    %1865 = vmatpush1.msra.mxu0 0.0
    %1866 = vmatprep.subr.mxu0 0.0
    %1867 = vmatpush1.msra.mxu0 0.0
    %1868 = vmatprep.subr.mxu0 0.0
    %1869 = vmatpush1.msra.mxu0 0.0
    %1870 = vmatprep.subr.mxu0 0.0
    %1871 = vmatpush1.msra.mxu0 0.0
    %1872 = vmatprep.mubr.f32.mxu0 0.0
    %1873 = vmatmul.mubr.f32.gmra.mrb[0].mxu0 %v1806
    %v1874 = vpop.f32.mrb[0].mxu0
    %v1875 = vadd.f32 0.0, %v1874
    %v1876 = vpop.f32.mrb[0].mxu0
    %1877 = vdwg.mxu0
    %1878 = vmatprep.subr.mxu0 0.0
    %1879 = vmatpush1.msra.mxu0 %v545
    %1880 = vmatprep.subr.mxu0 0.0
    %1881 = vmatpush1.msra.mxu0 %v546
    %1882 = vmatprep.subr.mxu0 0.0
    %1883 = vmatpush1.msra.mxu0 %v547
    %1884 = vmatprep.subr.mxu0 0.0
    %1885 = vmatpush1.msra.mxu0 %v548
    %1886 = vmatprep.subr.mxu0 0.0
    %1887 = vmatpush1.msra.mxu0 0.0
    %1888 = vmatprep.subr.mxu0 0.0
    %1889 = vmatpush1.msra.mxu0 0.0
    %1890 = vmatprep.subr.mxu0 0.0
    %1891 = vmatpush1.msra.mxu0 0.0
    %1892 = vmatprep.subr.mxu0 0.0
    %1893 = vmatpush1.msra.mxu0 0.0
    %1894 = vmatprep.subr.mxu0 0.0
    %1895 = vmatpush1.msra.mxu0 0.0
    %1896 = vmatprep.subr.mxu0 0.0
    %1897 = vmatpush1.msra.mxu0 0.0
    %1898 = vmatprep.subr.mxu0 0.0
    %1899 = vmatpush1.msra.mxu0 0.0
    %1900 = vmatprep.subr.mxu0 0.0
    %1901 = vmatpush1.msra.mxu0 0.0
    %1902 = vmatprep.subr.mxu0 0.0
    %1903 = vmatpush1.msra.mxu0 0.0
    %1904 = vmatprep.subr.mxu0 0.0
    %1905 = vmatpush1.msra.mxu0 0.0
    %1906 = vmatprep.subr.mxu0 0.0
    %1907 = vmatpush1.msra.mxu0 0.0
    %1908 = vmatprep.subr.mxu0 0.0
    %1909 = vmatpush1.msra.mxu0 0.0
    %1910 = vmatprep.subr.mxu0 0.0
    %1911 = vmatpush1.msra.mxu0 0.0
    %1912 = vmatprep.subr.mxu0 0.0
    %1913 = vmatpush1.msra.mxu0 0.0
    %1914 = vmatprep.subr.mxu0 0.0
    %1915 = vmatpush1.msra.mxu0 0.0
    %1916 = vmatprep.subr.mxu0 0.0
    %1917 = vmatpush1.msra.mxu0 0.0
    %1918 = vmatprep.subr.mxu0 0.0
    %1919 = vmatpush1.msra.mxu0 0.0
    %1920 = vmatprep.subr.mxu0 0.0
    %1921 = vmatpush1.msra.mxu0 0.0
    %1922 = vmatprep.subr.mxu0 0.0
    %1923 = vmatpush1.msra.mxu0 0.0
    %1924 = vmatprep.subr.mxu0 0.0
    %1925 = vmatpush1.msra.mxu0 0.0
    %1926 = vmatprep.subr.mxu0 0.0
    %1927 = vmatpush1.msra.mxu0 0.0
    %1928 = vmatprep.subr.mxu0 0.0
    %1929 = vmatpush1.msra.mxu0 0.0
    %1930 = vmatprep.subr.mxu0 0.0
    %1931 = vmatpush1.msra.mxu0 0.0
    %1932 = vmatprep.subr.mxu0 0.0
    %1933 = vmatpush1.msra.mxu0 0.0
    %1934 = vmatprep.subr.mxu0 0.0
    %1935 = vmatpush1.msra.mxu0 0.0
    %1936 = vmatprep.subr.mxu0 0.0
    %1937 = vmatpush1.msra.mxu0 0.0
    %1938 = vmatprep.subr.mxu0 0.0
    %1939 = vmatpush1.msra.mxu0 0.0
    %1940 = vmatprep.subr.mxu0 0.0
    %1941 = vmatpush1.msra.mxu0 0.0
    %1942 = vmatprep.mubr.f32.mxu0 0.0
    %1943 = vmatmul.mubr.f32.gmra.mrb[0].mxu0 %v1806
    %v1944 = vpop.f32.mrb[0].mxu0
    %v1945 = vadd.f32 0.0, %v1944
    %v1946 = vpop.f32.mrb[0].mxu0
    %1947 = vdwg.mxu0
    %1948 = vmatprep.subr.mxu0 0.0
    %1949 = vmatpush1.msra.mxu0 %v549
    %1950 = vmatprep.subr.mxu0 0.0
    %1951 = vmatpush1.msra.mxu0 %v550
    %1952 = vmatprep.subr.mxu0 0.0
    %1953 = vmatpush1.msra.mxu0 %v551
    %1954 = vmatprep.subr.mxu0 0.0
    %1955 = vmatpush1.msra.mxu0 %v552
    %1956 = vmatprep.subr.mxu0 0.0
    %1957 = vmatpush1.msra.mxu0 0.0
    %1958 = vmatprep.subr.mxu0 0.0
    %1959 = vmatpush1.msra.mxu0 0.0
    %1960 = vmatprep.subr.mxu0 0.0
    %1961 = vmatpush1.msra.mxu0 0.0
    %1962 = vmatprep.subr.mxu0 0.0
    %1963 = vmatpush1.msra.mxu0 0.0
    %1964 = vmatprep.subr.mxu0 0.0
    %1965 = vmatpush1.msra.mxu0 0.0
    %1966 = vmatprep.subr.mxu0 0.0
    %1967 = vmatpush1.msra.mxu0 0.0
    %1968 = vmatprep.subr.mxu0 0.0
    %1969 = vmatpush1.msra.mxu0 0.0
    %1970 = vmatprep.subr.mxu0 0.0
    %1971 = vmatpush1.msra.mxu0 0.0
    %1972 = vmatprep.subr.mxu0 0.0
    %1973 = vmatpush1.msra.mxu0 0.0
    %1974 = vmatprep.subr.mxu0 0.0
    %1975 = vmatpush1.msra.mxu0 0.0
    %1976 = vmatprep.subr.mxu0 0.0
    %1977 = vmatpush1.msra.mxu0 0.0
    %1978 = vmatprep.subr.mxu0 0.0
    %1979 = vmatpush1.msra.mxu0 0.0
    %1980 = vmatprep.subr.mxu0 0.0
    %1981 = vmatpush1.msra.mxu0 0.0
    %1982 = vmatprep.subr.mxu0 0.0
    %1983 = vmatpush1.msra.mxu0 0.0
    %1984 = vmatprep.subr.mxu0 0.0
    %1985 = vmatpush1.msra.mxu0 0.0
    %1986 = vmatprep.subr.mxu0 0.0
    %1987 = vmatpush1.msra.mxu0 0.0
    %1988 = vmatprep.subr.mxu0 0.0
    %1989 = vmatpush1.msra.mxu0 0.0
    %1990 = vmatprep.subr.mxu0 0.0
    %1991 = vmatpush1.msra.mxu0 0.0
    %1992 = vmatprep.subr.mxu0 0.0
    %1993 = vmatpush1.msra.mxu0 0.0
    %1994 = vmatprep.subr.mxu0 0.0
    %1995 = vmatpush1.msra.mxu0 0.0
    %1996 = vmatprep.subr.mxu0 0.0
    %1997 = vmatpush1.msra.mxu0 0.0
    %1998 = vmatprep.subr.mxu0 0.0
    %1999 = vmatpush1.msra.mxu0 0.0
    %2000 = vmatprep.subr.mxu0 0.0
    %2001 = vmatpush1.msra.mxu0 0.0
    %2002 = vmatprep.subr.mxu0 0.0
    %2003 = vmatpush1.msra.mxu0 0.0
    %2004 = vmatprep.subr.mxu0 0.0
    %2005 = vmatpush1.msra.mxu0 0.0
    %2006 = vmatprep.subr.mxu0 0.0
    %2007 = vmatpush1.msra.mxu0 0.0
    %2008 = vmatprep.subr.mxu0 0.0
    %2009 = vmatpush1.msra.mxu0 0.0
    %2010 = vmatprep.subr.mxu0 0.0
    %2011 = vmatpush1.msra.mxu0 0.0
    %2012 = vmatprep.mubr.f32.mxu0 0.0
    %2013 = vmatmul.mubr.f32.gmra.mrb[0].mxu0 %v1806
    %v2014 = vpop.f32.mrb[0].mxu0
    %v2015 = vadd.f32 %v558, %v2014
    %v2016 = vpop.f32.mrb[0].mxu0
    %2017 = vdwg.mxu0
    %s2018 = scalar_lea.vmem [#allocation2], 40
    %v2019 = vld [vmem:[%s2018] sm:$0xff]
    %v2020 = vadd.f32 %v2019, %v1875
    %v2021 = vxor.u32 %v2020, 2147483648
    %v2022 = vmul.f32 %v2021, 1.442695
    %v2023 = vpow.pop %v2022
    %v2024 = vadd.f32 %v2023, 1.0
    %v2025 = vrcp.pop %v2024
    %v2026 = vmul.f32 1.0, %v2025
    %s2027 = scalar_lea.vmem [#allocation3], 40
    %v2028 = vld [vmem:[%s2027] sm:$0xff]
    %v2029 = vadd.f32 %v2028, %v1945
    %v2030 = vxor.u32 %v2029, 2147483648
    %v2031 = vmul.f32 %v2030, 1.442695
    %v2032 = vpow.pop %v2031
    %v2033 = vadd.f32 %v2032, 1.0
    %v2034 = vrcp.pop %v2033
    %v2035 = vmul.f32 1.0, %v2034
    %s2036 = scalar_lea.vmem [#allocation4], 40
    %v2037 = vld [vmem:[%s2036] sm:$0xff]
    %v2038 = vmul.f32 %v2026, %v2015
    %v2039 = vadd.f32 %v2037, %v2038
    %v2040 = vtanh.pop %v2039
    %v2041 = vsub.f32 1.0, %v2035
    %v2042 = vmul.f32 %v2041, %v2040
    %v2043 = vmul.f32 %v2035, %v1804
    %v2044 = vadd.f32 %v2042, %v2043
    %vm2045 = vcmp.gt.s32.totalorder %v135, 5
    %v2046 = vsel %vm2045, 1, 0
    %2047 = vset.pattern.permute.xlu0 0
    %2048 = vperm.xlu0 %2047, %v2046
    %v2049 = vpop.permute.xlu0 %2048
    %vm2050 = vcmp.eq.s32.totalorder %v2049, 1
    %v2051 = vsel %vm2050, %v2044, 0.0
    %s2052 = scalar_lea.vmem [#allocation5], 40
    %2053 = vst.msk [vmem:[%s2052] sm:$0xff] %vm155, %v2051
    %v2054 = vsel %vm2050, %v2044, %v1804
    %v2056 = vsel %vm155, %v2054, 0
    %2058 = vmatprep.subr.mxu0 0.0
    %2059 = vmatpush1.msra.mxu0 %v541
    %2060 = vmatprep.subr.mxu0 0.0
    %2061 = vmatpush1.msra.mxu0 %v542
    %2062 = vmatprep.subr.mxu0 0.0
    %2063 = vmatpush1.msra.mxu0 %v543
    %2064 = vmatprep.subr.mxu0 0.0
    %2065 = vmatpush1.msra.mxu0 %v544
    %2066 = vmatprep.subr.mxu0 0.0
    %2067 = vmatpush1.msra.mxu0 0.0
    %2068 = vmatprep.subr.mxu0 0.0
    %2069 = vmatpush1.msra.mxu0 0.0
    %2070 = vmatprep.subr.mxu0 0.0
    %2071 = vmatpush1.msra.mxu0 0.0
    %2072 = vmatprep.subr.mxu0 0.0
    %2073 = vmatpush1.msra.mxu0 0.0
    %2074 = vmatprep.subr.mxu0 0.0
    %2075 = vmatpush1.msra.mxu0 0.0
    %2076 = vmatprep.subr.mxu0 0.0
    %2077 = vmatpush1.msra.mxu0 0.0
    %2078 = vmatprep.subr.mxu0 0.0
    %2079 = vmatpush1.msra.mxu0 0.0
    %2080 = vmatprep.subr.mxu0 0.0
    %2081 = vmatpush1.msra.mxu0 0.0
    %2082 = vmatprep.subr.mxu0 0.0
    %2083 = vmatpush1.msra.mxu0 0.0
    %2084 = vmatprep.subr.mxu0 0.0
    %2085 = vmatpush1.msra.mxu0 0.0
    %2086 = vmatprep.subr.mxu0 0.0
    %2087 = vmatpush1.msra.mxu0 0.0
    %2088 = vmatprep.subr.mxu0 0.0
    %2089 = vmatpush1.msra.mxu0 0.0
    %2090 = vmatprep.subr.mxu0 0.0
    %2091 = vmatpush1.msra.mxu0 0.0
    %2092 = vmatprep.subr.mxu0 0.0
    %2093 = vmatpush1.msra.mxu0 0.0
    %2094 = vmatprep.subr.mxu0 0.0
    %2095 = vmatpush1.msra.mxu0 0.0
    %2096 = vmatprep.subr.mxu0 0.0
    %2097 = vmatpush1.msra.mxu0 0.0
    %2098 = vmatprep.subr.mxu0 0.0
    %2099 = vmatpush1.msra.mxu0 0.0
    %2100 = vmatprep.subr.mxu0 0.0
    %2101 = vmatpush1.msra.mxu0 0.0
    %2102 = vmatprep.subr.mxu0 0.0
    %2103 = vmatpush1.msra.mxu0 0.0
    %2104 = vmatprep.subr.mxu0 0.0
    %2105 = vmatpush1.msra.mxu0 0.0
    %2106 = vmatprep.subr.mxu0 0.0
    %2107 = vmatpush1.msra.mxu0 0.0
    %2108 = vmatprep.subr.mxu0 0.0
    %2109 = vmatpush1.msra.mxu0 0.0
    %2110 = vmatprep.subr.mxu0 0.0
    %2111 = vmatpush1.msra.mxu0 0.0
    %2112 = vmatprep.subr.mxu0 0.0
    %2113 = vmatpush1.msra.mxu0 0.0
    %2114 = vmatprep.subr.mxu0 0.0
    %2115 = vmatpush1.msra.mxu0 0.0
    %2116 = vmatprep.subr.mxu0 0.0
    %2117 = vmatpush1.msra.mxu0 0.0
    %2118 = vmatprep.subr.mxu0 0.0
    %2119 = vmatpush1.msra.mxu0 0.0
    %2120 = vmatprep.subr.mxu0 0.0
    %2121 = vmatpush1.msra.mxu0 0.0
    %2122 = vmatprep.mubr.f32.mxu0 0.0
    %2123 = vmatmul.mubr.f32.gmra.mrb[0].mxu0 %v2056
    %v2124 = vpop.f32.mrb[0].mxu0
    %v2125 = vadd.f32 0.0, %v2124
    %v2126 = vpop.f32.mrb[0].mxu0
    %2127 = vdwg.mxu0
    %2128 = vmatprep.subr.mxu0 0.0
    %2129 = vmatpush1.msra.mxu0 %v545
    %2130 = vmatprep.subr.mxu0 0.0
    %2131 = vmatpush1.msra.mxu0 %v546
    %2132 = vmatprep.subr.mxu0 0.0
    %2133 = vmatpush1.msra.mxu0 %v547
    %2134 = vmatprep.subr.mxu0 0.0
    %2135 = vmatpush1.msra.mxu0 %v548
    %2136 = vmatprep.subr.mxu0 0.0
    %2137 = vmatpush1.msra.mxu0 0.0
    %2138 = vmatprep.subr.mxu0 0.0
    %2139 = vmatpush1.msra.mxu0 0.0
    %2140 = vmatprep.subr.mxu0 0.0
    %2141 = vmatpush1.msra.mxu0 0.0
    %2142 = vmatprep.subr.mxu0 0.0
    %2143 = vmatpush1.msra.mxu0 0.0
    %2144 = vmatprep.subr.mxu0 0.0
    %2145 = vmatpush1.msra.mxu0 0.0
    %2146 = vmatprep.subr.mxu0 0.0
    %2147 = vmatpush1.msra.mxu0 0.0
    %2148 = vmatprep.subr.mxu0 0.0
    %2149 = vmatpush1.msra.mxu0 0.0
    %2150 = vmatprep.subr.mxu0 0.0
    %2151 = vmatpush1.msra.mxu0 0.0
    %2152 = vmatprep.subr.mxu0 0.0
    %2153 = vmatpush1.msra.mxu0 0.0
    %2154 = vmatprep.subr.mxu0 0.0
    %2155 = vmatpush1.msra.mxu0 0.0
    %2156 = vmatprep.subr.mxu0 0.0
    %2157 = vmatpush1.msra.mxu0 0.0
    %2158 = vmatprep.subr.mxu0 0.0
    %2159 = vmatpush1.msra.mxu0 0.0
    %2160 = vmatprep.subr.mxu0 0.0
    %2161 = vmatpush1.msra.mxu0 0.0
    %2162 = vmatprep.subr.mxu0 0.0
    %2163 = vmatpush1.msra.mxu0 0.0
    %2164 = vmatprep.subr.mxu0 0.0
    %2165 = vmatpush1.msra.mxu0 0.0
    %2166 = vmatprep.subr.mxu0 0.0
    %2167 = vmatpush1.msra.mxu0 0.0
    %2168 = vmatprep.subr.mxu0 0.0
    %2169 = vmatpush1.msra.mxu0 0.0
    %2170 = vmatprep.subr.mxu0 0.0
    %2171 = vmatpush1.msra.mxu0 0.0
    %2172 = vmatprep.subr.mxu0 0.0
    %2173 = vmatpush1.msra.mxu0 0.0
    %2174 = vmatprep.subr.mxu0 0.0
    %2175 = vmatpush1.msra.mxu0 0.0
    %2176 = vmatprep.subr.mxu0 0.0
    %2177 = vmatpush1.msra.mxu0 0.0
    %2178 = vmatprep.subr.mxu0 0.0
    %2179 = vmatpush1.msra.mxu0 0.0
    %2180 = vmatprep.subr.mxu0 0.0
    %2181 = vmatpush1.msra.mxu0 0.0
    %2182 = vmatprep.subr.mxu0 0.0
    %2183 = vmatpush1.msra.mxu0 0.0
    %2184 = vmatprep.subr.mxu0 0.0
    %2185 = vmatpush1.msra.mxu0 0.0
    %2186 = vmatprep.subr.mxu0 0.0
    %2187 = vmatpush1.msra.mxu0 0.0
    %2188 = vmatprep.subr.mxu0 0.0
    %2189 = vmatpush1.msra.mxu0 0.0
    %2190 = vmatprep.subr.mxu0 0.0
    %2191 = vmatpush1.msra.mxu0 0.0
    %2192 = vmatprep.mubr.f32.mxu0 0.0
    %2193 = vmatmul.mubr.f32.gmra.mrb[0].mxu0 %v2056
    %v2194 = vpop.f32.mrb[0].mxu0
    %v2195 = vadd.f32 0.0, %v2194
    %v2196 = vpop.f32.mrb[0].mxu0
    %2197 = vdwg.mxu0
    %2198 = vmatprep.subr.mxu0 0.0
    %2199 = vmatpush1.msra.mxu0 %v549
    %2200 = vmatprep.subr.mxu0 0.0
    %2201 = vmatpush1.msra.mxu0 %v550
    %2202 = vmatprep.subr.mxu0 0.0
    %2203 = vmatpush1.msra.mxu0 %v551
    %2204 = vmatprep.subr.mxu0 0.0
    %2205 = vmatpush1.msra.mxu0 %v552
    %2206 = vmatprep.subr.mxu0 0.0
    %2207 = vmatpush1.msra.mxu0 0.0
    %2208 = vmatprep.subr.mxu0 0.0
    %2209 = vmatpush1.msra.mxu0 0.0
    %2210 = vmatprep.subr.mxu0 0.0
    %2211 = vmatpush1.msra.mxu0 0.0
    %2212 = vmatprep.subr.mxu0 0.0
    %2213 = vmatpush1.msra.mxu0 0.0
    %2214 = vmatprep.subr.mxu0 0.0
    %2215 = vmatpush1.msra.mxu0 0.0
    %2216 = vmatprep.subr.mxu0 0.0
    %2217 = vmatpush1.msra.mxu0 0.0
    %2218 = vmatprep.subr.mxu0 0.0
    %2219 = vmatpush1.msra.mxu0 0.0
    %2220 = vmatprep.subr.mxu0 0.0
    %2221 = vmatpush1.msra.mxu0 0.0
    %2222 = vmatprep.subr.mxu0 0.0
    %2223 = vmatpush1.msra.mxu0 0.0
    %2224 = vmatprep.subr.mxu0 0.0
    %2225 = vmatpush1.msra.mxu0 0.0
    %2226 = vmatprep.subr.mxu0 0.0
    %2227 = vmatpush1.msra.mxu0 0.0
    %2228 = vmatprep.subr.mxu0 0.0
    %2229 = vmatpush1.msra.mxu0 0.0
    %2230 = vmatprep.subr.mxu0 0.0
    %2231 = vmatpush1.msra.mxu0 0.0
    %2232 = vmatprep.subr.mxu0 0.0
    %2233 = vmatpush1.msra.mxu0 0.0
    %2234 = vmatprep.subr.mxu0 0.0
    %2235 = vmatpush1.msra.mxu0 0.0
    %2236 = vmatprep.subr.mxu0 0.0
    %2237 = vmatpush1.msra.mxu0 0.0
    %2238 = vmatprep.subr.mxu0 0.0
    %2239 = vmatpush1.msra.mxu0 0.0
    %2240 = vmatprep.subr.mxu0 0.0
    %2241 = vmatpush1.msra.mxu0 0.0
    %2242 = vmatprep.subr.mxu0 0.0
    %2243 = vmatpush1.msra.mxu0 0.0
    %2244 = vmatprep.subr.mxu0 0.0
    %2245 = vmatpush1.msra.mxu0 0.0
    %2246 = vmatprep.subr.mxu0 0.0
    %2247 = vmatpush1.msra.mxu0 0.0
    %2248 = vmatprep.subr.mxu0 0.0
    %2249 = vmatpush1.msra.mxu0 0.0
    %2250 = vmatprep.subr.mxu0 0.0
    %2251 = vmatpush1.msra.mxu0 0.0
    %2252 = vmatprep.subr.mxu0 0.0
    %2253 = vmatpush1.msra.mxu0 0.0
    %2254 = vmatprep.subr.mxu0 0.0
    %2255 = vmatpush1.msra.mxu0 0.0
    %2256 = vmatprep.subr.mxu0 0.0
    %2257 = vmatpush1.msra.mxu0 0.0
    %2258 = vmatprep.subr.mxu0 0.0
    %2259 = vmatpush1.msra.mxu0 0.0
    %2260 = vmatprep.subr.mxu0 0.0
    %2261 = vmatpush1.msra.mxu0 0.0
    %2262 = vmatprep.mubr.f32.mxu0 0.0
    %2263 = vmatmul.mubr.f32.gmra.mrb[0].mxu0 %v2056
    %v2264 = vpop.f32.mrb[0].mxu0
    %v2265 = vadd.f32 %v558, %v2264
    %v2266 = vpop.f32.mrb[0].mxu0
    %2267 = vdwg.mxu0
    %s2268 = scalar_lea.vmem [#allocation2], 48
    %v2269 = vld [vmem:[%s2268] sm:$0xff]
    %v2270 = vadd.f32 %v2269, %v2125
    %v2271 = vxor.u32 %v2270, 2147483648
    %v2272 = vmul.f32 %v2271, 1.442695
    %v2273 = vpow.pop %v2272
    %v2274 = vadd.f32 %v2273, 1.0
    %v2275 = vrcp.pop %v2274
    %v2276 = vmul.f32 1.0, %v2275
    %s2277 = scalar_lea.vmem [#allocation3], 48
    %v2278 = vld [vmem:[%s2277] sm:$0xff]
    %v2279 = vadd.f32 %v2278, %v2195
    %v2280 = vxor.u32 %v2279, 2147483648
    %v2281 = vmul.f32 %v2280, 1.442695
    %v2282 = vpow.pop %v2281
    %v2283 = vadd.f32 %v2282, 1.0
    %v2284 = vrcp.pop %v2283
    %v2285 = vmul.f32 1.0, %v2284
    %s2286 = scalar_lea.vmem [#allocation4], 48
    %v2287 = vld [vmem:[%s2286] sm:$0xff]
    %v2288 = vmul.f32 %v2276, %v2265
    %v2289 = vadd.f32 %v2287, %v2288
    %v2290 = vtanh.pop %v2289
    %v2291 = vsub.f32 1.0, %v2285
    %v2292 = vmul.f32 %v2291, %v2290
    %v2293 = vmul.f32 %v2285, %v2054
    %v2294 = vadd.f32 %v2292, %v2293
    %vm2295 = vcmp.gt.s32.totalorder %v135, 6
    %v2296 = vsel %vm2295, 1, 0
    %2297 = vset.pattern.permute.xlu0 0
    %2298 = vperm.xlu0 %2297, %v2296
    %v2299 = vpop.permute.xlu0 %2298
    %vm2300 = vcmp.eq.s32.totalorder %v2299, 1
    %v2301 = vsel %vm2300, %v2294, 0.0
    %s2302 = scalar_lea.vmem [#allocation5], 48
    %2303 = vst.msk [vmem:[%s2302] sm:$0xff] %vm155, %v2301
    %v2304 = vsel %vm2300, %v2294, %v2054
    %v2306 = vsel %vm155, %v2304, 0
    %2308 = vmatprep.subr.mxu0 0.0
    %2309 = vmatpush1.msra.mxu0 %v541
    %2310 = vmatprep.subr.mxu0 0.0
    %2311 = vmatpush1.msra.mxu0 %v542
    %2312 = vmatprep.subr.mxu0 0.0
    %2313 = vmatpush1.msra.mxu0 %v543
    %2314 = vmatprep.subr.mxu0 0.0
    %2315 = vmatpush1.msra.mxu0 %v544
    %2316 = vmatprep.subr.mxu0 0.0
    %2317 = vmatpush1.msra.mxu0 0.0
    %2318 = vmatprep.subr.mxu0 0.0
    %2319 = vmatpush1.msra.mxu0 0.0
    %2320 = vmatprep.subr.mxu0 0.0
    %2321 = vmatpush1.msra.mxu0 0.0
    %2322 = vmatprep.subr.mxu0 0.0
    %2323 = vmatpush1.msra.mxu0 0.0
    %2324 = vmatprep.subr.mxu0 0.0
    %2325 = vmatpush1.msra.mxu0 0.0
    %2326 = vmatprep.subr.mxu0 0.0
    %2327 = vmatpush1.msra.mxu0 0.0
    %2328 = vmatprep.subr.mxu0 0.0
    %2329 = vmatpush1.msra.mxu0 0.0
    %2330 = vmatprep.subr.mxu0 0.0
    %2331 = vmatpush1.msra.mxu0 0.0
    %2332 = vmatprep.subr.mxu0 0.0
    %2333 = vmatpush1.msra.mxu0 0.0
    %2334 = vmatprep.subr.mxu0 0.0
    %2335 = vmatpush1.msra.mxu0 0.0
    %2336 = vmatprep.subr.mxu0 0.0
    %2337 = vmatpush1.msra.mxu0 0.0
    %2338 = vmatprep.subr.mxu0 0.0
    %2339 = vmatpush1.msra.mxu0 0.0
    %2340 = vmatprep.subr.mxu0 0.0
    %2341 = vmatpush1.msra.mxu0 0.0
    %2342 = vmatprep.subr.mxu0 0.0
    %2343 = vmatpush1.msra.mxu0 0.0
    %2344 = vmatprep.subr.mxu0 0.0
    %2345 = vmatpush1.msra.mxu0 0.0
    %2346 = vmatprep.subr.mxu0 0.0
    %2347 = vmatpush1.msra.mxu0 0.0
    %2348 = vmatprep.subr.mxu0 0.0
    %2349 = vmatpush1.msra.mxu0 0.0
    %2350 = vmatprep.subr.mxu0 0.0
    %2351 = vmatpush1.msra.mxu0 0.0
    %2352 = vmatprep.subr.mxu0 0.0
    %2353 = vmatpush1.msra.mxu0 0.0
    %2354 = vmatprep.subr.mxu0 0.0
    %2355 = vmatpush1.msra.mxu0 0.0
    %2356 = vmatprep.subr.mxu0 0.0
    %2357 = vmatpush1.msra.mxu0 0.0
    %2358 = vmatprep.subr.mxu0 0.0
    %2359 = vmatpush1.msra.mxu0 0.0
    %2360 = vmatprep.subr.mxu0 0.0
    %2361 = vmatpush1.msra.mxu0 0.0
    %2362 = vmatprep.subr.mxu0 0.0
    %2363 = vmatpush1.msra.mxu0 0.0
    %2364 = vmatprep.subr.mxu0 0.0
    %2365 = vmatpush1.msra.mxu0 0.0
    %2366 = vmatprep.subr.mxu0 0.0
    %2367 = vmatpush1.msra.mxu0 0.0
    %2368 = vmatprep.subr.mxu0 0.0
    %2369 = vmatpush1.msra.mxu0 0.0
    %2370 = vmatprep.subr.mxu0 0.0
    %2371 = vmatpush1.msra.mxu0 0.0
    %2372 = vmatprep.mubr.f32.mxu0 0.0
    %2373 = vmatmul.mubr.f32.gmra.mrb[0].mxu0 %v2306
    %v2374 = vpop.f32.mrb[0].mxu0
    %v2375 = vadd.f32 0.0, %v2374
    %v2376 = vpop.f32.mrb[0].mxu0
    %2377 = vdwg.mxu0
    %2378 = vmatprep.subr.mxu0 0.0
    %2379 = vmatpush1.msra.mxu0 %v545
    %2380 = vmatprep.subr.mxu0 0.0
    %2381 = vmatpush1.msra.mxu0 %v546
    %2382 = vmatprep.subr.mxu0 0.0
    %2383 = vmatpush1.msra.mxu0 %v547
    %2384 = vmatprep.subr.mxu0 0.0
    %2385 = vmatpush1.msra.mxu0 %v548
    %2386 = vmatprep.subr.mxu0 0.0
    %2387 = vmatpush1.msra.mxu0 0.0
    %2388 = vmatprep.subr.mxu0 0.0
    %2389 = vmatpush1.msra.mxu0 0.0
    %2390 = vmatprep.subr.mxu0 0.0
    %2391 = vmatpush1.msra.mxu0 0.0
    %2392 = vmatprep.subr.mxu0 0.0
    %2393 = vmatpush1.msra.mxu0 0.0
    %2394 = vmatprep.subr.mxu0 0.0
    %2395 = vmatpush1.msra.mxu0 0.0
    %2396 = vmatprep.subr.mxu0 0.0
    %2397 = vmatpush1.msra.mxu0 0.0
    %2398 = vmatprep.subr.mxu0 0.0
    %2399 = vmatpush1.msra.mxu0 0.0
    %2400 = vmatprep.subr.mxu0 0.0
    %2401 = vmatpush1.msra.mxu0 0.0
    %2402 = vmatprep.subr.mxu0 0.0
    %2403 = vmatpush1.msra.mxu0 0.0
    %2404 = vmatprep.subr.mxu0 0.0
    %2405 = vmatpush1.msra.mxu0 0.0
    %2406 = vmatprep.subr.mxu0 0.0
    %2407 = vmatpush1.msra.mxu0 0.0
    %2408 = vmatprep.subr.mxu0 0.0
    %2409 = vmatpush1.msra.mxu0 0.0
    %2410 = vmatprep.subr.mxu0 0.0
    %2411 = vmatpush1.msra.mxu0 0.0
    %2412 = vmatprep.subr.mxu0 0.0
    %2413 = vmatpush1.msra.mxu0 0.0
    %2414 = vmatprep.subr.mxu0 0.0
    %2415 = vmatpush1.msra.mxu0 0.0
    %2416 = vmatprep.subr.mxu0 0.0
    %2417 = vmatpush1.msra.mxu0 0.0
    %2418 = vmatprep.subr.mxu0 0.0
    %2419 = vmatpush1.msra.mxu0 0.0
    %2420 = vmatprep.subr.mxu0 0.0
    %2421 = vmatpush1.msra.mxu0 0.0
    %2422 = vmatprep.subr.mxu0 0.0
    %2423 = vmatpush1.msra.mxu0 0.0
    %2424 = vmatprep.subr.mxu0 0.0
    %2425 = vmatpush1.msra.mxu0 0.0
    %2426 = vmatprep.subr.mxu0 0.0
    %2427 = vmatpush1.msra.mxu0 0.0
    %2428 = vmatprep.subr.mxu0 0.0
    %2429 = vmatpush1.msra.mxu0 0.0
    %2430 = vmatprep.subr.mxu0 0.0
    %2431 = vmatpush1.msra.mxu0 0.0
    %2432 = vmatprep.subr.mxu0 0.0
    %2433 = vmatpush1.msra.mxu0 0.0
    %2434 = vmatprep.subr.mxu0 0.0
    %2435 = vmatpush1.msra.mxu0 0.0
    %2436 = vmatprep.subr.mxu0 0.0
    %2437 = vmatpush1.msra.mxu0 0.0
    %2438 = vmatprep.subr.mxu0 0.0
    %2439 = vmatpush1.msra.mxu0 0.0
    %2440 = vmatprep.subr.mxu0 0.0
    %2441 = vmatpush1.msra.mxu0 0.0
    %2442 = vmatprep.mubr.f32.mxu0 0.0
    %2443 = vmatmul.mubr.f32.gmra.mrb[0].mxu0 %v2306
    %v2444 = vpop.f32.mrb[0].mxu0
    %v2445 = vadd.f32 0.0, %v2444
    %v2446 = vpop.f32.mrb[0].mxu0
    %2447 = vdwg.mxu0
    %2448 = vmatprep.subr.mxu0 0.0
    %2449 = vmatpush1.msra.mxu0 %v549
    %2450 = vmatprep.subr.mxu0 0.0
    %2451 = vmatpush1.msra.mxu0 %v550
    %2452 = vmatprep.subr.mxu0 0.0
    %2453 = vmatpush1.msra.mxu0 %v551
    %2454 = vmatprep.subr.mxu0 0.0
    %2455 = vmatpush1.msra.mxu0 %v552
    %2456 = vmatprep.subr.mxu0 0.0
    %2457 = vmatpush1.msra.mxu0 0.0
    %2458 = vmatprep.subr.mxu0 0.0
    %2459 = vmatpush1.msra.mxu0 0.0
    %2460 = vmatprep.subr.mxu0 0.0
    %2461 = vmatpush1.msra.mxu0 0.0
    %2462 = vmatprep.subr.mxu0 0.0
    %2463 = vmatpush1.msra.mxu0 0.0
    %2464 = vmatprep.subr.mxu0 0.0
    %2465 = vmatpush1.msra.mxu0 0.0
    %2466 = vmatprep.subr.mxu0 0.0
    %2467 = vmatpush1.msra.mxu0 0.0
    %2468 = vmatprep.subr.mxu0 0.0
    %2469 = vmatpush1.msra.mxu0 0.0
    %2470 = vmatprep.subr.mxu0 0.0
    %2471 = vmatpush1.msra.mxu0 0.0
    %2472 = vmatprep.subr.mxu0 0.0
    %2473 = vmatpush1.msra.mxu0 0.0
    %2474 = vmatprep.subr.mxu0 0.0
    %2475 = vmatpush1.msra.mxu0 0.0
    %2476 = vmatprep.subr.mxu0 0.0
    %2477 = vmatpush1.msra.mxu0 0.0
    %2478 = vmatprep.subr.mxu0 0.0
    %2479 = vmatpush1.msra.mxu0 0.0
    %2480 = vmatprep.subr.mxu0 0.0
    %2481 = vmatpush1.msra.mxu0 0.0
    %2482 = vmatprep.subr.mxu0 0.0
    %2483 = vmatpush1.msra.mxu0 0.0
    %2484 = vmatprep.subr.mxu0 0.0
    %2485 = vmatpush1.msra.mxu0 0.0
    %2486 = vmatprep.subr.mxu0 0.0
    %2487 = vmatpush1.msra.mxu0 0.0
    %2488 = vmatprep.subr.mxu0 0.0
    %2489 = vmatpush1.msra.mxu0 0.0
    %2490 = vmatprep.subr.mxu0 0.0
    %2491 = vmatpush1.msra.mxu0 0.0
    %2492 = vmatprep.subr.mxu0 0.0
    %2493 = vmatpush1.msra.mxu0 0.0
    %2494 = vmatprep.subr.mxu0 0.0
    %2495 = vmatpush1.msra.mxu0 0.0
    %2496 = vmatprep.subr.mxu0 0.0
    %2497 = vmatpush1.msra.mxu0 0.0
    %2498 = vmatprep.subr.mxu0 0.0
    %2499 = vmatpush1.msra.mxu0 0.0
    %2500 = vmatprep.subr.mxu0 0.0
    %2501 = vmatpush1.msra.mxu0 0.0
    %2502 = vmatprep.subr.mxu0 0.0
    %2503 = vmatpush1.msra.mxu0 0.0
    %2504 = vmatprep.subr.mxu0 0.0
    %2505 = vmatpush1.msra.mxu0 0.0
    %2506 = vmatprep.subr.mxu0 0.0
    %2507 = vmatpush1.msra.mxu0 0.0
    %2508 = vmatprep.subr.mxu0 0.0
    %2509 = vmatpush1.msra.mxu0 0.0
    %2510 = vmatprep.subr.mxu0 0.0
    %2511 = vmatpush1.msra.mxu0 0.0
    %2512 = vmatprep.mubr.f32.mxu0 0.0
    %2513 = vmatmul.mubr.f32.gmra.mrb[0].mxu0 %v2306
    %v2514 = vpop.f32.mrb[0].mxu0
    %v2515 = vadd.f32 %v558, %v2514
    %v2516 = vpop.f32.mrb[0].mxu0
    %2517 = vdwg.mxu0
    %s2518 = scalar_lea.vmem [#allocation2], 56
    %v2519 = vld [vmem:[%s2518] sm:$0xff]
    %v2520 = vadd.f32 %v2519, %v2375
    %v2521 = vxor.u32 %v2520, 2147483648
    %v2522 = vmul.f32 %v2521, 1.442695
    %v2523 = vpow.pop %v2522
    %v2524 = vadd.f32 %v2523, 1.0
    %v2525 = vrcp.pop %v2524
    %v2526 = vmul.f32 1.0, %v2525
    %s2527 = scalar_lea.vmem [#allocation3], 56
    %v2528 = vld [vmem:[%s2527] sm:$0xff]
    %v2529 = vadd.f32 %v2528, %v2445
    %v2530 = vxor.u32 %v2529, 2147483648
    %v2531 = vmul.f32 %v2530, 1.442695
    %v2532 = vpow.pop %v2531
    %v2533 = vadd.f32 %v2532, 1.0
    %v2534 = vrcp.pop %v2533
    %v2535 = vmul.f32 1.0, %v2534
    %s2536 = scalar_lea.vmem [#allocation4], 56
    %v2537 = vld [vmem:[%s2536] sm:$0xff]
    %v2538 = vmul.f32 %v2526, %v2515
    %v2539 = vadd.f32 %v2537, %v2538
    %v2540 = vtanh.pop %v2539
    %v2541 = vsub.f32 1.0, %v2535
    %v2542 = vmul.f32 %v2541, %v2540
    %v2543 = vmul.f32 %v2535, %v2304
    %v2544 = vadd.f32 %v2542, %v2543
    %vm2545 = vcmp.gt.s32.totalorder %v135, 7
    %v2546 = vsel %vm2545, 1, 0
    %2547 = vset.pattern.permute.xlu0 0
    %2548 = vperm.xlu0 %2547, %v2546
    %v2549 = vpop.permute.xlu0 %2548
    %vm2550 = vcmp.eq.s32.totalorder %v2549, 1
    %v2551 = vsel %vm2550, %v2544, 0.0
    %s2552 = scalar_lea.vmem [#allocation5], 56
    %2553 = vst.msk [vmem:[%s2552] sm:$0xff] %vm155, %v2551
    %v2554 = vld [vmem:[#allocation5] sm:$0xff]
    %v2555 = vld [vmem:[#allocation5 + $0x8] sm:$0xff]
    %v2556 = vld [vmem:[#allocation5 + $0x10] sm:$0xff]
    %v2557 = vld [vmem:[#allocation5 + $0x18] sm:$0xff]
    %v2558 = vld [vmem:[#allocation5 + $0x20] sm:$0xff]
    %v2559 = vld [vmem:[#allocation5 + $0x28] sm:$0xff]
    %v2560 = vld [vmem:[#allocation5 + $0x30] sm:$0xff]
    %v2561 = vld [vmem:[#allocation5 + $0x38] sm:$0xff]
    %v2562 = vld [vmem:[#allocation14] sm:$0xff]
    %v2563 = vld [vmem:[#allocation14 + $0x8] sm:$0xff]
    %v2564 = vld [vmem:[#allocation14 + $0x10] sm:$0xff]
    %v2565 = vld [vmem:[#allocation14 + $0x18] sm:$0xff]
    %v2566 = vld [vmem:[%s13] sm:$0x1]
    %v2568 = vlaneseq
    %v2569 = vshrl.u32 %v2568, 7
    %v2570 = vsub.s32 0, %v2569
    %v2571 = vrot.slane %v2566, %v2570
    %v2574 = vsel %vm155, %v2554, 0
    %v2577 = vsel %vm155, %v2555, 0
    %v2580 = vsel %vm155, %v2556, 0
    %v2583 = vsel %vm155, %v2557, 0
    %v2586 = vsel %vm155, %v2558, 0
    %v2589 = vsel %vm155, %v2559, 0
    %v2592 = vsel %vm155, %v2560, 0
    %v2595 = vsel %vm155, %v2561, 0
    %2597 = vmatprep.subr.mxu0 0.0
    %2598 = vmatpush1.msra.mxu0 %v2562
    %2599 = vmatprep.subr.mxu0 0.0
    %2600 = vmatpush1.msra.mxu0 %v2563
    %2601 = vmatprep.subr.mxu0 0.0
    %2602 = vmatpush1.msra.mxu0 %v2564
    %2603 = vmatprep.subr.mxu0 0.0
    %2604 = vmatpush1.msra.mxu0 %v2565
    %2605 = vmatprep.subr.mxu0 0.0
    %2606 = vmatpush1.msra.mxu0 0.0
    %2607 = vmatprep.subr.mxu0 0.0
    %2608 = vmatpush1.msra.mxu0 0.0
    %2609 = vmatprep.subr.mxu0 0.0
    %2610 = vmatpush1.msra.mxu0 0.0
    %2611 = vmatprep.subr.mxu0 0.0
    %2612 = vmatpush1.msra.mxu0 0.0
    %2613 = vmatprep.subr.mxu0 0.0
    %2614 = vmatpush1.msra.mxu0 0.0
    %2615 = vmatprep.subr.mxu0 0.0
    %2616 = vmatpush1.msra.mxu0 0.0
    %2617 = vmatprep.subr.mxu0 0.0
    %2618 = vmatpush1.msra.mxu0 0.0
    %2619 = vmatprep.subr.mxu0 0.0
    %2620 = vmatpush1.msra.mxu0 0.0
    %2621 = vmatprep.subr.mxu0 0.0
    %2622 = vmatpush1.msra.mxu0 0.0
    %2623 = vmatprep.subr.mxu0 0.0
    %2624 = vmatpush1.msra.mxu0 0.0
    %2625 = vmatprep.subr.mxu0 0.0
    %2626 = vmatpush1.msra.mxu0 0.0
    %2627 = vmatprep.subr.mxu0 0.0
    %2628 = vmatpush1.msra.mxu0 0.0
    %2629 = vmatprep.subr.mxu0 0.0
    %2630 = vmatpush1.msra.mxu0 0.0
    %2631 = vmatprep.subr.mxu0 0.0
    %2632 = vmatpush1.msra.mxu0 0.0
    %2633 = vmatprep.subr.mxu0 0.0
    %2634 = vmatpush1.msra.mxu0 0.0
    %2635 = vmatprep.subr.mxu0 0.0
    %2636 = vmatpush1.msra.mxu0 0.0
    %2637 = vmatprep.subr.mxu0 0.0
    %2638 = vmatpush1.msra.mxu0 0.0
    %2639 = vmatprep.subr.mxu0 0.0
    %2640 = vmatpush1.msra.mxu0 0.0
    %2641 = vmatprep.subr.mxu0 0.0
    %2642 = vmatpush1.msra.mxu0 0.0
    %2643 = vmatprep.subr.mxu0 0.0
    %2644 = vmatpush1.msra.mxu0 0.0
    %2645 = vmatprep.subr.mxu0 0.0
    %2646 = vmatpush1.msra.mxu0 0.0
    %2647 = vmatprep.subr.mxu0 0.0
    %2648 = vmatpush1.msra.mxu0 0.0
    %2649 = vmatprep.subr.mxu0 0.0
    %2650 = vmatpush1.msra.mxu0 0.0
    %2651 = vmatprep.subr.mxu0 0.0
    %2652 = vmatpush1.msra.mxu0 0.0
    %2653 = vmatprep.subr.mxu0 0.0
    %2654 = vmatpush1.msra.mxu0 0.0
    %2655 = vmatprep.subr.mxu0 0.0
    %2656 = vmatpush1.msra.mxu0 0.0
    %2657 = vmatprep.subr.mxu0 0.0
    %2658 = vmatpush1.msra.mxu0 0.0
    %2659 = vmatprep.subr.mxu0 0.0
    %2660 = vmatpush1.msra.mxu0 0.0
    %2661 = vmatprep.mubr.f32.mxu0 0.0
    %2662 = vmatmul.mubr.f32.gmra.mrb[0].mxu0 %v2574
    %v2663 = vpop.f32.mrb[0].mxu0
    %v2664 = vadd.f32 %v2571, %v2663
    %v2665 = vpop.f32.mrb[0].mxu0
    %2666 = vmatprep.mubr.f32.mxu0 0.0
    %2667 = vmatmul.mubr.f32.gmra.mrb[0].mxu0 %v2577
    %v2668 = vpop.f32.mrb[0].mxu0
    %v2669 = vadd.f32 %v2571, %v2668
    %v2670 = vpop.f32.mrb[0].mxu0
    %2671 = vmatprep.mubr.f32.mxu0 0.0
    %2672 = vmatmul.mubr.f32.gmra.mrb[0].mxu0 %v2580
    %v2673 = vpop.f32.mrb[0].mxu0
    %v2674 = vadd.f32 %v2571, %v2673
    %v2675 = vpop.f32.mrb[0].mxu0
    %2676 = vmatprep.mubr.f32.mxu0 0.0
    %2677 = vmatmul.mubr.f32.gmra.mrb[0].mxu0 %v2583
    %v2678 = vpop.f32.mrb[0].mxu0
    %v2679 = vadd.f32 %v2571, %v2678
    %v2680 = vpop.f32.mrb[0].mxu0
    %2681 = vmatprep.mubr.f32.mxu0 0.0
    %2682 = vmatmul.mubr.f32.gmra.mrb[0].mxu0 %v2586
    %v2683 = vpop.f32.mrb[0].mxu0
    %v2684 = vadd.f32 %v2571, %v2683
    %v2685 = vpop.f32.mrb[0].mxu0
    %2686 = vmatprep.mubr.f32.mxu0 0.0
    %2687 = vmatmul.mubr.f32.gmra.mrb[0].mxu0 %v2589
    %v2688 = vpop.f32.mrb[0].mxu0
    %v2689 = vadd.f32 %v2571, %v2688
    %v2690 = vpop.f32.mrb[0].mxu0
    %2691 = vmatprep.mubr.f32.mxu0 0.0
    %2692 = vmatmul.mubr.f32.gmra.mrb[0].mxu0 %v2592
    %v2693 = vpop.f32.mrb[0].mxu0
    %v2694 = vadd.f32 %v2571, %v2693
    %v2695 = vpop.f32.mrb[0].mxu0
    %2696 = vmatprep.mubr.f32.mxu0 0.0
    %2697 = vmatmul.mubr.f32.gmra.mrb[0].mxu0 %v2595
    %v2698 = vpop.f32.mrb[0].mxu0
    %v2699 = vadd.f32 %v2571, %v2698
    %v2700 = vpop.f32.mrb[0].mxu0
    %2701 = vdwg.mxu0
    %v2702 = vmax.f32 %v2664, 0.0
    %v2703 = vmax.f32 %v2669, 0.0
    %v2704 = vmax.f32 %v2674, 0.0
    %v2705 = vmax.f32 %v2679, 0.0
    %v2706 = vmax.f32 %v2684, 0.0
    %v2707 = vmax.f32 %v2689, 0.0
    %v2708 = vmax.f32 %v2694, 0.0
    %v2709 = vmax.f32 %v2699, 0.0
    %v2710 = vsel %vm155, %v2702, 0.0
    %v2711 = vsel %vm155, %v2703, 0.0
    %v2712 = vadd.f32 %v2710, %v2711
    %v2713 = vsel %vm155, %v2704, 0.0
    %v2714 = vadd.f32 %v2712, %v2713
    %v2715 = vsel %vm155, %v2705, 0.0
    %v2716 = vadd.f32 %v2714, %v2715
    %v2717 = vsel %vm155, %v2706, 0.0
    %v2718 = vadd.f32 %v2716, %v2717
    %v2719 = vsel %vm155, %v2707, 0.0
    %v2720 = vadd.f32 %v2718, %v2719
    %v2721 = vsel %vm155, %v2708, 0.0
    %v2722 = vadd.f32 %v2720, %v2721
    %v2723 = vsel %vm155, %v2709, 0.0
    %v2724 = vadd.f32 %v2722, %v2723
    %v2725 = vmul.f32 %v2724, 0.125
    %v2726 = vld [vmem:[%s14] sm:$0xff]
    %v2727 = vld [vmem:[%s14 + $0x8] sm:$0xff]
    %v2728 = vld [vmem:[%s14 + $0x10] sm:$0xff]
    %v2729 = vld [vmem:[%s14 + $0x18] sm:$0xff]
    %v2730 = vld [vmem:[%s15] sm:$0x1]
    %v2732 = vlaneseq
    %v2733 = vshrl.u32 %v2732, 7
    %v2734 = vsub.s32 0, %v2733
    %v2735 = vrot.slane %v2730, %v2734
    %v2738 = vsel %vm155, %v2725, 0
    %2740 = vmatprep.subr.mxu0 0.0
    %2741 = vmatpush1.msra.mxu0 %v2726
    %2742 = vmatprep.subr.mxu0 0.0
    %2743 = vmatpush1.msra.mxu0 %v2727
    %2744 = vmatprep.subr.mxu0 0.0
    %2745 = vmatpush1.msra.mxu0 %v2728
    %2746 = vmatprep.subr.mxu0 0.0
    %2747 = vmatpush1.msra.mxu0 %v2729
    %2748 = vmatprep.subr.mxu0 0.0
    %2749 = vmatpush1.msra.mxu0 0.0
    %2750 = vmatprep.subr.mxu0 0.0
    %2751 = vmatpush1.msra.mxu0 0.0
    %2752 = vmatprep.subr.mxu0 0.0
    %2753 = vmatpush1.msra.mxu0 0.0
    %2754 = vmatprep.subr.mxu0 0.0
    %2755 = vmatpush1.msra.mxu0 0.0
    %2756 = vmatprep.subr.mxu0 0.0
    %2757 = vmatpush1.msra.mxu0 0.0
    %2758 = vmatprep.subr.mxu0 0.0
    %2759 = vmatpush1.msra.mxu0 0.0
    %2760 = vmatprep.subr.mxu0 0.0
    %2761 = vmatpush1.msra.mxu0 0.0
    %2762 = vmatprep.subr.mxu0 0.0
    %2763 = vmatpush1.msra.mxu0 0.0
    %2764 = vmatprep.subr.mxu0 0.0
    %2765 = vmatpush1.msra.mxu0 0.0
    %2766 = vmatprep.subr.mxu0 0.0
    %2767 = vmatpush1.msra.mxu0 0.0
    %2768 = vmatprep.subr.mxu0 0.0
    %2769 = vmatpush1.msra.mxu0 0.0
    %2770 = vmatprep.subr.mxu0 0.0
    %2771 = vmatpush1.msra.mxu0 0.0
    %2772 = vmatprep.subr.mxu0 0.0
    %2773 = vmatpush1.msra.mxu0 0.0
    %2774 = vmatprep.subr.mxu0 0.0
    %2775 = vmatpush1.msra.mxu0 0.0
    %2776 = vmatprep.subr.mxu0 0.0
    %2777 = vmatpush1.msra.mxu0 0.0
    %2778 = vmatprep.subr.mxu0 0.0
    %2779 = vmatpush1.msra.mxu0 0.0
    %2780 = vmatprep.subr.mxu0 0.0
    %2781 = vmatpush1.msra.mxu0 0.0
    %2782 = vmatprep.subr.mxu0 0.0
    %2783 = vmatpush1.msra.mxu0 0.0
    %2784 = vmatprep.subr.mxu0 0.0
    %2785 = vmatpush1.msra.mxu0 0.0
    %2786 = vmatprep.subr.mxu0 0.0
    %2787 = vmatpush1.msra.mxu0 0.0
    %2788 = vmatprep.subr.mxu0 0.0
    %2789 = vmatpush1.msra.mxu0 0.0
    %2790 = vmatprep.subr.mxu0 0.0
    %2791 = vmatpush1.msra.mxu0 0.0
    %2792 = vmatprep.subr.mxu0 0.0
    %2793 = vmatpush1.msra.mxu0 0.0
    %2794 = vmatprep.subr.mxu0 0.0
    %2795 = vmatpush1.msra.mxu0 0.0
    %2796 = vmatprep.subr.mxu0 0.0
    %2797 = vmatpush1.msra.mxu0 0.0
    %2798 = vmatprep.subr.mxu0 0.0
    %2799 = vmatpush1.msra.mxu0 0.0
    %2800 = vmatprep.subr.mxu0 0.0
    %2801 = vmatpush1.msra.mxu0 0.0
    %2802 = vmatprep.subr.mxu0 0.0
    %2803 = vmatpush1.msra.mxu0 0.0
    %2804 = vmatprep.mubr.f32.mxu0 0.0
    %2805 = vmatmul.mubr.f32.gmra.mrb[0].mxu0 %v2738
    %v2806 = vpop.f32.mrb[0].mxu0
    %v2807 = vadd.f32 %v2735, %v2806
    %v2808 = vpop.f32.mrb[0].mxu0
    %2809 = vdwg.mxu0
    %vm2810 = vcmask 31744
    %v2811 = vsel %vm2810, %v2807, -inf
    %2812 = vmax.xlane.f32.xlu0 %v2811
    %v2813 = vpop.xlane.xlu0 %2812
    %v2814 = vsub.f32 %v2807, %v2813
    %v2815 = vmul.f32 %v2814, 1.442695
    %v2816 = vpow.pop %v2815
    %v2817 = vsel %vm2810, %v2816, 0.0
    %2818 = vadd.xlane.f32.xlu0 %v2817
    %v2819 = vpop.xlane.xlu0 %2818
    %v2820 = vrcp.pop %v2819
    %v2821 = vmul.f32 %v2816, %v2820
    %2822 = vst.msk [vmem:[%s16] sm:$0xff] %vm2810, %v2821
    // Predicated region
    $region90: #{tpu_custom_call.1} parent=1 // pred_check
      _
    $region91: #{tpu_custom_call.1} parent=1 // pred_check_branch
      %2824 = sbr.rel (0) target = $region93
    $region92: #{tpu_custom_call.1} parent=1 // pred_region
      _
    $region93: #{tpu_custom_call.1} parent=1 // pred_fallthru
      _
    // Predicated region
    $region94: #{tpu_custom_call.1} parent=1 // pred_check
      _
    $region95: #{tpu_custom_call.1} parent=1 // pred_check_branch
      %2826 = sbr.rel (0) target = $region97
    $region96: #{tpu_custom_call.1} parent=1 // pred_region
      _
    $region97: #{tpu_custom_call.1} parent=1 // pred_fallthru
      _
    %2827 = vsyncpa [#allocation7], 1
    %2828 = vsyncpa [#allocation9], 1
    %2829 = vsyncpa [#allocation12], 1
    %2830 = vsyncpa [#allocation15], 1

</llo_original>
